<compile_context>
chip_gen: v7x
topology: tpu7x:2x2x1
jax: 0.10.0
libtpu: 0.0.40
codegen_flags: <defaults>
</compile_context>

<pallas_src>
import jax
import jax.numpy as jnp
from jax.experimental import pallas as pl
from jax.experimental.pallas import tpu as pltpu


def _leaky(x):
    # nn.LeakyReLU(negative_slope=0.1)
    return jnp.where(x > 0, x, 0.1 * x)


def _pointconv_kernel(xyz_ref, knn_ref, w1t_ref, b1_ref, w2t_ref, b2_ref,
                      wlt_ref, bl_ref, out_ref):
    # xyz_ref : [1, 3, tn]     f32   centers, channel-first (lane = points)
    # knn_ref : [1, K, F, tn]  bf16/f32  gathered neighbor features; [:3] = xyz
    # w1t_ref : [8, 3]   b1_ref : [8, 1]    (WeightNet layer 1, transposed)
    # w2t_ref : [16, 8]  b2_ref : [16, 1]   (WeightNet layer 2, transposed)
    # wlt_ref : [C_out, F*16]  bl_ref : [C_out, 1]   (permuted final Linear)
    # out_ref : [1, C_out, tn] f32   channel-first output block
    K = knn_ref.shape[1]
    F = knn_ref.shape[2]

    xyz = xyz_ref[0]                     # [3, tn]
    w1t = w1t_ref[...]                   # [8, 3]
    b1 = b1_ref[...]                     # [8, 1]
    w2t = w2t_ref[...]                   # [16, 8]
    b2 = b2_ref[...]                     # [16, 1]

    # Accumulate weighted features with row ordering (f * 16 + m).
    acc = [None] * F
    for k in range(K):
        feat_k = knn_ref[0, k, :, :].astype(jnp.float32)          # [F, tn]

        # WeightNet layer 1 (1x1 conv 3->8): contraction of 3 unrolled on VPU.
        h = b1 + w1t[:, 0:1] * (feat_k[0:1, :] - xyz[0:1, :])
        h = h + w1t[:, 1:2] * (feat_k[1:2, :] - xyz[1:2, :])
        h = h + w1t[:, 2:3] * (feat_k[2:3, :] - xyz[2:3, :])
        h = _leaky(h)                                             # [8, tn]

        # WeightNet layer 2 (1x1 conv 8->16): contraction of 8 unrolled on VPU.
        ww = b2
        for j in range(8):
            ww = ww + w2t[:, j:j + 1] * h[j:j + 1, :]
        ww = _leaky(ww)                                           # [16, tn]

        # weighted_features: wf[f, m, :] += feat_k[f, :] * ww[m, :]
        for f in range(F):
            term = feat_k[f:f + 1, :] * ww                        # [16, tn]
            acc[f] = term if k == 0 else acc[f] + term

    wf = jnp.concatenate(acc, axis=0)                             # [F*16, tn]

    # Final Linear(16*F -> C_out) on the MXU, norm=None -> Identity, leaky_relu.
    out = jnp.dot(wlt_ref[...], wf, preferred_element_type=jnp.float32)
    out = _leaky(out + bl_ref[...])                               # [C_out, tn]
    out_ref[0] = out.astype(out_ref.dtype)


def _knn_and_gather(xyz, features, k):
    """Glue: KNN indices + neighbor gather (data-dependent; plain JAX/XLA)."""
    xyz_cl = jnp.transpose(xyz, (0, 2, 1))                         # [B, N, 3]
    feat_cl = jnp.concatenate(
        [xyz_cl, jnp.transpose(features, (0, 2, 1))], axis=-1)     # [B, N, F]
    d2 = jnp.sum((xyz_cl[:, :, None, :] - xyz_cl[:, None, :, :]) ** 2, axis=-1)
    _, knn_idx = jax.lax.top_k(-d2, k)                             # [B, N, K]
    knn_feat = jax.vmap(lambda arr, idx: arr[idx])(feat_cl, knn_idx)  # [B,N,K,F]
    return knn_feat                                                # [...,:3]==knn_xyz


def _default_tile_n(n):
    # TODO(synk): ragged N (not a multiple of 128) falls back to one tile per
    # batch row instead of masked tail tiles.
    if n % 128 != 0:
        return n
    best = 128
    for tn in (2048, 1024, 512, 256, 128):
        if n % tn == 0 and n // tn >= 2:
            best = tn
            break
    return best


def pointconv_no_sampling(xyz, features, params, *, k, tile_n=None,
                          feat_dtype=jnp.bfloat16):
    B, _, N = xyz.shape
    C_in = features.shape[1]
    F = 3 + C_in
    C_out = params['bl'].shape[-1]
    tn = _default_tile_n(N) if tile_n is None else tile_n
    assert N % tn == 0

    # Single gathered stream (neighbor xyz == first 3 channels), point axis last
    # for lane-dense VMEM tiles, bf16 storage/DMA by default (math stays f32).
    knn_feat = _knn_and_gather(xyz, features, k)                   # [B, N, K, F]
    knn_t = jnp.transpose(knn_feat, (0, 2, 3, 1)).astype(feat_dtype)  # [B,K,F,N]
    xyz_f32 = xyz.astype(jnp.float32)                              # [B, 3, N]

    # Small parameter re-layouts (wrapper-side plumbing, done once).
    w1t = params['w1'].T                                           # [8, 3]
    b1c = params['b1'].reshape(8, 1)
    w2t = params['w2'].T                                           # [16, 8]
    b2c = params['b2'].reshape(16, 1)
    # Kernel flattens weighted features as (f, m) with m=16 inner; PyTorch's
    # Linear flattens (m, f). Permute the Linear weight once to match.
    wlt = jnp.transpose(params['wl'].reshape(16, F, C_out),
                        (2, 1, 0)).reshape(C_out, F * 16)          # [C_out, F*16]
    blc = params['bl'].reshape(C_out, 1)

    out = pl.pallas_call(
        _pointconv_kernel,
        out_shape=jax.ShapeDtypeStruct((B, C_out, N), jnp.float32),
        grid_spec=pltpu.PrefetchScalarGridSpec(
            num_scalar_prefetch=0,
            grid=(B, N // tn),
            in_specs=[
                pl.BlockSpec((1, 3, tn),      lambda b, n: (b, 0, n)),
                pl.BlockSpec((1, k, F, tn),   lambda b, n: (b, 0, 0, n)),
                pl.BlockSpec((8, 3),          lambda b, n: (0, 0)),
                pl.BlockSpec((8, 1),          lambda b, n: (0, 0)),
                pl.BlockSpec((16, 8),         lambda b, n: (0, 0)),
                pl.BlockSpec((16, 1),         lambda b, n: (0, 0)),
                pl.BlockSpec((C_out, F * 16), lambda b, n: (0, 0)),
                pl.BlockSpec((C_out, 1),      lambda b, n: (0, 0)),
            ],
            out_specs=pl.BlockSpec((1, C_out, tn), lambda b, n: (b, 0, n)),
        ),
        compiler_params=pltpu.CompilerParams(
            dimension_semantics=("parallel", "parallel")),
    )(xyz_f32, knn_t, w1t, b1c, w2t, b2c, wlt, blc)

    return out                                                     # [B, C_out, N]


def reference_forward(xyz, features, params, *, k, feat_dtype=jnp.float32):
    """Pure-JAX reference mirroring the PyTorch forward.

    `feat_dtype` models the storage precision of the gathered neighbor stream
    (the kernel uses bf16 by default); float32 is the exact PyTorch math."""
    xyz_cl = jnp.transpose(xyz, (0, 2, 1))                         # [B, N, 3]
    knn_feat = _knn_and_gather(xyz, features, k)
    knn_feat = knn_feat.astype(feat_dtype).astype(jnp.float32)     # [B, N, K, F]
    knn_xyz = knn_feat[..., :3]
    xyz_norm = knn_xyz - xyz_cl[:, :, None, :]                     # [B, N, K, 3]
    h = _leaky(xyz_norm @ params['w1'] + params['b1'])             # [B, N, K, 8]
    w = _leaky(h @ params['w2'] + params['b2'])                    # [B, N, K, 16]
    wf = jnp.einsum('bnkc,bnkf->bncf', w, knn_feat)                # [B, N, 16, F]
    B, N = wf.shape[:2]
    wf = wf.reshape(B, N, -1)
    out = _leaky(wf @ params['wl'] + params['bl'])                 # [B, N, C_out]
    return jnp.transpose(out, (0, 2, 1))


def init_params(key, in_channels, out_channels):
    F = 3 + in_channels
    ks = jax.random.split(key, 6)
    return dict(
        w1=0.2 * jax.random.normal(ks[0], (3, 8), jnp.float32),
        b1=0.1 * jax.random.normal(ks[1], (1, 8), jnp.float32),
        w2=0.2 * jax.random.normal(ks[2], (8, 16), jnp.float32),
        b2=0.1 * jax.random.normal(ks[3], (1, 16), jnp.float32),
        wl=0.1 * jax.random.normal(ks[4], (16 * F, out_channels), jnp.float32),
        bl=0.1 * jax.random.normal(ks[5], (1, out_channels), jnp.float32),
    )


if __name__ == "__main__":
    B, C_in, N, K, C_out = 2, 4, 16, 8, 32
    key = jax.random.PRNGKey(0)
    kx, kf, kp = jax.random.split(key, 3)
    xyz = jax.random.normal(kx, (B, 3, N), jnp.float32)
    features = jax.random.normal(kf, (B, C_in, N), jnp.float32)
    params = init_params(kp, C_in, C_out)

    # Exact f32 path vs. the PyTorch-faithful reference.
    out_f32 = jax.block_until_ready(
        pointconv_no_sampling(xyz, features, params, k=K, feat_dtype=jnp.float32))
    assert out_f32.shape == (B, C_out, N), out_f32.shape
    ref_f32 = reference_forward(xyz, features, params, k=K, feat_dtype=jnp.float32)
    err = float(jnp.abs(out_f32 - ref_f32).max())
    assert jnp.allclose(out_f32, ref_f32, atol=1e-3, rtol=1e-3), err

    # Default bf16 neighbor-feature stream vs. a bf16-storage reference.
    out_bf = jax.block_until_ready(
        pointconv_no_sampling(xyz, features, params, k=K))
    ref_bf = reference_forward(xyz, features, params, k=K, feat_dtype=jnp.bfloat16)
    err_bf = float(jnp.abs(out_bf - ref_bf).max())
    assert jnp.allclose(out_bf, ref_bf, atol=1e-3, rtol=1e-3), err_bf

    print("KERNEL_OK")
</pallas_src>

<mosaic_0001>
module attributes {stable_mosaic.version = 11 : i64} {
  func.func @_pointconv_kernel(%arg0: i32, %arg1: i32, %arg2: memref<1x3x16xf32, #tpu.memory_space<vmem>>, %arg3: memref<1x8x7x16xf32, #tpu.memory_space<vmem>>, %arg4: memref<8x3xf32, #tpu.memory_space<vmem>>, %arg5: memref<8x1xf32, #tpu.memory_space<vmem>>, %arg6: memref<16x8xf32, #tpu.memory_space<vmem>>, %arg7: memref<16x1xf32, #tpu.memory_space<vmem>>, %arg8: memref<32x112xf32, #tpu.memory_space<vmem>>, %arg9: memref<32x1xf32, #tpu.memory_space<vmem>>, %arg10: memref<1x32x16xf32, #tpu.memory_space<vmem>>) attributes {dimension_semantics = [#tpu.dimension_semantics<parallel>, #tpu.dimension_semantics<parallel>], iteration_bounds = array<i64: 2, 1>, scalar_prefetch = 0 : i64, scratch_operands = 0 : i64, tpu.core_type = #tpu.core_type<tc>, window_params = [{transform_indices = @transform_0, window_bounds = array<i64: 1, 3, 16>}, {transform_indices = @transform_1, window_bounds = array<i64: 1, 8, 7, 16>}, {pipeline_mode = #tpu.pipeline_mode<synchronous>, transform_indices = @transform_2, window_bounds = array<i64: 8, 3>}, {pipeline_mode = #tpu.pipeline_mode<synchronous>, transform_indices = @transform_3, window_bounds = array<i64: 8, 1>}, {pipeline_mode = #tpu.pipeline_mode<synchronous>, transform_indices = @transform_4, window_bounds = array<i64: 16, 8>}, {pipeline_mode = #tpu.pipeline_mode<synchronous>, transform_indices = @transform_5, window_bounds = array<i64: 16, 1>}, {pipeline_mode = #tpu.pipeline_mode<synchronous>, transform_indices = @transform_6, window_bounds = array<i64: 32, 112>}, {pipeline_mode = #tpu.pipeline_mode<synchronous>, transform_indices = @transform_7, window_bounds = array<i64: 32, 1>}, {transform_indices = @transform_8, window_bounds = array<i64: 1, 32, 16>}]} {
    %c0 = arith.constant 0 : index
    %c0_0 = arith.constant 0 : index
    %c0_1 = arith.constant 0 : index
    %0 = vector.load %arg2[%c0, %c0_0, %c0_1] : memref<1x3x16xf32, #tpu.memory_space<vmem>>, vector<1x3x16xf32>
    %1 = vector.shape_cast %0 : vector<1x3x16xf32> to vector<3x16xf32>
    %c0_2 = arith.constant 0 : index
    %c0_3 = arith.constant 0 : index
    %2 = vector.load %arg4[%c0_2, %c0_3] : memref<8x3xf32, #tpu.memory_space<vmem>>, vector<8x3xf32>
    %c0_4 = arith.constant 0 : index
    %c0_5 = arith.constant 0 : index
    %3 = vector.load %arg5[%c0_4, %c0_5] : memref<8x1xf32, #tpu.memory_space<vmem>>, vector<8x1xf32>
    %c0_6 = arith.constant 0 : index
    %c0_7 = arith.constant 0 : index
    %4 = vector.load %arg6[%c0_6, %c0_7] : memref<16x8xf32, #tpu.memory_space<vmem>>, vector<16x8xf32>
    %c0_8 = arith.constant 0 : index
    %c0_9 = arith.constant 0 : index
    %5 = vector.load %arg7[%c0_8, %c0_9] : memref<16x1xf32, #tpu.memory_space<vmem>>, vector<16x1xf32>
    %c0_10 = arith.constant 0 : index
    %c0_11 = arith.constant 0 : index
    %c0_12 = arith.constant 0 : index
    %c0_13 = arith.constant 0 : index
    %6 = vector.load %arg3[%c0_10, %c0_11, %c0_12, %c0_13] : memref<1x8x7x16xf32, #tpu.memory_space<vmem>>, vector<1x1x7x16xf32>
    %7 = vector.shape_cast %6 : vector<1x1x7x16xf32> to vector<7x16xf32>
    %8 = vector.extract_strided_slice %2 {offsets = [0, 0], sizes = [8, 1], strides = [1, 1]} : vector<8x3xf32> to vector<8x1xf32>
    %9 = vector.extract_strided_slice %7 {offsets = [0, 0], sizes = [1, 16], strides = [1, 1]} : vector<7x16xf32> to vector<1x16xf32>
    %10 = vector.extract_strided_slice %1 {offsets = [0, 0], sizes = [1, 16], strides = [1, 1]} : vector<3x16xf32> to vector<1x16xf32>
    %11 = arith.subf %9, %10 : vector<1x16xf32>
    %12 = vector.broadcast %8 : vector<8x1xf32> to vector<8x16xf32>
    %13 = vector.broadcast %11 : vector<1x16xf32> to vector<8x16xf32>
    %14 = arith.mulf %12, %13 : vector<8x16xf32>
    %15 = vector.broadcast %3 : vector<8x1xf32> to vector<8x16xf32>
    %16 = arith.addf %15, %14 : vector<8x16xf32>
    %17 = vector.extract_strided_slice %2 {offsets = [0, 1], sizes = [8, 1], strides = [1, 1]} : vector<8x3xf32> to vector<8x1xf32>
    %18 = vector.extract_strided_slice %7 {offsets = [1, 0], sizes = [1, 16], strides = [1, 1]} : vector<7x16xf32> to vector<1x16xf32>
    %19 = vector.extract_strided_slice %1 {offsets = [1, 0], sizes = [1, 16], strides = [1, 1]} : vector<3x16xf32> to vector<1x16xf32>
    %20 = arith.subf %18, %19 : vector<1x16xf32>
    %21 = vector.broadcast %17 : vector<8x1xf32> to vector<8x16xf32>
    %22 = vector.broadcast %20 : vector<1x16xf32> to vector<8x16xf32>
    %23 = arith.mulf %21, %22 : vector<8x16xf32>
    %24 = arith.addf %16, %23 : vector<8x16xf32>
    %25 = vector.extract_strided_slice %2 {offsets = [0, 2], sizes = [8, 1], strides = [1, 1]} : vector<8x3xf32> to vector<8x1xf32>
    %26 = vector.extract_strided_slice %7 {offsets = [2, 0], sizes = [1, 16], strides = [1, 1]} : vector<7x16xf32> to vector<1x16xf32>
    %27 = vector.extract_strided_slice %1 {offsets = [2, 0], sizes = [1, 16], strides = [1, 1]} : vector<3x16xf32> to vector<1x16xf32>
    %28 = arith.subf %26, %27 : vector<1x16xf32>
    %29 = vector.broadcast %25 : vector<8x1xf32> to vector<8x16xf32>
    %30 = vector.broadcast %28 : vector<1x16xf32> to vector<8x16xf32>
    %31 = arith.mulf %29, %30 : vector<8x16xf32>
    %32 = arith.addf %24, %31 : vector<8x16xf32>
    %cst = arith.constant 0.000000e+00 : f32
    %33 = vector.broadcast %cst : f32 to vector<8x16xf32>
    %34 = arith.cmpf ogt, %32, %33 : vector<8x16xf32>
    %cst_14 = arith.constant 1.000000e-01 : f32
    %35 = vector.broadcast %cst_14 : f32 to vector<8x16xf32>
    %36 = arith.mulf %35, %32 : vector<8x16xf32>
    %37 = arith.select %34, %32, %36 : vector<8x16xi1>, vector<8x16xf32>
    %38 = vector.extract_strided_slice %4 {offsets = [0, 0], sizes = [16, 1], strides = [1, 1]} : vector<16x8xf32> to vector<16x1xf32>
    %39 = vector.extract_strided_slice %37 {offsets = [0, 0], sizes = [1, 16], strides = [1, 1]} : vector<8x16xf32> to vector<1x16xf32>
    %40 = vector.broadcast %38 : vector<16x1xf32> to vector<16x16xf32>
    %41 = vector.broadcast %39 : vector<1x16xf32> to vector<16x16xf32>
    %42 = arith.mulf %40, %41 : vector<16x16xf32>
    %43 = vector.broadcast %5 : vector<16x1xf32> to vector<16x16xf32>
    %44 = arith.addf %43, %42 : vector<16x16xf32>
    %45 = vector.extract_strided_slice %4 {offsets = [0, 1], sizes = [16, 1], strides = [1, 1]} : vector<16x8xf32> to vector<16x1xf32>
    %46 = vector.extract_strided_slice %37 {offsets = [1, 0], sizes = [1, 16], strides = [1, 1]} : vector<8x16xf32> to vector<1x16xf32>
    %47 = vector.broadcast %45 : vector<16x1xf32> to vector<16x16xf32>
    %48 = vector.broadcast %46 : vector<1x16xf32> to vector<16x16xf32>
    %49 = arith.mulf %47, %48 : vector<16x16xf32>
    %50 = arith.addf %44, %49 : vector<16x16xf32>
    %51 = vector.extract_strided_slice %4 {offsets = [0, 2], sizes = [16, 1], strides = [1, 1]} : vector<16x8xf32> to vector<16x1xf32>
    %52 = vector.extract_strided_slice %37 {offsets = [2, 0], sizes = [1, 16], strides = [1, 1]} : vector<8x16xf32> to vector<1x16xf32>
    %53 = vector.broadcast %51 : vector<16x1xf32> to vector<16x16xf32>
    %54 = vector.broadcast %52 : vector<1x16xf32> to vector<16x16xf32>
    %55 = arith.mulf %53, %54 : vector<16x16xf32>
    %56 = arith.addf %50, %55 : vector<16x16xf32>
    %57 = vector.extract_strided_slice %4 {offsets = [0, 3], sizes = [16, 1], strides = [1, 1]} : vector<16x8xf32> to vector<16x1xf32>
    %58 = vector.extract_strided_slice %37 {offsets = [3, 0], sizes = [1, 16], strides = [1, 1]} : vector<8x16xf32> to vector<1x16xf32>
    %59 = vector.broadcast %57 : vector<16x1xf32> to vector<16x16xf32>
    %60 = vector.broadcast %58 : vector<1x16xf32> to vector<16x16xf32>
    %61 = arith.mulf %59, %60 : vector<16x16xf32>
    %62 = arith.addf %56, %61 : vector<16x16xf32>
    %63 = vector.extract_strided_slice %4 {offsets = [0, 4], sizes = [16, 1], strides = [1, 1]} : vector<16x8xf32> to vector<16x1xf32>
    %64 = vector.extract_strided_slice %37 {offsets = [4, 0], sizes = [1, 16], strides = [1, 1]} : vector<8x16xf32> to vector<1x16xf32>
    %65 = vector.broadcast %63 : vector<16x1xf32> to vector<16x16xf32>
    %66 = vector.broadcast %64 : vector<1x16xf32> to vector<16x16xf32>
    %67 = arith.mulf %65, %66 : vector<16x16xf32>
    %68 = arith.addf %62, %67 : vector<16x16xf32>
    %69 = vector.extract_strided_slice %4 {offsets = [0, 5], sizes = [16, 1], strides = [1, 1]} : vector<16x8xf32> to vector<16x1xf32>
    %70 = vector.extract_strided_slice %37 {offsets = [5, 0], sizes = [1, 16], strides = [1, 1]} : vector<8x16xf32> to vector<1x16xf32>
    %71 = vector.broadcast %69 : vector<16x1xf32> to vector<16x16xf32>
    %72 = vector.broadcast %70 : vector<1x16xf32> to vector<16x16xf32>
    %73 = arith.mulf %71, %72 : vector<16x16xf32>
    %74 = arith.addf %68, %73 : vector<16x16xf32>
    %75 = vector.extract_strided_slice %4 {offsets = [0, 6], sizes = [16, 1], strides = [1, 1]} : vector<16x8xf32> to vector<16x1xf32>
    %76 = vector.extract_strided_slice %37 {offsets = [6, 0], sizes = [1, 16], strides = [1, 1]} : vector<8x16xf32> to vector<1x16xf32>
    %77 = vector.broadcast %75 : vector<16x1xf32> to vector<16x16xf32>
    %78 = vector.broadcast %76 : vector<1x16xf32> to vector<16x16xf32>
    %79 = arith.mulf %77, %78 : vector<16x16xf32>
    %80 = arith.addf %74, %79 : vector<16x16xf32>
    %81 = vector.extract_strided_slice %4 {offsets = [0, 7], sizes = [16, 1], strides = [1, 1]} : vector<16x8xf32> to vector<16x1xf32>
    %82 = vector.extract_strided_slice %37 {offsets = [7, 0], sizes = [1, 16], strides = [1, 1]} : vector<8x16xf32> to vector<1x16xf32>
    %83 = vector.broadcast %81 : vector<16x1xf32> to vector<16x16xf32>
    %84 = vector.broadcast %82 : vector<1x16xf32> to vector<16x16xf32>
    %85 = arith.mulf %83, %84 : vector<16x16xf32>
    %86 = arith.addf %80, %85 : vector<16x16xf32>
    %cst_15 = arith.constant 0.000000e+00 : f32
    %87 = vector.broadcast %cst_15 : f32 to vector<16x16xf32>
    %88 = arith.cmpf ogt, %86, %87 : vector<16x16xf32>
    %cst_16 = arith.constant 1.000000e-01 : f32
    %89 = vector.broadcast %cst_16 : f32 to vector<16x16xf32>
    %90 = arith.mulf %89, %86 : vector<16x16xf32>
    %91 = arith.select %88, %86, %90 : vector<16x16xi1>, vector<16x16xf32>
    %92 = vector.extract_strided_slice %7 {offsets = [0, 0], sizes = [1, 16], strides = [1, 1]} : vector<7x16xf32> to vector<1x16xf32>
    %93 = vector.broadcast %92 : vector<1x16xf32> to vector<16x16xf32>
    %94 = arith.mulf %93, %91 : vector<16x16xf32>
    %95 = vector.extract_strided_slice %7 {offsets = [1, 0], sizes = [1, 16], strides = [1, 1]} : vector<7x16xf32> to vector<1x16xf32>
    %96 = vector.broadcast %95 : vector<1x16xf32> to vector<16x16xf32>
    %97 = arith.mulf %96, %91 : vector<16x16xf32>
    %98 = vector.extract_strided_slice %7 {offsets = [2, 0], sizes = [1, 16], strides = [1, 1]} : vector<7x16xf32> to vector<1x16xf32>
    %99 = vector.broadcast %98 : vector<1x16xf32> to vector<16x16xf32>
    %100 = arith.mulf %99, %91 : vector<16x16xf32>
    %101 = vector.extract_strided_slice %7 {offsets = [3, 0], sizes = [1, 16], strides = [1, 1]} : vector<7x16xf32> to vector<1x16xf32>
    %102 = vector.broadcast %101 : vector<1x16xf32> to vector<16x16xf32>
    %103 = arith.mulf %102, %91 : vector<16x16xf32>
    %104 = vector.extract_strided_slice %7 {offsets = [4, 0], sizes = [1, 16], strides = [1, 1]} : vector<7x16xf32> to vector<1x16xf32>
    %105 = vector.broadcast %104 : vector<1x16xf32> to vector<16x16xf32>
    %106 = arith.mulf %105, %91 : vector<16x16xf32>
    %107 = vector.extract_strided_slice %7 {offsets = [5, 0], sizes = [1, 16], strides = [1, 1]} : vector<7x16xf32> to vector<1x16xf32>
    %108 = vector.broadcast %107 : vector<1x16xf32> to vector<16x16xf32>
    %109 = arith.mulf %108, %91 : vector<16x16xf32>
    %110 = vector.extract_strided_slice %7 {offsets = [6, 0], sizes = [1, 16], strides = [1, 1]} : vector<7x16xf32> to vector<1x16xf32>
    %111 = vector.broadcast %110 : vector<1x16xf32> to vector<16x16xf32>
    %112 = arith.mulf %111, %91 : vector<16x16xf32>
    %c0_17 = arith.constant 0 : index
    %c1 = arith.constant 1 : index
    %c0_18 = arith.constant 0 : index
    %c0_19 = arith.constant 0 : index
    %113 = vector.load %arg3[%c0_17, %c1, %c0_18, %c0_19] : memref<1x8x7x16xf32, #tpu.memory_space<vmem>>, vector<1x1x7x16xf32>
    %114 = vector.shape_cast %113 : vector<1x1x7x16xf32> to vector<7x16xf32>
    %115 = vector.extract_strided_slice %2 {offsets = [0, 0], sizes = [8, 1], strides = [1, 1]} : vector<8x3xf32> to vector<8x1xf32>
    %116 = vector.extract_strided_slice %114 {offsets = [0, 0], sizes = [1, 16], strides = [1, 1]} : vector<7x16xf32> to vector<1x16xf32>
    %117 = vector.extract_strided_slice %1 {offsets = [0, 0], sizes = [1, 16], strides = [1, 1]} : vector<3x16xf32> to vector<1x16xf32>
    %118 = arith.subf %116, %117 : vector<1x16xf32>
    %119 = vector.broadcast %115 : vector<8x1xf32> to vector<8x16xf32>
    %120 = vector.broadcast %118 : vector<1x16xf32> to vector<8x16xf32>
    %121 = arith.mulf %119, %120 : vector<8x16xf32>
    %122 = vector.broadcast %3 : vector<8x1xf32> to vector<8x16xf32>
    %123 = arith.addf %122, %121 : vector<8x16xf32>
    %124 = vector.extract_strided_slice %2 {offsets = [0, 1], sizes = [8, 1], strides = [1, 1]} : vector<8x3xf32> to vector<8x1xf32>
    %125 = vector.extract_strided_slice %114 {offsets = [1, 0], sizes = [1, 16], strides = [1, 1]} : vector<7x16xf32> to vector<1x16xf32>
    %126 = vector.extract_strided_slice %1 {offsets = [1, 0], sizes = [1, 16], strides = [1, 1]} : vector<3x16xf32> to vector<1x16xf32>
    %127 = arith.subf %125, %126 : vector<1x16xf32>
    %128 = vector.broadcast %124 : vector<8x1xf32> to vector<8x16xf32>
    %129 = vector.broadcast %127 : vector<1x16xf32> to vector<8x16xf32>
    %130 = arith.mulf %128, %129 : vector<8x16xf32>
    %131 = arith.addf %123, %130 : vector<8x16xf32>
    %132 = vector.extract_strided_slice %2 {offsets = [0, 2], sizes = [8, 1], strides = [1, 1]} : vector<8x3xf32> to vector<8x1xf32>
    %133 = vector.extract_strided_slice %114 {offsets = [2, 0], sizes = [1, 16], strides = [1, 1]} : vector<7x16xf32> to vector<1x16xf32>
    %134 = vector.extract_strided_slice %1 {offsets = [2, 0], sizes = [1, 16], strides = [1, 1]} : vector<3x16xf32> to vector<1x16xf32>
    %135 = arith.subf %133, %134 : vector<1x16xf32>
    %136 = vector.broadcast %132 : vector<8x1xf32> to vector<8x16xf32>
    %137 = vector.broadcast %135 : vector<1x16xf32> to vector<8x16xf32>
    %138 = arith.mulf %136, %137 : vector<8x16xf32>
    %139 = arith.addf %131, %138 : vector<8x16xf32>
    %cst_20 = arith.constant 0.000000e+00 : f32
    %140 = vector.broadcast %cst_20 : f32 to vector<8x16xf32>
    %141 = arith.cmpf ogt, %139, %140 : vector<8x16xf32>
    %cst_21 = arith.constant 1.000000e-01 : f32
    %142 = vector.broadcast %cst_21 : f32 to vector<8x16xf32>
    %143 = arith.mulf %142, %139 : vector<8x16xf32>
    %144 = arith.select %141, %139, %143 : vector<8x16xi1>, vector<8x16xf32>
    %145 = vector.extract_strided_slice %4 {offsets = [0, 0], sizes = [16, 1], strides = [1, 1]} : vector<16x8xf32> to vector<16x1xf32>
    %146 = vector.extract_strided_slice %144 {offsets = [0, 0], sizes = [1, 16], strides = [1, 1]} : vector<8x16xf32> to vector<1x16xf32>
    %147 = vector.broadcast %145 : vector<16x1xf32> to vector<16x16xf32>
    %148 = vector.broadcast %146 : vector<1x16xf32> to vector<16x16xf32>
    %149 = arith.mulf %147, %148 : vector<16x16xf32>
    %150 = vector.broadcast %5 : vector<16x1xf32> to vector<16x16xf32>
    %151 = arith.addf %150, %149 : vector<16x16xf32>
    %152 = vector.extract_strided_slice %4 {offsets = [0, 1], sizes = [16, 1], strides = [1, 1]} : vector<16x8xf32> to vector<16x1xf32>
    %153 = vector.extract_strided_slice %144 {offsets = [1, 0], sizes = [1, 16], strides = [1, 1]} : vector<8x16xf32> to vector<1x16xf32>
    %154 = vector.broadcast %152 : vector<16x1xf32> to vector<16x16xf32>
    %155 = vector.broadcast %153 : vector<1x16xf32> to vector<16x16xf32>
    %156 = arith.mulf %154, %155 : vector<16x16xf32>
    %157 = arith.addf %151, %156 : vector<16x16xf32>
    %158 = vector.extract_strided_slice %4 {offsets = [0, 2], sizes = [16, 1], strides = [1, 1]} : vector<16x8xf32> to vector<16x1xf32>
    %159 = vector.extract_strided_slice %144 {offsets = [2, 0], sizes = [1, 16], strides = [1, 1]} : vector<8x16xf32> to vector<1x16xf32>
    %160 = vector.broadcast %158 : vector<16x1xf32> to vector<16x16xf32>
    %161 = vector.broadcast %159 : vector<1x16xf32> to vector<16x16xf32>
    %162 = arith.mulf %160, %161 : vector<16x16xf32>
    %163 = arith.addf %157, %162 : vector<16x16xf32>
    %164 = vector.extract_strided_slice %4 {offsets = [0, 3], sizes = [16, 1], strides = [1, 1]} : vector<16x8xf32> to vector<16x1xf32>
    %165 = vector.extract_strided_slice %144 {offsets = [3, 0], sizes = [1, 16], strides = [1, 1]} : vector<8x16xf32> to vector<1x16xf32>
    %166 = vector.broadcast %164 : vector<16x1xf32> to vector<16x16xf32>
    %167 = vector.broadcast %165 : vector<1x16xf32> to vector<16x16xf32>
    %168 = arith.mulf %166, %167 : vector<16x16xf32>
    %169 = arith.addf %163, %168 : vector<16x16xf32>
    %170 = vector.extract_strided_slice %4 {offsets = [0, 4], sizes = [16, 1], strides = [1, 1]} : vector<16x8xf32> to vector<16x1xf32>
    %171 = vector.extract_strided_slice %144 {offsets = [4, 0], sizes = [1, 16], strides = [1, 1]} : vector<8x16xf32> to vector<1x16xf32>
    %172 = vector.broadcast %170 : vector<16x1xf32> to vector<16x16xf32>
    %173 = vector.broadcast %171 : vector<1x16xf32> to vector<16x16xf32>
    %174 = arith.mulf %172, %173 : vector<16x16xf32>
    %175 = arith.addf %169, %174 : vector<16x16xf32>
    %176 = vector.extract_strided_slice %4 {offsets = [0, 5], sizes = [16, 1], strides = [1, 1]} : vector<16x8xf32> to vector<16x1xf32>
    %177 = vector.extract_strided_slice %144 {offsets = [5, 0], sizes = [1, 16], strides = [1, 1]} : vector<8x16xf32> to vector<1x16xf32>
    %178 = vector.broadcast %176 : vector<16x1xf32> to vector<16x16xf32>
    %179 = vector.broadcast %177 : vector<1x16xf32> to vector<16x16xf32>
    %180 = arith.mulf %178, %179 : vector<16x16xf32>
    %181 = arith.addf %175, %180 : vector<16x16xf32>
    %182 = vector.extract_strided_slice %4 {offsets = [0, 6], sizes = [16, 1], strides = [1, 1]} : vector<16x8xf32> to vector<16x1xf32>
    %183 = vector.extract_strided_slice %144 {offsets = [6, 0], sizes = [1, 16], strides = [1, 1]} : vector<8x16xf32> to vector<1x16xf32>
    %184 = vector.broadcast %182 : vector<16x1xf32> to vector<16x16xf32>
    %185 = vector.broadcast %183 : vector<1x16xf32> to vector<16x16xf32>
    %186 = arith.mulf %184, %185 : vector<16x16xf32>
    %187 = arith.addf %181, %186 : vector<16x16xf32>
    %188 = vector.extract_strided_slice %4 {offsets = [0, 7], sizes = [16, 1], strides = [1, 1]} : vector<16x8xf32> to vector<16x1xf32>
    %189 = vector.extract_strided_slice %144 {offsets = [7, 0], sizes = [1, 16], strides = [1, 1]} : vector<8x16xf32> to vector<1x16xf32>
    %190 = vector.broadcast %188 : vector<16x1xf32> to vector<16x16xf32>
    %191 = vector.broadcast %189 : vector<1x16xf32> to vector<16x16xf32>
    %192 = arith.mulf %190, %191 : vector<16x16xf32>
    %193 = arith.addf %187, %192 : vector<16x16xf32>
    %cst_22 = arith.constant 0.000000e+00 : f32
    %194 = vector.broadcast %cst_22 : f32 to vector<16x16xf32>
    %195 = arith.cmpf ogt, %193, %194 : vector<16x16xf32>
    %cst_23 = arith.constant 1.000000e-01 : f32
    %196 = vector.broadcast %cst_23 : f32 to vector<16x16xf32>
    %197 = arith.mulf %196, %193 : vector<16x16xf32>
    %198 = arith.select %195, %193, %197 : vector<16x16xi1>, vector<16x16xf32>
    %199 = vector.extract_strided_slice %114 {offsets = [0, 0], sizes = [1, 16], strides = [1, 1]} : vector<7x16xf32> to vector<1x16xf32>
    %200 = vector.broadcast %199 : vector<1x16xf32> to vector<16x16xf32>
    %201 = arith.mulf %200, %198 : vector<16x16xf32>
    %202 = arith.addf %94, %201 : vector<16x16xf32>
    %203 = vector.extract_strided_slice %114 {offsets = [1, 0], sizes = [1, 16], strides = [1, 1]} : vector<7x16xf32> to vector<1x16xf32>
    %204 = vector.broadcast %203 : vector<1x16xf32> to vector<16x16xf32>
    %205 = arith.mulf %204, %198 : vector<16x16xf32>
    %206 = arith.addf %97, %205 : vector<16x16xf32>
    %207 = vector.extract_strided_slice %114 {offsets = [2, 0], sizes = [1, 16], strides = [1, 1]} : vector<7x16xf32> to vector<1x16xf32>
    %208 = vector.broadcast %207 : vector<1x16xf32> to vector<16x16xf32>
    %209 = arith.mulf %208, %198 : vector<16x16xf32>
    %210 = arith.addf %100, %209 : vector<16x16xf32>
    %211 = vector.extract_strided_slice %114 {offsets = [3, 0], sizes = [1, 16], strides = [1, 1]} : vector<7x16xf32> to vector<1x16xf32>
    %212 = vector.broadcast %211 : vector<1x16xf32> to vector<16x16xf32>
    %213 = arith.mulf %212, %198 : vector<16x16xf32>
    %214 = arith.addf %103, %213 : vector<16x16xf32>
    %215 = vector.extract_strided_slice %114 {offsets = [4, 0], sizes = [1, 16], strides = [1, 1]} : vector<7x16xf32> to vector<1x16xf32>
    %216 = vector.broadcast %215 : vector<1x16xf32> to vector<16x16xf32>
    %217 = arith.mulf %216, %198 : vector<16x16xf32>
    %218 = arith.addf %106, %217 : vector<16x16xf32>
    %219 = vector.extract_strided_slice %114 {offsets = [5, 0], sizes = [1, 16], strides = [1, 1]} : vector<7x16xf32> to vector<1x16xf32>
    %220 = vector.broadcast %219 : vector<1x16xf32> to vector<16x16xf32>
    %221 = arith.mulf %220, %198 : vector<16x16xf32>
    %222 = arith.addf %109, %221 : vector<16x16xf32>
    %223 = vector.extract_strided_slice %114 {offsets = [6, 0], sizes = [1, 16], strides = [1, 1]} : vector<7x16xf32> to vector<1x16xf32>
    %224 = vector.broadcast %223 : vector<1x16xf32> to vector<16x16xf32>
    %225 = arith.mulf %224, %198 : vector<16x16xf32>
    %226 = arith.addf %112, %225 : vector<16x16xf32>
    %c0_24 = arith.constant 0 : index
    %c2 = arith.constant 2 : index
    %c0_25 = arith.constant 0 : index
    %c0_26 = arith.constant 0 : index
    %227 = vector.load %arg3[%c0_24, %c2, %c0_25, %c0_26] : memref<1x8x7x16xf32, #tpu.memory_space<vmem>>, vector<1x1x7x16xf32>
    %228 = vector.shape_cast %227 : vector<1x1x7x16xf32> to vector<7x16xf32>
    %229 = vector.extract_strided_slice %2 {offsets = [0, 0], sizes = [8, 1], strides = [1, 1]} : vector<8x3xf32> to vector<8x1xf32>
    %230 = vector.extract_strided_slice %228 {offsets = [0, 0], sizes = [1, 16], strides = [1, 1]} : vector<7x16xf32> to vector<1x16xf32>
    %231 = vector.extract_strided_slice %1 {offsets = [0, 0], sizes = [1, 16], strides = [1, 1]} : vector<3x16xf32> to vector<1x16xf32>
    %232 = arith.subf %230, %231 : vector<1x16xf32>
    %233 = vector.broadcast %229 : vector<8x1xf32> to vector<8x16xf32>
    %234 = vector.broadcast %232 : vector<1x16xf32> to vector<8x16xf32>
    %235 = arith.mulf %233, %234 : vector<8x16xf32>
    %236 = vector.broadcast %3 : vector<8x1xf32> to vector<8x16xf32>
    %237 = arith.addf %236, %235 : vector<8x16xf32>
    %238 = vector.extract_strided_slice %2 {offsets = [0, 1], sizes = [8, 1], strides = [1, 1]} : vector<8x3xf32> to vector<8x1xf32>
    %239 = vector.extract_strided_slice %228 {offsets = [1, 0], sizes = [1, 16], strides = [1, 1]} : vector<7x16xf32> to vector<1x16xf32>
    %240 = vector.extract_strided_slice %1 {offsets = [1, 0], sizes = [1, 16], strides = [1, 1]} : vector<3x16xf32> to vector<1x16xf32>
    %241 = arith.subf %239, %240 : vector<1x16xf32>
    %242 = vector.broadcast %238 : vector<8x1xf32> to vector<8x16xf32>
    %243 = vector.broadcast %241 : vector<1x16xf32> to vector<8x16xf32>
    %244 = arith.mulf %242, %243 : vector<8x16xf32>
    %245 = arith.addf %237, %244 : vector<8x16xf32>
    %246 = vector.extract_strided_slice %2 {offsets = [0, 2], sizes = [8, 1], strides = [1, 1]} : vector<8x3xf32> to vector<8x1xf32>
    %247 = vector.extract_strided_slice %228 {offsets = [2, 0], sizes = [1, 16], strides = [1, 1]} : vector<7x16xf32> to vector<1x16xf32>
    %248 = vector.extract_strided_slice %1 {offsets = [2, 0], sizes = [1, 16], strides = [1, 1]} : vector<3x16xf32> to vector<1x16xf32>
    %249 = arith.subf %247, %248 : vector<1x16xf32>
    %250 = vector.broadcast %246 : vector<8x1xf32> to vector<8x16xf32>
    %251 = vector.broadcast %249 : vector<1x16xf32> to vector<8x16xf32>
    %252 = arith.mulf %250, %251 : vector<8x16xf32>
    %253 = arith.addf %245, %252 : vector<8x16xf32>
    %cst_27 = arith.constant 0.000000e+00 : f32
    %254 = vector.broadcast %cst_27 : f32 to vector<8x16xf32>
    %255 = arith.cmpf ogt, %253, %254 : vector<8x16xf32>
    %cst_28 = arith.constant 1.000000e-01 : f32
    %256 = vector.broadcast %cst_28 : f32 to vector<8x16xf32>
    %257 = arith.mulf %256, %253 : vector<8x16xf32>
    %258 = arith.select %255, %253, %257 : vector<8x16xi1>, vector<8x16xf32>
    %259 = vector.extract_strided_slice %4 {offsets = [0, 0], sizes = [16, 1], strides = [1, 1]} : vector<16x8xf32> to vector<16x1xf32>
    %260 = vector.extract_strided_slice %258 {offsets = [0, 0], sizes = [1, 16], strides = [1, 1]} : vector<8x16xf32> to vector<1x16xf32>
    %261 = vector.broadcast %259 : vector<16x1xf32> to vector<16x16xf32>
    %262 = vector.broadcast %260 : vector<1x16xf32> to vector<16x16xf32>
    %263 = arith.mulf %261, %262 : vector<16x16xf32>
    %264 = vector.broadcast %5 : vector<16x1xf32> to vector<16x16xf32>
    %265 = arith.addf %264, %263 : vector<16x16xf32>
    %266 = vector.extract_strided_slice %4 {offsets = [0, 1], sizes = [16, 1], strides = [1, 1]} : vector<16x8xf32> to vector<16x1xf32>
    %267 = vector.extract_strided_slice %258 {offsets = [1, 0], sizes = [1, 16], strides = [1, 1]} : vector<8x16xf32> to vector<1x16xf32>
    %268 = vector.broadcast %266 : vector<16x1xf32> to vector<16x16xf32>
    %269 = vector.broadcast %267 : vector<1x16xf32> to vector<16x16xf32>
    %270 = arith.mulf %268, %269 : vector<16x16xf32>
    %271 = arith.addf %265, %270 : vector<16x16xf32>
    %272 = vector.extract_strided_slice %4 {offsets = [0, 2], sizes = [16, 1], strides = [1, 1]} : vector<16x8xf32> to vector<16x1xf32>
    %273 = vector.extract_strided_slice %258 {offsets = [2, 0], sizes = [1, 16], strides = [1, 1]} : vector<8x16xf32> to vector<1x16xf32>
    %274 = vector.broadcast %272 : vector<16x1xf32> to vector<16x16xf32>
    %275 = vector.broadcast %273 : vector<1x16xf32> to vector<16x16xf32>
    %276 = arith.mulf %274, %275 : vector<16x16xf32>
    %277 = arith.addf %271, %276 : vector<16x16xf32>
    %278 = vector.extract_strided_slice %4 {offsets = [0, 3], sizes = [16, 1], strides = [1, 1]} : vector<16x8xf32> to vector<16x1xf32>
    %279 = vector.extract_strided_slice %258 {offsets = [3, 0], sizes = [1, 16], strides = [1, 1]} : vector<8x16xf32> to vector<1x16xf32>
    %280 = vector.broadcast %278 : vector<16x1xf32> to vector<16x16xf32>
    %281 = vector.broadcast %279 : vector<1x16xf32> to vector<16x16xf32>
    %282 = arith.mulf %280, %281 : vector<16x16xf32>
    %283 = arith.addf %277, %282 : vector<16x16xf32>
    %284 = vector.extract_strided_slice %4 {offsets = [0, 4], sizes = [16, 1], strides = [1, 1]} : vector<16x8xf32> to vector<16x1xf32>
    %285 = vector.extract_strided_slice %258 {offsets = [4, 0], sizes = [1, 16], strides = [1, 1]} : vector<8x16xf32> to vector<1x16xf32>
    %286 = vector.broadcast %284 : vector<16x1xf32> to vector<16x16xf32>
    %287 = vector.broadcast %285 : vector<1x16xf32> to vector<16x16xf32>
    %288 = arith.mulf %286, %287 : vector<16x16xf32>
    %289 = arith.addf %283, %288 : vector<16x16xf32>
    %290 = vector.extract_strided_slice %4 {offsets = [0, 5], sizes = [16, 1], strides = [1, 1]} : vector<16x8xf32> to vector<16x1xf32>
    %291 = vector.extract_strided_slice %258 {offsets = [5, 0], sizes = [1, 16], strides = [1, 1]} : vector<8x16xf32> to vector<1x16xf32>
    %292 = vector.broadcast %290 : vector<16x1xf32> to vector<16x16xf32>
    %293 = vector.broadcast %291 : vector<1x16xf32> to vector<16x16xf32>
    %294 = arith.mulf %292, %293 : vector<16x16xf32>
    %295 = arith.addf %289, %294 : vector<16x16xf32>
    %296 = vector.extract_strided_slice %4 {offsets = [0, 6], sizes = [16, 1], strides = [1, 1]} : vector<16x8xf32> to vector<16x1xf32>
    %297 = vector.extract_strided_slice %258 {offsets = [6, 0], sizes = [1, 16], strides = [1, 1]} : vector<8x16xf32> to vector<1x16xf32>
    %298 = vector.broadcast %296 : vector<16x1xf32> to vector<16x16xf32>
    %299 = vector.broadcast %297 : vector<1x16xf32> to vector<16x16xf32>
    %300 = arith.mulf %298, %299 : vector<16x16xf32>
    %301 = arith.addf %295, %300 : vector<16x16xf32>
    %302 = vector.extract_strided_slice %4 {offsets = [0, 7], sizes = [16, 1], strides = [1, 1]} : vector<16x8xf32> to vector<16x1xf32>
    %303 = vector.extract_strided_slice %258 {offsets = [7, 0], sizes = [1, 16], strides = [1, 1]} : vector<8x16xf32> to vector<1x16xf32>
    %304 = vector.broadcast %302 : vector<16x1xf32> to vector<16x16xf32>
    %305 = vector.broadcast %303 : vector<1x16xf32> to vector<16x16xf32>
    %306 = arith.mulf %304, %305 : vector<16x16xf32>
    %307 = arith.addf %301, %306 : vector<16x16xf32>
    %cst_29 = arith.constant 0.000000e+00 : f32
    %308 = vector.broadcast %cst_29 : f32 to vector<16x16xf32>
    %309 = arith.cmpf ogt, %307, %308 : vector<16x16xf32>
    %cst_30 = arith.constant 1.000000e-01 : f32
    %310 = vector.broadcast %cst_30 : f32 to vector<16x16xf32>
    %311 = arith.mulf %310, %307 : vector<16x16xf32>
    %312 = arith.select %309, %307, %311 : vector<16x16xi1>, vector<16x16xf32>
    %313 = vector.extract_strided_slice %228 {offsets = [0, 0], sizes = [1, 16], strides = [1, 1]} : vector<7x16xf32> to vector<1x16xf32>
    %314 = vector.broadcast %313 : vector<1x16xf32> to vector<16x16xf32>
    %315 = arith.mulf %314, %312 : vector<16x16xf32>
    %316 = arith.addf %202, %315 : vector<16x16xf32>
    %317 = vector.extract_strided_slice %228 {offsets = [1, 0], sizes = [1, 16], strides = [1, 1]} : vector<7x16xf32> to vector<1x16xf32>
    %318 = vector.broadcast %317 : vector<1x16xf32> to vector<16x16xf32>
    %319 = arith.mulf %318, %312 : vector<16x16xf32>
    %320 = arith.addf %206, %319 : vector<16x16xf32>
    %321 = vector.extract_strided_slice %228 {offsets = [2, 0], sizes = [1, 16], strides = [1, 1]} : vector<7x16xf32> to vector<1x16xf32>
    %322 = vector.broadcast %321 : vector<1x16xf32> to vector<16x16xf32>
    %323 = arith.mulf %322, %312 : vector<16x16xf32>
    %324 = arith.addf %210, %323 : vector<16x16xf32>
    %325 = vector.extract_strided_slice %228 {offsets = [3, 0], sizes = [1, 16], strides = [1, 1]} : vector<7x16xf32> to vector<1x16xf32>
    %326 = vector.broadcast %325 : vector<1x16xf32> to vector<16x16xf32>
    %327 = arith.mulf %326, %312 : vector<16x16xf32>
    %328 = arith.addf %214, %327 : vector<16x16xf32>
    %329 = vector.extract_strided_slice %228 {offsets = [4, 0], sizes = [1, 16], strides = [1, 1]} : vector<7x16xf32> to vector<1x16xf32>
    %330 = vector.broadcast %329 : vector<1x16xf32> to vector<16x16xf32>
    %331 = arith.mulf %330, %312 : vector<16x16xf32>
    %332 = arith.addf %218, %331 : vector<16x16xf32>
    %333 = vector.extract_strided_slice %228 {offsets = [5, 0], sizes = [1, 16], strides = [1, 1]} : vector<7x16xf32> to vector<1x16xf32>
    %334 = vector.broadcast %333 : vector<1x16xf32> to vector<16x16xf32>
    %335 = arith.mulf %334, %312 : vector<16x16xf32>
    %336 = arith.addf %222, %335 : vector<16x16xf32>
    %337 = vector.extract_strided_slice %228 {offsets = [6, 0], sizes = [1, 16], strides = [1, 1]} : vector<7x16xf32> to vector<1x16xf32>
    %338 = vector.broadcast %337 : vector<1x16xf32> to vector<16x16xf32>
    %339 = arith.mulf %338, %312 : vector<16x16xf32>
    %340 = arith.addf %226, %339 : vector<16x16xf32>
    %c0_31 = arith.constant 0 : index
    %c3 = arith.constant 3 : index
    %c0_32 = arith.constant 0 : index
    %c0_33 = arith.constant 0 : index
    %341 = vector.load %arg3[%c0_31, %c3, %c0_32, %c0_33] : memref<1x8x7x16xf32, #tpu.memory_space<vmem>>, vector<1x1x7x16xf32>
    %342 = vector.shape_cast %341 : vector<1x1x7x16xf32> to vector<7x16xf32>
    %343 = vector.extract_strided_slice %2 {offsets = [0, 0], sizes = [8, 1], strides = [1, 1]} : vector<8x3xf32> to vector<8x1xf32>
    %344 = vector.extract_strided_slice %342 {offsets = [0, 0], sizes = [1, 16], strides = [1, 1]} : vector<7x16xf32> to vector<1x16xf32>
    %345 = vector.extract_strided_slice %1 {offsets = [0, 0], sizes = [1, 16], strides = [1, 1]} : vector<3x16xf32> to vector<1x16xf32>
    %346 = arith.subf %344, %345 : vector<1x16xf32>
    %347 = vector.broadcast %343 : vector<8x1xf32> to vector<8x16xf32>
    %348 = vector.broadcast %346 : vector<1x16xf32> to vector<8x16xf32>
    %349 = arith.mulf %347, %348 : vector<8x16xf32>
    %350 = vector.broadcast %3 : vector<8x1xf32> to vector<8x16xf32>
    %351 = arith.addf %350, %349 : vector<8x16xf32>
    %352 = vector.extract_strided_slice %2 {offsets = [0, 1], sizes = [8, 1], strides = [1, 1]} : vector<8x3xf32> to vector<8x1xf32>
    %353 = vector.extract_strided_slice %342 {offsets = [1, 0], sizes = [1, 16], strides = [1, 1]} : vector<7x16xf32> to vector<1x16xf32>
    %354 = vector.extract_strided_slice %1 {offsets = [1, 0], sizes = [1, 16], strides = [1, 1]} : vector<3x16xf32> to vector<1x16xf32>
    %355 = arith.subf %353, %354 : vector<1x16xf32>
    %356 = vector.broadcast %352 : vector<8x1xf32> to vector<8x16xf32>
    %357 = vector.broadcast %355 : vector<1x16xf32> to vector<8x16xf32>
    %358 = arith.mulf %356, %357 : vector<8x16xf32>
    %359 = arith.addf %351, %358 : vector<8x16xf32>
    %360 = vector.extract_strided_slice %2 {offsets = [0, 2], sizes = [8, 1], strides = [1, 1]} : vector<8x3xf32> to vector<8x1xf32>
    %361 = vector.extract_strided_slice %342 {offsets = [2, 0], sizes = [1, 16], strides = [1, 1]} : vector<7x16xf32> to vector<1x16xf32>
    %362 = vector.extract_strided_slice %1 {offsets = [2, 0], sizes = [1, 16], strides = [1, 1]} : vector<3x16xf32> to vector<1x16xf32>
    %363 = arith.subf %361, %362 : vector<1x16xf32>
    %364 = vector.broadcast %360 : vector<8x1xf32> to vector<8x16xf32>
    %365 = vector.broadcast %363 : vector<1x16xf32> to vector<8x16xf32>
    %366 = arith.mulf %364, %365 : vector<8x16xf32>
    %367 = arith.addf %359, %366 : vector<8x16xf32>
    %cst_34 = arith.constant 0.000000e+00 : f32
    %368 = vector.broadcast %cst_34 : f32 to vector<8x16xf32>
    %369 = arith.cmpf ogt, %367, %368 : vector<8x16xf32>
    %cst_35 = arith.constant 1.000000e-01 : f32
    %370 = vector.broadcast %cst_35 : f32 to vector<8x16xf32>
    %371 = arith.mulf %370, %367 : vector<8x16xf32>
    %372 = arith.select %369, %367, %371 : vector<8x16xi1>, vector<8x16xf32>
    %373 = vector.extract_strided_slice %4 {offsets = [0, 0], sizes = [16, 1], strides = [1, 1]} : vector<16x8xf32> to vector<16x1xf32>
    %374 = vector.extract_strided_slice %372 {offsets = [0, 0], sizes = [1, 16], strides = [1, 1]} : vector<8x16xf32> to vector<1x16xf32>
    %375 = vector.broadcast %373 : vector<16x1xf32> to vector<16x16xf32>
    %376 = vector.broadcast %374 : vector<1x16xf32> to vector<16x16xf32>
    %377 = arith.mulf %375, %376 : vector<16x16xf32>
    %378 = vector.broadcast %5 : vector<16x1xf32> to vector<16x16xf32>
    %379 = arith.addf %378, %377 : vector<16x16xf32>
    %380 = vector.extract_strided_slice %4 {offsets = [0, 1], sizes = [16, 1], strides = [1, 1]} : vector<16x8xf32> to vector<16x1xf32>
    %381 = vector.extract_strided_slice %372 {offsets = [1, 0], sizes = [1, 16], strides = [1, 1]} : vector<8x16xf32> to vector<1x16xf32>
    %382 = vector.broadcast %380 : vector<16x1xf32> to vector<16x16xf32>
    %383 = vector.broadcast %381 : vector<1x16xf32> to vector<16x16xf32>
    %384 = arith.mulf %382, %383 : vector<16x16xf32>
    %385 = arith.addf %379, %384 : vector<16x16xf32>
    %386 = vector.extract_strided_slice %4 {offsets = [0, 2], sizes = [16, 1], strides = [1, 1]} : vector<16x8xf32> to vector<16x1xf32>
    %387 = vector.extract_strided_slice %372 {offsets = [2, 0], sizes = [1, 16], strides = [1, 1]} : vector<8x16xf32> to vector<1x16xf32>
    %388 = vector.broadcast %386 : vector<16x1xf32> to vector<16x16xf32>
    %389 = vector.broadcast %387 : vector<1x16xf32> to vector<16x16xf32>
    %390 = arith.mulf %388, %389 : vector<16x16xf32>
    %391 = arith.addf %385, %390 : vector<16x16xf32>
    %392 = vector.extract_strided_slice %4 {offsets = [0, 3], sizes = [16, 1], strides = [1, 1]} : vector<16x8xf32> to vector<16x1xf32>
    %393 = vector.extract_strided_slice %372 {offsets = [3, 0], sizes = [1, 16], strides = [1, 1]} : vector<8x16xf32> to vector<1x16xf32>
    %394 = vector.broadcast %392 : vector<16x1xf32> to vector<16x16xf32>
    %395 = vector.broadcast %393 : vector<1x16xf32> to vector<16x16xf32>
    %396 = arith.mulf %394, %395 : vector<16x16xf32>
    %397 = arith.addf %391, %396 : vector<16x16xf32>
    %398 = vector.extract_strided_slice %4 {offsets = [0, 4], sizes = [16, 1], strides = [1, 1]} : vector<16x8xf32> to vector<16x1xf32>
    %399 = vector.extract_strided_slice %372 {offsets = [4, 0], sizes = [1, 16], strides = [1, 1]} : vector<8x16xf32> to vector<1x16xf32>
    %400 = vector.broadcast %398 : vector<16x1xf32> to vector<16x16xf32>
    %401 = vector.broadcast %399 : vector<1x16xf32> to vector<16x16xf32>
    %402 = arith.mulf %400, %401 : vector<16x16xf32>
    %403 = arith.addf %397, %402 : vector<16x16xf32>
    %404 = vector.extract_strided_slice %4 {offsets = [0, 5], sizes = [16, 1], strides = [1, 1]} : vector<16x8xf32> to vector<16x1xf32>
    %405 = vector.extract_strided_slice %372 {offsets = [5, 0], sizes = [1, 16], strides = [1, 1]} : vector<8x16xf32> to vector<1x16xf32>
    %406 = vector.broadcast %404 : vector<16x1xf32> to vector<16x16xf32>
    %407 = vector.broadcast %405 : vector<1x16xf32> to vector<16x16xf32>
    %408 = arith.mulf %406, %407 : vector<16x16xf32>
    %409 = arith.addf %403, %408 : vector<16x16xf32>
    %410 = vector.extract_strided_slice %4 {offsets = [0, 6], sizes = [16, 1], strides = [1, 1]} : vector<16x8xf32> to vector<16x1xf32>
    %411 = vector.extract_strided_slice %372 {offsets = [6, 0], sizes = [1, 16], strides = [1, 1]} : vector<8x16xf32> to vector<1x16xf32>
    %412 = vector.broadcast %410 : vector<16x1xf32> to vector<16x16xf32>
    %413 = vector.broadcast %411 : vector<1x16xf32> to vector<16x16xf32>
    %414 = arith.mulf %412, %413 : vector<16x16xf32>
    %415 = arith.addf %409, %414 : vector<16x16xf32>
    %416 = vector.extract_strided_slice %4 {offsets = [0, 7], sizes = [16, 1], strides = [1, 1]} : vector<16x8xf32> to vector<16x1xf32>
    %417 = vector.extract_strided_slice %372 {offsets = [7, 0], sizes = [1, 16], strides = [1, 1]} : vector<8x16xf32> to vector<1x16xf32>
    %418 = vector.broadcast %416 : vector<16x1xf32> to vector<16x16xf32>
    %419 = vector.broadcast %417 : vector<1x16xf32> to vector<16x16xf32>
    %420 = arith.mulf %418, %419 : vector<16x16xf32>
    %421 = arith.addf %415, %420 : vector<16x16xf32>
    %cst_36 = arith.constant 0.000000e+00 : f32
    %422 = vector.broadcast %cst_36 : f32 to vector<16x16xf32>
    %423 = arith.cmpf ogt, %421, %422 : vector<16x16xf32>
    %cst_37 = arith.constant 1.000000e-01 : f32
    %424 = vector.broadcast %cst_37 : f32 to vector<16x16xf32>
    %425 = arith.mulf %424, %421 : vector<16x16xf32>
    %426 = arith.select %423, %421, %425 : vector<16x16xi1>, vector<16x16xf32>
    %427 = vector.extract_strided_slice %342 {offsets = [0, 0], sizes = [1, 16], strides = [1, 1]} : vector<7x16xf32> to vector<1x16xf32>
    %428 = vector.broadcast %427 : vector<1x16xf32> to vector<16x16xf32>
    %429 = arith.mulf %428, %426 : vector<16x16xf32>
    %430 = arith.addf %316, %429 : vector<16x16xf32>
    %431 = vector.extract_strided_slice %342 {offsets = [1, 0], sizes = [1, 16], strides = [1, 1]} : vector<7x16xf32> to vector<1x16xf32>
    %432 = vector.broadcast %431 : vector<1x16xf32> to vector<16x16xf32>
    %433 = arith.mulf %432, %426 : vector<16x16xf32>
    %434 = arith.addf %320, %433 : vector<16x16xf32>
    %435 = vector.extract_strided_slice %342 {offsets = [2, 0], sizes = [1, 16], strides = [1, 1]} : vector<7x16xf32> to vector<1x16xf32>
    %436 = vector.broadcast %435 : vector<1x16xf32> to vector<16x16xf32>
    %437 = arith.mulf %436, %426 : vector<16x16xf32>
    %438 = arith.addf %324, %437 : vector<16x16xf32>
    %439 = vector.extract_strided_slice %342 {offsets = [3, 0], sizes = [1, 16], strides = [1, 1]} : vector<7x16xf32> to vector<1x16xf32>
    %440 = vector.broadcast %439 : vector<1x16xf32> to vector<16x16xf32>
    %441 = arith.mulf %440, %426 : vector<16x16xf32>
    %442 = arith.addf %328, %441 : vector<16x16xf32>
    %443 = vector.extract_strided_slice %342 {offsets = [4, 0], sizes = [1, 16], strides = [1, 1]} : vector<7x16xf32> to vector<1x16xf32>
    %444 = vector.broadcast %443 : vector<1x16xf32> to vector<16x16xf32>
    %445 = arith.mulf %444, %426 : vector<16x16xf32>
    %446 = arith.addf %332, %445 : vector<16x16xf32>
    %447 = vector.extract_strided_slice %342 {offsets = [5, 0], sizes = [1, 16], strides = [1, 1]} : vector<7x16xf32> to vector<1x16xf32>
    %448 = vector.broadcast %447 : vector<1x16xf32> to vector<16x16xf32>
    %449 = arith.mulf %448, %426 : vector<16x16xf32>
    %450 = arith.addf %336, %449 : vector<16x16xf32>
    %451 = vector.extract_strided_slice %342 {offsets = [6, 0], sizes = [1, 16], strides = [1, 1]} : vector<7x16xf32> to vector<1x16xf32>
    %452 = vector.broadcast %451 : vector<1x16xf32> to vector<16x16xf32>
    %453 = arith.mulf %452, %426 : vector<16x16xf32>
    %454 = arith.addf %340, %453 : vector<16x16xf32>
    %c0_38 = arith.constant 0 : index
    %c4 = arith.constant 4 : index
    %c0_39 = arith.constant 0 : index
    %c0_40 = arith.constant 0 : index
    %455 = vector.load %arg3[%c0_38, %c4, %c0_39, %c0_40] : memref<1x8x7x16xf32, #tpu.memory_space<vmem>>, vector<1x1x7x16xf32>
    %456 = vector.shape_cast %455 : vector<1x1x7x16xf32> to vector<7x16xf32>
    %457 = vector.extract_strided_slice %2 {offsets = [0, 0], sizes = [8, 1], strides = [1, 1]} : vector<8x3xf32> to vector<8x1xf32>
    %458 = vector.extract_strided_slice %456 {offsets = [0, 0], sizes = [1, 16], strides = [1, 1]} : vector<7x16xf32> to vector<1x16xf32>
    %459 = vector.extract_strided_slice %1 {offsets = [0, 0], sizes = [1, 16], strides = [1, 1]} : vector<3x16xf32> to vector<1x16xf32>
    %460 = arith.subf %458, %459 : vector<1x16xf32>
    %461 = vector.broadcast %457 : vector<8x1xf32> to vector<8x16xf32>
    %462 = vector.broadcast %460 : vector<1x16xf32> to vector<8x16xf32>
    %463 = arith.mulf %461, %462 : vector<8x16xf32>
    %464 = vector.broadcast %3 : vector<8x1xf32> to vector<8x16xf32>
    %465 = arith.addf %464, %463 : vector<8x16xf32>
    %466 = vector.extract_strided_slice %2 {offsets = [0, 1], sizes = [8, 1], strides = [1, 1]} : vector<8x3xf32> to vector<8x1xf32>
    %467 = vector.extract_strided_slice %456 {offsets = [1, 0], sizes = [1, 16], strides = [1, 1]} : vector<7x16xf32> to vector<1x16xf32>
    %468 = vector.extract_strided_slice %1 {offsets = [1, 0], sizes = [1, 16], strides = [1, 1]} : vector<3x16xf32> to vector<1x16xf32>
    %469 = arith.subf %467, %468 : vector<1x16xf32>
    %470 = vector.broadcast %466 : vector<8x1xf32> to vector<8x16xf32>
    %471 = vector.broadcast %469 : vector<1x16xf32> to vector<8x16xf32>
    %472 = arith.mulf %470, %471 : vector<8x16xf32>
    %473 = arith.addf %465, %472 : vector<8x16xf32>
    %474 = vector.extract_strided_slice %2 {offsets = [0, 2], sizes = [8, 1], strides = [1, 1]} : vector<8x3xf32> to vector<8x1xf32>
    %475 = vector.extract_strided_slice %456 {offsets = [2, 0], sizes = [1, 16], strides = [1, 1]} : vector<7x16xf32> to vector<1x16xf32>
    %476 = vector.extract_strided_slice %1 {offsets = [2, 0], sizes = [1, 16], strides = [1, 1]} : vector<3x16xf32> to vector<1x16xf32>
    %477 = arith.subf %475, %476 : vector<1x16xf32>
    %478 = vector.broadcast %474 : vector<8x1xf32> to vector<8x16xf32>
    %479 = vector.broadcast %477 : vector<1x16xf32> to vector<8x16xf32>
    %480 = arith.mulf %478, %479 : vector<8x16xf32>
    %481 = arith.addf %473, %480 : vector<8x16xf32>
    %cst_41 = arith.constant 0.000000e+00 : f32
    %482 = vector.broadcast %cst_41 : f32 to vector<8x16xf32>
    %483 = arith.cmpf ogt, %481, %482 : vector<8x16xf32>
    %cst_42 = arith.constant 1.000000e-01 : f32
    %484 = vector.broadcast %cst_42 : f32 to vector<8x16xf32>
    %485 = arith.mulf %484, %481 : vector<8x16xf32>
    %486 = arith.select %483, %481, %485 : vector<8x16xi1>, vector<8x16xf32>
    %487 = vector.extract_strided_slice %4 {offsets = [0, 0], sizes = [16, 1], strides = [1, 1]} : vector<16x8xf32> to vector<16x1xf32>
    %488 = vector.extract_strided_slice %486 {offsets = [0, 0], sizes = [1, 16], strides = [1, 1]} : vector<8x16xf32> to vector<1x16xf32>
    %489 = vector.broadcast %487 : vector<16x1xf32> to vector<16x16xf32>
    %490 = vector.broadcast %488 : vector<1x16xf32> to vector<16x16xf32>
    %491 = arith.mulf %489, %490 : vector<16x16xf32>
    %492 = vector.broadcast %5 : vector<16x1xf32> to vector<16x16xf32>
    %493 = arith.addf %492, %491 : vector<16x16xf32>
    %494 = vector.extract_strided_slice %4 {offsets = [0, 1], sizes = [16, 1], strides = [1, 1]} : vector<16x8xf32> to vector<16x1xf32>
    %495 = vector.extract_strided_slice %486 {offsets = [1, 0], sizes = [1, 16], strides = [1, 1]} : vector<8x16xf32> to vector<1x16xf32>
    %496 = vector.broadcast %494 : vector<16x1xf32> to vector<16x16xf32>
    %497 = vector.broadcast %495 : vector<1x16xf32> to vector<16x16xf32>
    %498 = arith.mulf %496, %497 : vector<16x16xf32>
    %499 = arith.addf %493, %498 : vector<16x16xf32>
    %500 = vector.extract_strided_slice %4 {offsets = [0, 2], sizes = [16, 1], strides = [1, 1]} : vector<16x8xf32> to vector<16x1xf32>
    %501 = vector.extract_strided_slice %486 {offsets = [2, 0], sizes = [1, 16], strides = [1, 1]} : vector<8x16xf32> to vector<1x16xf32>
    %502 = vector.broadcast %500 : vector<16x1xf32> to vector<16x16xf32>
    %503 = vector.broadcast %501 : vector<1x16xf32> to vector<16x16xf32>
    %504 = arith.mulf %502, %503 : vector<16x16xf32>
    %505 = arith.addf %499, %504 : vector<16x16xf32>
    %506 = vector.extract_strided_slice %4 {offsets = [0, 3], sizes = [16, 1], strides = [1, 1]} : vector<16x8xf32> to vector<16x1xf32>
    %507 = vector.extract_strided_slice %486 {offsets = [3, 0], sizes = [1, 16], strides = [1, 1]} : vector<8x16xf32> to vector<1x16xf32>
    %508 = vector.broadcast %506 : vector<16x1xf32> to vector<16x16xf32>
    %509 = vector.broadcast %507 : vector<1x16xf32> to vector<16x16xf32>
    %510 = arith.mulf %508, %509 : vector<16x16xf32>
    %511 = arith.addf %505, %510 : vector<16x16xf32>
    %512 = vector.extract_strided_slice %4 {offsets = [0, 4], sizes = [16, 1], strides = [1, 1]} : vector<16x8xf32> to vector<16x1xf32>
    %513 = vector.extract_strided_slice %486 {offsets = [4, 0], sizes = [1, 16], strides = [1, 1]} : vector<8x16xf32> to vector<1x16xf32>
    %514 = vector.broadcast %512 : vector<16x1xf32> to vector<16x16xf32>
    %515 = vector.broadcast %513 : vector<1x16xf32> to vector<16x16xf32>
    %516 = arith.mulf %514, %515 : vector<16x16xf32>
    %517 = arith.addf %511, %516 : vector<16x16xf32>
    %518 = vector.extract_strided_slice %4 {offsets = [0, 5], sizes = [16, 1], strides = [1, 1]} : vector<16x8xf32> to vector<16x1xf32>
    %519 = vector.extract_strided_slice %486 {offsets = [5, 0], sizes = [1, 16], strides = [1, 1]} : vector<8x16xf32> to vector<1x16xf32>
    %520 = vector.broadcast %518 : vector<16x1xf32> to vector<16x16xf32>
    %521 = vector.broadcast %519 : vector<1x16xf32> to vector<16x16xf32>
    %522 = arith.mulf %520, %521 : vector<16x16xf32>
    %523 = arith.addf %517, %522 : vector<16x16xf32>
    %524 = vector.extract_strided_slice %4 {offsets = [0, 6], sizes = [16, 1], strides = [1, 1]} : vector<16x8xf32> to vector<16x1xf32>
    %525 = vector.extract_strided_slice %486 {offsets = [6, 0], sizes = [1, 16], strides = [1, 1]} : vector<8x16xf32> to vector<1x16xf32>
    %526 = vector.broadcast %524 : vector<16x1xf32> to vector<16x16xf32>
    %527 = vector.broadcast %525 : vector<1x16xf32> to vector<16x16xf32>
    %528 = arith.mulf %526, %527 : vector<16x16xf32>
    %529 = arith.addf %523, %528 : vector<16x16xf32>
    %530 = vector.extract_strided_slice %4 {offsets = [0, 7], sizes = [16, 1], strides = [1, 1]} : vector<16x8xf32> to vector<16x1xf32>
    %531 = vector.extract_strided_slice %486 {offsets = [7, 0], sizes = [1, 16], strides = [1, 1]} : vector<8x16xf32> to vector<1x16xf32>
    %532 = vector.broadcast %530 : vector<16x1xf32> to vector<16x16xf32>
    %533 = vector.broadcast %531 : vector<1x16xf32> to vector<16x16xf32>
    %534 = arith.mulf %532, %533 : vector<16x16xf32>
    %535 = arith.addf %529, %534 : vector<16x16xf32>
    %cst_43 = arith.constant 0.000000e+00 : f32
    %536 = vector.broadcast %cst_43 : f32 to vector<16x16xf32>
    %537 = arith.cmpf ogt, %535, %536 : vector<16x16xf32>
    %cst_44 = arith.constant 1.000000e-01 : f32
    %538 = vector.broadcast %cst_44 : f32 to vector<16x16xf32>
    %539 = arith.mulf %538, %535 : vector<16x16xf32>
    %540 = arith.select %537, %535, %539 : vector<16x16xi1>, vector<16x16xf32>
    %541 = vector.extract_strided_slice %456 {offsets = [0, 0], sizes = [1, 16], strides = [1, 1]} : vector<7x16xf32> to vector<1x16xf32>
    %542 = vector.broadcast %541 : vector<1x16xf32> to vector<16x16xf32>
    %543 = arith.mulf %542, %540 : vector<16x16xf32>
    %544 = arith.addf %430, %543 : vector<16x16xf32>
    %545 = vector.extract_strided_slice %456 {offsets = [1, 0], sizes = [1, 16], strides = [1, 1]} : vector<7x16xf32> to vector<1x16xf32>
    %546 = vector.broadcast %545 : vector<1x16xf32> to vector<16x16xf32>
    %547 = arith.mulf %546, %540 : vector<16x16xf32>
    %548 = arith.addf %434, %547 : vector<16x16xf32>
    %549 = vector.extract_strided_slice %456 {offsets = [2, 0], sizes = [1, 16], strides = [1, 1]} : vector<7x16xf32> to vector<1x16xf32>
    %550 = vector.broadcast %549 : vector<1x16xf32> to vector<16x16xf32>
    %551 = arith.mulf %550, %540 : vector<16x16xf32>
    %552 = arith.addf %438, %551 : vector<16x16xf32>
    %553 = vector.extract_strided_slice %456 {offsets = [3, 0], sizes = [1, 16], strides = [1, 1]} : vector<7x16xf32> to vector<1x16xf32>
    %554 = vector.broadcast %553 : vector<1x16xf32> to vector<16x16xf32>
    %555 = arith.mulf %554, %540 : vector<16x16xf32>
    %556 = arith.addf %442, %555 : vector<16x16xf32>
    %557 = vector.extract_strided_slice %456 {offsets = [4, 0], sizes = [1, 16], strides = [1, 1]} : vector<7x16xf32> to vector<1x16xf32>
    %558 = vector.broadcast %557 : vector<1x16xf32> to vector<16x16xf32>
    %559 = arith.mulf %558, %540 : vector<16x16xf32>
    %560 = arith.addf %446, %559 : vector<16x16xf32>
    %561 = vector.extract_strided_slice %456 {offsets = [5, 0], sizes = [1, 16], strides = [1, 1]} : vector<7x16xf32> to vector<1x16xf32>
    %562 = vector.broadcast %561 : vector<1x16xf32> to vector<16x16xf32>
    %563 = arith.mulf %562, %540 : vector<16x16xf32>
    %564 = arith.addf %450, %563 : vector<16x16xf32>
    %565 = vector.extract_strided_slice %456 {offsets = [6, 0], sizes = [1, 16], strides = [1, 1]} : vector<7x16xf32> to vector<1x16xf32>
    %566 = vector.broadcast %565 : vector<1x16xf32> to vector<16x16xf32>
    %567 = arith.mulf %566, %540 : vector<16x16xf32>
    %568 = arith.addf %454, %567 : vector<16x16xf32>
    %c0_45 = arith.constant 0 : index
    %c5 = arith.constant 5 : index
    %c0_46 = arith.constant 0 : index
    %c0_47 = arith.constant 0 : index
    %569 = vector.load %arg3[%c0_45, %c5, %c0_46, %c0_47] : memref<1x8x7x16xf32, #tpu.memory_space<vmem>>, vector<1x1x7x16xf32>
    %570 = vector.shape_cast %569 : vector<1x1x7x16xf32> to vector<7x16xf32>
    %571 = vector.extract_strided_slice %2 {offsets = [0, 0], sizes = [8, 1], strides = [1, 1]} : vector<8x3xf32> to vector<8x1xf32>
    %572 = vector.extract_strided_slice %570 {offsets = [0, 0], sizes = [1, 16], strides = [1, 1]} : vector<7x16xf32> to vector<1x16xf32>
    %573 = vector.extract_strided_slice %1 {offsets = [0, 0], sizes = [1, 16], strides = [1, 1]} : vector<3x16xf32> to vector<1x16xf32>
    %574 = arith.subf %572, %573 : vector<1x16xf32>
    %575 = vector.broadcast %571 : vector<8x1xf32> to vector<8x16xf32>
    %576 = vector.broadcast %574 : vector<1x16xf32> to vector<8x16xf32>
    %577 = arith.mulf %575, %576 : vector<8x16xf32>
    %578 = vector.broadcast %3 : vector<8x1xf32> to vector<8x16xf32>
    %579 = arith.addf %578, %577 : vector<8x16xf32>
    %580 = vector.extract_strided_slice %2 {offsets = [0, 1], sizes = [8, 1], strides = [1, 1]} : vector<8x3xf32> to vector<8x1xf32>
    %581 = vector.extract_strided_slice %570 {offsets = [1, 0], sizes = [1, 16], strides = [1, 1]} : vector<7x16xf32> to vector<1x16xf32>
    %582 = vector.extract_strided_slice %1 {offsets = [1, 0], sizes = [1, 16], strides = [1, 1]} : vector<3x16xf32> to vector<1x16xf32>
    %583 = arith.subf %581, %582 : vector<1x16xf32>
    %584 = vector.broadcast %580 : vector<8x1xf32> to vector<8x16xf32>
    %585 = vector.broadcast %583 : vector<1x16xf32> to vector<8x16xf32>
    %586 = arith.mulf %584, %585 : vector<8x16xf32>
    %587 = arith.addf %579, %586 : vector<8x16xf32>
    %588 = vector.extract_strided_slice %2 {offsets = [0, 2], sizes = [8, 1], strides = [1, 1]} : vector<8x3xf32> to vector<8x1xf32>
    %589 = vector.extract_strided_slice %570 {offsets = [2, 0], sizes = [1, 16], strides = [1, 1]} : vector<7x16xf32> to vector<1x16xf32>
    %590 = vector.extract_strided_slice %1 {offsets = [2, 0], sizes = [1, 16], strides = [1, 1]} : vector<3x16xf32> to vector<1x16xf32>
    %591 = arith.subf %589, %590 : vector<1x16xf32>
    %592 = vector.broadcast %588 : vector<8x1xf32> to vector<8x16xf32>
    %593 = vector.broadcast %591 : vector<1x16xf32> to vector<8x16xf32>
    %594 = arith.mulf %592, %593 : vector<8x16xf32>
    %595 = arith.addf %587, %594 : vector<8x16xf32>
    %cst_48 = arith.constant 0.000000e+00 : f32
    %596 = vector.broadcast %cst_48 : f32 to vector<8x16xf32>
    %597 = arith.cmpf ogt, %595, %596 : vector<8x16xf32>
    %cst_49 = arith.constant 1.000000e-01 : f32
    %598 = vector.broadcast %cst_49 : f32 to vector<8x16xf32>
    %599 = arith.mulf %598, %595 : vector<8x16xf32>
    %600 = arith.select %597, %595, %599 : vector<8x16xi1>, vector<8x16xf32>
    %601 = vector.extract_strided_slice %4 {offsets = [0, 0], sizes = [16, 1], strides = [1, 1]} : vector<16x8xf32> to vector<16x1xf32>
    %602 = vector.extract_strided_slice %600 {offsets = [0, 0], sizes = [1, 16], strides = [1, 1]} : vector<8x16xf32> to vector<1x16xf32>
    %603 = vector.broadcast %601 : vector<16x1xf32> to vector<16x16xf32>
    %604 = vector.broadcast %602 : vector<1x16xf32> to vector<16x16xf32>
    %605 = arith.mulf %603, %604 : vector<16x16xf32>
    %606 = vector.broadcast %5 : vector<16x1xf32> to vector<16x16xf32>
    %607 = arith.addf %606, %605 : vector<16x16xf32>
    %608 = vector.extract_strided_slice %4 {offsets = [0, 1], sizes = [16, 1], strides = [1, 1]} : vector<16x8xf32> to vector<16x1xf32>
    %609 = vector.extract_strided_slice %600 {offsets = [1, 0], sizes = [1, 16], strides = [1, 1]} : vector<8x16xf32> to vector<1x16xf32>
    %610 = vector.broadcast %608 : vector<16x1xf32> to vector<16x16xf32>
    %611 = vector.broadcast %609 : vector<1x16xf32> to vector<16x16xf32>
    %612 = arith.mulf %610, %611 : vector<16x16xf32>
    %613 = arith.addf %607, %612 : vector<16x16xf32>
    %614 = vector.extract_strided_slice %4 {offsets = [0, 2], sizes = [16, 1], strides = [1, 1]} : vector<16x8xf32> to vector<16x1xf32>
    %615 = vector.extract_strided_slice %600 {offsets = [2, 0], sizes = [1, 16], strides = [1, 1]} : vector<8x16xf32> to vector<1x16xf32>
    %616 = vector.broadcast %614 : vector<16x1xf32> to vector<16x16xf32>
    %617 = vector.broadcast %615 : vector<1x16xf32> to vector<16x16xf32>
    %618 = arith.mulf %616, %617 : vector<16x16xf32>
    %619 = arith.addf %613, %618 : vector<16x16xf32>
    %620 = vector.extract_strided_slice %4 {offsets = [0, 3], sizes = [16, 1], strides = [1, 1]} : vector<16x8xf32> to vector<16x1xf32>
    %621 = vector.extract_strided_slice %600 {offsets = [3, 0], sizes = [1, 16], strides = [1, 1]} : vector<8x16xf32> to vector<1x16xf32>
    %622 = vector.broadcast %620 : vector<16x1xf32> to vector<16x16xf32>
    %623 = vector.broadcast %621 : vector<1x16xf32> to vector<16x16xf32>
    %624 = arith.mulf %622, %623 : vector<16x16xf32>
    %625 = arith.addf %619, %624 : vector<16x16xf32>
    %626 = vector.extract_strided_slice %4 {offsets = [0, 4], sizes = [16, 1], strides = [1, 1]} : vector<16x8xf32> to vector<16x1xf32>
    %627 = vector.extract_strided_slice %600 {offsets = [4, 0], sizes = [1, 16], strides = [1, 1]} : vector<8x16xf32> to vector<1x16xf32>
    %628 = vector.broadcast %626 : vector<16x1xf32> to vector<16x16xf32>
    %629 = vector.broadcast %627 : vector<1x16xf32> to vector<16x16xf32>
    %630 = arith.mulf %628, %629 : vector<16x16xf32>
    %631 = arith.addf %625, %630 : vector<16x16xf32>
    %632 = vector.extract_strided_slice %4 {offsets = [0, 5], sizes = [16, 1], strides = [1, 1]} : vector<16x8xf32> to vector<16x1xf32>
    %633 = vector.extract_strided_slice %600 {offsets = [5, 0], sizes = [1, 16], strides = [1, 1]} : vector<8x16xf32> to vector<1x16xf32>
    %634 = vector.broadcast %632 : vector<16x1xf32> to vector<16x16xf32>
    %635 = vector.broadcast %633 : vector<1x16xf32> to vector<16x16xf32>
    %636 = arith.mulf %634, %635 : vector<16x16xf32>
    %637 = arith.addf %631, %636 : vector<16x16xf32>
    %638 = vector.extract_strided_slice %4 {offsets = [0, 6], sizes = [16, 1], strides = [1, 1]} : vector<16x8xf32> to vector<16x1xf32>
    %639 = vector.extract_strided_slice %600 {offsets = [6, 0], sizes = [1, 16], strides = [1, 1]} : vector<8x16xf32> to vector<1x16xf32>
    %640 = vector.broadcast %638 : vector<16x1xf32> to vector<16x16xf32>
    %641 = vector.broadcast %639 : vector<1x16xf32> to vector<16x16xf32>
    %642 = arith.mulf %640, %641 : vector<16x16xf32>
    %643 = arith.addf %637, %642 : vector<16x16xf32>
    %644 = vector.extract_strided_slice %4 {offsets = [0, 7], sizes = [16, 1], strides = [1, 1]} : vector<16x8xf32> to vector<16x1xf32>
    %645 = vector.extract_strided_slice %600 {offsets = [7, 0], sizes = [1, 16], strides = [1, 1]} : vector<8x16xf32> to vector<1x16xf32>
    %646 = vector.broadcast %644 : vector<16x1xf32> to vector<16x16xf32>
    %647 = vector.broadcast %645 : vector<1x16xf32> to vector<16x16xf32>
    %648 = arith.mulf %646, %647 : vector<16x16xf32>
    %649 = arith.addf %643, %648 : vector<16x16xf32>
    %cst_50 = arith.constant 0.000000e+00 : f32
    %650 = vector.broadcast %cst_50 : f32 to vector<16x16xf32>
    %651 = arith.cmpf ogt, %649, %650 : vector<16x16xf32>
    %cst_51 = arith.constant 1.000000e-01 : f32
    %652 = vector.broadcast %cst_51 : f32 to vector<16x16xf32>
    %653 = arith.mulf %652, %649 : vector<16x16xf32>
    %654 = arith.select %651, %649, %653 : vector<16x16xi1>, vector<16x16xf32>
    %655 = vector.extract_strided_slice %570 {offsets = [0, 0], sizes = [1, 16], strides = [1, 1]} : vector<7x16xf32> to vector<1x16xf32>
    %656 = vector.broadcast %655 : vector<1x16xf32> to vector<16x16xf32>
    %657 = arith.mulf %656, %654 : vector<16x16xf32>
    %658 = arith.addf %544, %657 : vector<16x16xf32>
    %659 = vector.extract_strided_slice %570 {offsets = [1, 0], sizes = [1, 16], strides = [1, 1]} : vector<7x16xf32> to vector<1x16xf32>
    %660 = vector.broadcast %659 : vector<1x16xf32> to vector<16x16xf32>
    %661 = arith.mulf %660, %654 : vector<16x16xf32>
    %662 = arith.addf %548, %661 : vector<16x16xf32>
    %663 = vector.extract_strided_slice %570 {offsets = [2, 0], sizes = [1, 16], strides = [1, 1]} : vector<7x16xf32> to vector<1x16xf32>
    %664 = vector.broadcast %663 : vector<1x16xf32> to vector<16x16xf32>
    %665 = arith.mulf %664, %654 : vector<16x16xf32>
    %666 = arith.addf %552, %665 : vector<16x16xf32>
    %667 = vector.extract_strided_slice %570 {offsets = [3, 0], sizes = [1, 16], strides = [1, 1]} : vector<7x16xf32> to vector<1x16xf32>
    %668 = vector.broadcast %667 : vector<1x16xf32> to vector<16x16xf32>
    %669 = arith.mulf %668, %654 : vector<16x16xf32>
    %670 = arith.addf %556, %669 : vector<16x16xf32>
    %671 = vector.extract_strided_slice %570 {offsets = [4, 0], sizes = [1, 16], strides = [1, 1]} : vector<7x16xf32> to vector<1x16xf32>
    %672 = vector.broadcast %671 : vector<1x16xf32> to vector<16x16xf32>
    %673 = arith.mulf %672, %654 : vector<16x16xf32>
    %674 = arith.addf %560, %673 : vector<16x16xf32>
    %675 = vector.extract_strided_slice %570 {offsets = [5, 0], sizes = [1, 16], strides = [1, 1]} : vector<7x16xf32> to vector<1x16xf32>
    %676 = vector.broadcast %675 : vector<1x16xf32> to vector<16x16xf32>
    %677 = arith.mulf %676, %654 : vector<16x16xf32>
    %678 = arith.addf %564, %677 : vector<16x16xf32>
    %679 = vector.extract_strided_slice %570 {offsets = [6, 0], sizes = [1, 16], strides = [1, 1]} : vector<7x16xf32> to vector<1x16xf32>
    %680 = vector.broadcast %679 : vector<1x16xf32> to vector<16x16xf32>
    %681 = arith.mulf %680, %654 : vector<16x16xf32>
    %682 = arith.addf %568, %681 : vector<16x16xf32>
    %c0_52 = arith.constant 0 : index
    %c6 = arith.constant 6 : index
    %c0_53 = arith.constant 0 : index
    %c0_54 = arith.constant 0 : index
    %683 = vector.load %arg3[%c0_52, %c6, %c0_53, %c0_54] : memref<1x8x7x16xf32, #tpu.memory_space<vmem>>, vector<1x1x7x16xf32>
    %684 = vector.shape_cast %683 : vector<1x1x7x16xf32> to vector<7x16xf32>
    %685 = vector.extract_strided_slice %2 {offsets = [0, 0], sizes = [8, 1], strides = [1, 1]} : vector<8x3xf32> to vector<8x1xf32>
    %686 = vector.extract_strided_slice %684 {offsets = [0, 0], sizes = [1, 16], strides = [1, 1]} : vector<7x16xf32> to vector<1x16xf32>
    %687 = vector.extract_strided_slice %1 {offsets = [0, 0], sizes = [1, 16], strides = [1, 1]} : vector<3x16xf32> to vector<1x16xf32>
    %688 = arith.subf %686, %687 : vector<1x16xf32>
    %689 = vector.broadcast %685 : vector<8x1xf32> to vector<8x16xf32>
    %690 = vector.broadcast %688 : vector<1x16xf32> to vector<8x16xf32>
    %691 = arith.mulf %689, %690 : vector<8x16xf32>
    %692 = vector.broadcast %3 : vector<8x1xf32> to vector<8x16xf32>
    %693 = arith.addf %692, %691 : vector<8x16xf32>
    %694 = vector.extract_strided_slice %2 {offsets = [0, 1], sizes = [8, 1], strides = [1, 1]} : vector<8x3xf32> to vector<8x1xf32>
    %695 = vector.extract_strided_slice %684 {offsets = [1, 0], sizes = [1, 16], strides = [1, 1]} : vector<7x16xf32> to vector<1x16xf32>
    %696 = vector.extract_strided_slice %1 {offsets = [1, 0], sizes = [1, 16], strides = [1, 1]} : vector<3x16xf32> to vector<1x16xf32>
    %697 = arith.subf %695, %696 : vector<1x16xf32>
    %698 = vector.broadcast %694 : vector<8x1xf32> to vector<8x16xf32>
    %699 = vector.broadcast %697 : vector<1x16xf32> to vector<8x16xf32>
    %700 = arith.mulf %698, %699 : vector<8x16xf32>
    %701 = arith.addf %693, %700 : vector<8x16xf32>
    %702 = vector.extract_strided_slice %2 {offsets = [0, 2], sizes = [8, 1], strides = [1, 1]} : vector<8x3xf32> to vector<8x1xf32>
    %703 = vector.extract_strided_slice %684 {offsets = [2, 0], sizes = [1, 16], strides = [1, 1]} : vector<7x16xf32> to vector<1x16xf32>
    %704 = vector.extract_strided_slice %1 {offsets = [2, 0], sizes = [1, 16], strides = [1, 1]} : vector<3x16xf32> to vector<1x16xf32>
    %705 = arith.subf %703, %704 : vector<1x16xf32>
    %706 = vector.broadcast %702 : vector<8x1xf32> to vector<8x16xf32>
    %707 = vector.broadcast %705 : vector<1x16xf32> to vector<8x16xf32>
    %708 = arith.mulf %706, %707 : vector<8x16xf32>
    %709 = arith.addf %701, %708 : vector<8x16xf32>
    %cst_55 = arith.constant 0.000000e+00 : f32
    %710 = vector.broadcast %cst_55 : f32 to vector<8x16xf32>
    %711 = arith.cmpf ogt, %709, %710 : vector<8x16xf32>
    %cst_56 = arith.constant 1.000000e-01 : f32
    %712 = vector.broadcast %cst_56 : f32 to vector<8x16xf32>
    %713 = arith.mulf %712, %709 : vector<8x16xf32>
    %714 = arith.select %711, %709, %713 : vector<8x16xi1>, vector<8x16xf32>
    %715 = vector.extract_strided_slice %4 {offsets = [0, 0], sizes = [16, 1], strides = [1, 1]} : vector<16x8xf32> to vector<16x1xf32>
    %716 = vector.extract_strided_slice %714 {offsets = [0, 0], sizes = [1, 16], strides = [1, 1]} : vector<8x16xf32> to vector<1x16xf32>
    %717 = vector.broadcast %715 : vector<16x1xf32> to vector<16x16xf32>
    %718 = vector.broadcast %716 : vector<1x16xf32> to vector<16x16xf32>
    %719 = arith.mulf %717, %718 : vector<16x16xf32>
    %720 = vector.broadcast %5 : vector<16x1xf32> to vector<16x16xf32>
    %721 = arith.addf %720, %719 : vector<16x16xf32>
    %722 = vector.extract_strided_slice %4 {offsets = [0, 1], sizes = [16, 1], strides = [1, 1]} : vector<16x8xf32> to vector<16x1xf32>
    %723 = vector.extract_strided_slice %714 {offsets = [1, 0], sizes = [1, 16], strides = [1, 1]} : vector<8x16xf32> to vector<1x16xf32>
    %724 = vector.broadcast %722 : vector<16x1xf32> to vector<16x16xf32>
    %725 = vector.broadcast %723 : vector<1x16xf32> to vector<16x16xf32>
    %726 = arith.mulf %724, %725 : vector<16x16xf32>
    %727 = arith.addf %721, %726 : vector<16x16xf32>
    %728 = vector.extract_strided_slice %4 {offsets = [0, 2], sizes = [16, 1], strides = [1, 1]} : vector<16x8xf32> to vector<16x1xf32>
    %729 = vector.extract_strided_slice %714 {offsets = [2, 0], sizes = [1, 16], strides = [1, 1]} : vector<8x16xf32> to vector<1x16xf32>
    %730 = vector.broadcast %728 : vector<16x1xf32> to vector<16x16xf32>
    %731 = vector.broadcast %729 : vector<1x16xf32> to vector<16x16xf32>
    %732 = arith.mulf %730, %731 : vector<16x16xf32>
    %733 = arith.addf %727, %732 : vector<16x16xf32>
    %734 = vector.extract_strided_slice %4 {offsets = [0, 3], sizes = [16, 1], strides = [1, 1]} : vector<16x8xf32> to vector<16x1xf32>
    %735 = vector.extract_strided_slice %714 {offsets = [3, 0], sizes = [1, 16], strides = [1, 1]} : vector<8x16xf32> to vector<1x16xf32>
    %736 = vector.broadcast %734 : vector<16x1xf32> to vector<16x16xf32>
    %737 = vector.broadcast %735 : vector<1x16xf32> to vector<16x16xf32>
    %738 = arith.mulf %736, %737 : vector<16x16xf32>
    %739 = arith.addf %733, %738 : vector<16x16xf32>
    %740 = vector.extract_strided_slice %4 {offsets = [0, 4], sizes = [16, 1], strides = [1, 1]} : vector<16x8xf32> to vector<16x1xf32>
    %741 = vector.extract_strided_slice %714 {offsets = [4, 0], sizes = [1, 16], strides = [1, 1]} : vector<8x16xf32> to vector<1x16xf32>
    %742 = vector.broadcast %740 : vector<16x1xf32> to vector<16x16xf32>
    %743 = vector.broadcast %741 : vector<1x16xf32> to vector<16x16xf32>
    %744 = arith.mulf %742, %743 : vector<16x16xf32>
    %745 = arith.addf %739, %744 : vector<16x16xf32>
    %746 = vector.extract_strided_slice %4 {offsets = [0, 5], sizes = [16, 1], strides = [1, 1]} : vector<16x8xf32> to vector<16x1xf32>
    %747 = vector.extract_strided_slice %714 {offsets = [5, 0], sizes = [1, 16], strides = [1, 1]} : vector<8x16xf32> to vector<1x16xf32>
    %748 = vector.broadcast %746 : vector<16x1xf32> to vector<16x16xf32>
    %749 = vector.broadcast %747 : vector<1x16xf32> to vector<16x16xf32>
    %750 = arith.mulf %748, %749 : vector<16x16xf32>
    %751 = arith.addf %745, %750 : vector<16x16xf32>
    %752 = vector.extract_strided_slice %4 {offsets = [0, 6], sizes = [16, 1], strides = [1, 1]} : vector<16x8xf32> to vector<16x1xf32>
    %753 = vector.extract_strided_slice %714 {offsets = [6, 0], sizes = [1, 16], strides = [1, 1]} : vector<8x16xf32> to vector<1x16xf32>
    %754 = vector.broadcast %752 : vector<16x1xf32> to vector<16x16xf32>
    %755 = vector.broadcast %753 : vector<1x16xf32> to vector<16x16xf32>
    %756 = arith.mulf %754, %755 : vector<16x16xf32>
    %757 = arith.addf %751, %756 : vector<16x16xf32>
    %758 = vector.extract_strided_slice %4 {offsets = [0, 7], sizes = [16, 1], strides = [1, 1]} : vector<16x8xf32> to vector<16x1xf32>
    %759 = vector.extract_strided_slice %714 {offsets = [7, 0], sizes = [1, 16], strides = [1, 1]} : vector<8x16xf32> to vector<1x16xf32>
    %760 = vector.broadcast %758 : vector<16x1xf32> to vector<16x16xf32>
    %761 = vector.broadcast %759 : vector<1x16xf32> to vector<16x16xf32>
    %762 = arith.mulf %760, %761 : vector<16x16xf32>
    %763 = arith.addf %757, %762 : vector<16x16xf32>
    %cst_57 = arith.constant 0.000000e+00 : f32
    %764 = vector.broadcast %cst_57 : f32 to vector<16x16xf32>
    %765 = arith.cmpf ogt, %763, %764 : vector<16x16xf32>
    %cst_58 = arith.constant 1.000000e-01 : f32
    %766 = vector.broadcast %cst_58 : f32 to vector<16x16xf32>
    %767 = arith.mulf %766, %763 : vector<16x16xf32>
    %768 = arith.select %765, %763, %767 : vector<16x16xi1>, vector<16x16xf32>
    %769 = vector.extract_strided_slice %684 {offsets = [0, 0], sizes = [1, 16], strides = [1, 1]} : vector<7x16xf32> to vector<1x16xf32>
    %770 = vector.broadcast %769 : vector<1x16xf32> to vector<16x16xf32>
    %771 = arith.mulf %770, %768 : vector<16x16xf32>
    %772 = arith.addf %658, %771 : vector<16x16xf32>
    %773 = vector.extract_strided_slice %684 {offsets = [1, 0], sizes = [1, 16], strides = [1, 1]} : vector<7x16xf32> to vector<1x16xf32>
    %774 = vector.broadcast %773 : vector<1x16xf32> to vector<16x16xf32>
    %775 = arith.mulf %774, %768 : vector<16x16xf32>
    %776 = arith.addf %662, %775 : vector<16x16xf32>
    %777 = vector.extract_strided_slice %684 {offsets = [2, 0], sizes = [1, 16], strides = [1, 1]} : vector<7x16xf32> to vector<1x16xf32>
    %778 = vector.broadcast %777 : vector<1x16xf32> to vector<16x16xf32>
    %779 = arith.mulf %778, %768 : vector<16x16xf32>
    %780 = arith.addf %666, %779 : vector<16x16xf32>
    %781 = vector.extract_strided_slice %684 {offsets = [3, 0], sizes = [1, 16], strides = [1, 1]} : vector<7x16xf32> to vector<1x16xf32>
    %782 = vector.broadcast %781 : vector<1x16xf32> to vector<16x16xf32>
    %783 = arith.mulf %782, %768 : vector<16x16xf32>
    %784 = arith.addf %670, %783 : vector<16x16xf32>
    %785 = vector.extract_strided_slice %684 {offsets = [4, 0], sizes = [1, 16], strides = [1, 1]} : vector<7x16xf32> to vector<1x16xf32>
    %786 = vector.broadcast %785 : vector<1x16xf32> to vector<16x16xf32>
    %787 = arith.mulf %786, %768 : vector<16x16xf32>
    %788 = arith.addf %674, %787 : vector<16x16xf32>
    %789 = vector.extract_strided_slice %684 {offsets = [5, 0], sizes = [1, 16], strides = [1, 1]} : vector<7x16xf32> to vector<1x16xf32>
    %790 = vector.broadcast %789 : vector<1x16xf32> to vector<16x16xf32>
    %791 = arith.mulf %790, %768 : vector<16x16xf32>
    %792 = arith.addf %678, %791 : vector<16x16xf32>
    %793 = vector.extract_strided_slice %684 {offsets = [6, 0], sizes = [1, 16], strides = [1, 1]} : vector<7x16xf32> to vector<1x16xf32>
    %794 = vector.broadcast %793 : vector<1x16xf32> to vector<16x16xf32>
    %795 = arith.mulf %794, %768 : vector<16x16xf32>
    %796 = arith.addf %682, %795 : vector<16x16xf32>
    %c0_59 = arith.constant 0 : index
    %c7 = arith.constant 7 : index
    %c0_60 = arith.constant 0 : index
    %c0_61 = arith.constant 0 : index
    %797 = vector.load %arg3[%c0_59, %c7, %c0_60, %c0_61] : memref<1x8x7x16xf32, #tpu.memory_space<vmem>>, vector<1x1x7x16xf32>
    %798 = vector.shape_cast %797 : vector<1x1x7x16xf32> to vector<7x16xf32>
    %799 = vector.extract_strided_slice %2 {offsets = [0, 0], sizes = [8, 1], strides = [1, 1]} : vector<8x3xf32> to vector<8x1xf32>
    %800 = vector.extract_strided_slice %798 {offsets = [0, 0], sizes = [1, 16], strides = [1, 1]} : vector<7x16xf32> to vector<1x16xf32>
    %801 = vector.extract_strided_slice %1 {offsets = [0, 0], sizes = [1, 16], strides = [1, 1]} : vector<3x16xf32> to vector<1x16xf32>
    %802 = arith.subf %800, %801 : vector<1x16xf32>
    %803 = vector.broadcast %799 : vector<8x1xf32> to vector<8x16xf32>
    %804 = vector.broadcast %802 : vector<1x16xf32> to vector<8x16xf32>
    %805 = arith.mulf %803, %804 : vector<8x16xf32>
    %806 = vector.broadcast %3 : vector<8x1xf32> to vector<8x16xf32>
    %807 = arith.addf %806, %805 : vector<8x16xf32>
    %808 = vector.extract_strided_slice %2 {offsets = [0, 1], sizes = [8, 1], strides = [1, 1]} : vector<8x3xf32> to vector<8x1xf32>
    %809 = vector.extract_strided_slice %798 {offsets = [1, 0], sizes = [1, 16], strides = [1, 1]} : vector<7x16xf32> to vector<1x16xf32>
    %810 = vector.extract_strided_slice %1 {offsets = [1, 0], sizes = [1, 16], strides = [1, 1]} : vector<3x16xf32> to vector<1x16xf32>
    %811 = arith.subf %809, %810 : vector<1x16xf32>
    %812 = vector.broadcast %808 : vector<8x1xf32> to vector<8x16xf32>
    %813 = vector.broadcast %811 : vector<1x16xf32> to vector<8x16xf32>
    %814 = arith.mulf %812, %813 : vector<8x16xf32>
    %815 = arith.addf %807, %814 : vector<8x16xf32>
    %816 = vector.extract_strided_slice %2 {offsets = [0, 2], sizes = [8, 1], strides = [1, 1]} : vector<8x3xf32> to vector<8x1xf32>
    %817 = vector.extract_strided_slice %798 {offsets = [2, 0], sizes = [1, 16], strides = [1, 1]} : vector<7x16xf32> to vector<1x16xf32>
    %818 = vector.extract_strided_slice %1 {offsets = [2, 0], sizes = [1, 16], strides = [1, 1]} : vector<3x16xf32> to vector<1x16xf32>
    %819 = arith.subf %817, %818 : vector<1x16xf32>
    %820 = vector.broadcast %816 : vector<8x1xf32> to vector<8x16xf32>
    %821 = vector.broadcast %819 : vector<1x16xf32> to vector<8x16xf32>
    %822 = arith.mulf %820, %821 : vector<8x16xf32>
    %823 = arith.addf %815, %822 : vector<8x16xf32>
    %cst_62 = arith.constant 0.000000e+00 : f32
    %824 = vector.broadcast %cst_62 : f32 to vector<8x16xf32>
    %825 = arith.cmpf ogt, %823, %824 : vector<8x16xf32>
    %cst_63 = arith.constant 1.000000e-01 : f32
    %826 = vector.broadcast %cst_63 : f32 to vector<8x16xf32>
    %827 = arith.mulf %826, %823 : vector<8x16xf32>
    %828 = arith.select %825, %823, %827 : vector<8x16xi1>, vector<8x16xf32>
    %829 = vector.extract_strided_slice %4 {offsets = [0, 0], sizes = [16, 1], strides = [1, 1]} : vector<16x8xf32> to vector<16x1xf32>
    %830 = vector.extract_strided_slice %828 {offsets = [0, 0], sizes = [1, 16], strides = [1, 1]} : vector<8x16xf32> to vector<1x16xf32>
    %831 = vector.broadcast %829 : vector<16x1xf32> to vector<16x16xf32>
    %832 = vector.broadcast %830 : vector<1x16xf32> to vector<16x16xf32>
    %833 = arith.mulf %831, %832 : vector<16x16xf32>
    %834 = vector.broadcast %5 : vector<16x1xf32> to vector<16x16xf32>
    %835 = arith.addf %834, %833 : vector<16x16xf32>
    %836 = vector.extract_strided_slice %4 {offsets = [0, 1], sizes = [16, 1], strides = [1, 1]} : vector<16x8xf32> to vector<16x1xf32>
    %837 = vector.extract_strided_slice %828 {offsets = [1, 0], sizes = [1, 16], strides = [1, 1]} : vector<8x16xf32> to vector<1x16xf32>
    %838 = vector.broadcast %836 : vector<16x1xf32> to vector<16x16xf32>
    %839 = vector.broadcast %837 : vector<1x16xf32> to vector<16x16xf32>
    %840 = arith.mulf %838, %839 : vector<16x16xf32>
    %841 = arith.addf %835, %840 : vector<16x16xf32>
    %842 = vector.extract_strided_slice %4 {offsets = [0, 2], sizes = [16, 1], strides = [1, 1]} : vector<16x8xf32> to vector<16x1xf32>
    %843 = vector.extract_strided_slice %828 {offsets = [2, 0], sizes = [1, 16], strides = [1, 1]} : vector<8x16xf32> to vector<1x16xf32>
    %844 = vector.broadcast %842 : vector<16x1xf32> to vector<16x16xf32>
    %845 = vector.broadcast %843 : vector<1x16xf32> to vector<16x16xf32>
    %846 = arith.mulf %844, %845 : vector<16x16xf32>
    %847 = arith.addf %841, %846 : vector<16x16xf32>
    %848 = vector.extract_strided_slice %4 {offsets = [0, 3], sizes = [16, 1], strides = [1, 1]} : vector<16x8xf32> to vector<16x1xf32>
    %849 = vector.extract_strided_slice %828 {offsets = [3, 0], sizes = [1, 16], strides = [1, 1]} : vector<8x16xf32> to vector<1x16xf32>
    %850 = vector.broadcast %848 : vector<16x1xf32> to vector<16x16xf32>
    %851 = vector.broadcast %849 : vector<1x16xf32> to vector<16x16xf32>
    %852 = arith.mulf %850, %851 : vector<16x16xf32>
    %853 = arith.addf %847, %852 : vector<16x16xf32>
    %854 = vector.extract_strided_slice %4 {offsets = [0, 4], sizes = [16, 1], strides = [1, 1]} : vector<16x8xf32> to vector<16x1xf32>
    %855 = vector.extract_strided_slice %828 {offsets = [4, 0], sizes = [1, 16], strides = [1, 1]} : vector<8x16xf32> to vector<1x16xf32>
    %856 = vector.broadcast %854 : vector<16x1xf32> to vector<16x16xf32>
    %857 = vector.broadcast %855 : vector<1x16xf32> to vector<16x16xf32>
    %858 = arith.mulf %856, %857 : vector<16x16xf32>
    %859 = arith.addf %853, %858 : vector<16x16xf32>
    %860 = vector.extract_strided_slice %4 {offsets = [0, 5], sizes = [16, 1], strides = [1, 1]} : vector<16x8xf32> to vector<16x1xf32>
    %861 = vector.extract_strided_slice %828 {offsets = [5, 0], sizes = [1, 16], strides = [1, 1]} : vector<8x16xf32> to vector<1x16xf32>
    %862 = vector.broadcast %860 : vector<16x1xf32> to vector<16x16xf32>
    %863 = vector.broadcast %861 : vector<1x16xf32> to vector<16x16xf32>
    %864 = arith.mulf %862, %863 : vector<16x16xf32>
    %865 = arith.addf %859, %864 : vector<16x16xf32>
    %866 = vector.extract_strided_slice %4 {offsets = [0, 6], sizes = [16, 1], strides = [1, 1]} : vector<16x8xf32> to vector<16x1xf32>
    %867 = vector.extract_strided_slice %828 {offsets = [6, 0], sizes = [1, 16], strides = [1, 1]} : vector<8x16xf32> to vector<1x16xf32>
    %868 = vector.broadcast %866 : vector<16x1xf32> to vector<16x16xf32>
    %869 = vector.broadcast %867 : vector<1x16xf32> to vector<16x16xf32>
    %870 = arith.mulf %868, %869 : vector<16x16xf32>
    %871 = arith.addf %865, %870 : vector<16x16xf32>
    %872 = vector.extract_strided_slice %4 {offsets = [0, 7], sizes = [16, 1], strides = [1, 1]} : vector<16x8xf32> to vector<16x1xf32>
    %873 = vector.extract_strided_slice %828 {offsets = [7, 0], sizes = [1, 16], strides = [1, 1]} : vector<8x16xf32> to vector<1x16xf32>
    %874 = vector.broadcast %872 : vector<16x1xf32> to vector<16x16xf32>
    %875 = vector.broadcast %873 : vector<1x16xf32> to vector<16x16xf32>
    %876 = arith.mulf %874, %875 : vector<16x16xf32>
    %877 = arith.addf %871, %876 : vector<16x16xf32>
    %cst_64 = arith.constant 0.000000e+00 : f32
    %878 = vector.broadcast %cst_64 : f32 to vector<16x16xf32>
    %879 = arith.cmpf ogt, %877, %878 : vector<16x16xf32>
    %cst_65 = arith.constant 1.000000e-01 : f32
    %880 = vector.broadcast %cst_65 : f32 to vector<16x16xf32>
    %881 = arith.mulf %880, %877 : vector<16x16xf32>
    %882 = arith.select %879, %877, %881 : vector<16x16xi1>, vector<16x16xf32>
    %883 = vector.extract_strided_slice %798 {offsets = [0, 0], sizes = [1, 16], strides = [1, 1]} : vector<7x16xf32> to vector<1x16xf32>
    %884 = vector.broadcast %883 : vector<1x16xf32> to vector<16x16xf32>
    %885 = arith.mulf %884, %882 : vector<16x16xf32>
    %886 = arith.addf %772, %885 : vector<16x16xf32>
    %887 = vector.extract_strided_slice %798 {offsets = [1, 0], sizes = [1, 16], strides = [1, 1]} : vector<7x16xf32> to vector<1x16xf32>
    %888 = vector.broadcast %887 : vector<1x16xf32> to vector<16x16xf32>
    %889 = arith.mulf %888, %882 : vector<16x16xf32>
    %890 = arith.addf %776, %889 : vector<16x16xf32>
    %891 = vector.extract_strided_slice %798 {offsets = [2, 0], sizes = [1, 16], strides = [1, 1]} : vector<7x16xf32> to vector<1x16xf32>
    %892 = vector.broadcast %891 : vector<1x16xf32> to vector<16x16xf32>
    %893 = arith.mulf %892, %882 : vector<16x16xf32>
    %894 = arith.addf %780, %893 : vector<16x16xf32>
    %895 = vector.extract_strided_slice %798 {offsets = [3, 0], sizes = [1, 16], strides = [1, 1]} : vector<7x16xf32> to vector<1x16xf32>
    %896 = vector.broadcast %895 : vector<1x16xf32> to vector<16x16xf32>
    %897 = arith.mulf %896, %882 : vector<16x16xf32>
    %898 = arith.addf %784, %897 : vector<16x16xf32>
    %899 = vector.extract_strided_slice %798 {offsets = [4, 0], sizes = [1, 16], strides = [1, 1]} : vector<7x16xf32> to vector<1x16xf32>
    %900 = vector.broadcast %899 : vector<1x16xf32> to vector<16x16xf32>
    %901 = arith.mulf %900, %882 : vector<16x16xf32>
    %902 = arith.addf %788, %901 : vector<16x16xf32>
    %903 = vector.extract_strided_slice %798 {offsets = [5, 0], sizes = [1, 16], strides = [1, 1]} : vector<7x16xf32> to vector<1x16xf32>
    %904 = vector.broadcast %903 : vector<1x16xf32> to vector<16x16xf32>
    %905 = arith.mulf %904, %882 : vector<16x16xf32>
    %906 = arith.addf %792, %905 : vector<16x16xf32>
    %907 = vector.extract_strided_slice %798 {offsets = [6, 0], sizes = [1, 16], strides = [1, 1]} : vector<7x16xf32> to vector<1x16xf32>
    %908 = vector.broadcast %907 : vector<1x16xf32> to vector<16x16xf32>
    %909 = arith.mulf %908, %882 : vector<16x16xf32>
    %910 = arith.addf %796, %909 : vector<16x16xf32>
    %911 = tpu.concatenate %886, %890, %894, %898, %902, %906, %910 in 0 : vector<16x16xf32>, vector<16x16xf32>, vector<16x16xf32>, vector<16x16xf32>, vector<16x16xf32>, vector<16x16xf32>, vector<16x16xf32> -> vector<112x16xf32>
    %c0_66 = arith.constant 0 : index
    %c0_67 = arith.constant 0 : index
    %912 = vector.load %arg8[%c0_66, %c0_67] : memref<32x112xf32, #tpu.memory_space<vmem>>, vector<32x112xf32>
    %cst_68 = arith.constant dense<0.000000e+00> : vector<32x16xf32>
    %913 = tpu.matmul %912, %911, %cst_68 {dimension_numbers = #tpu.dot_dimension_numbers<[1], [0], [0], [1], [0, 0, 1, 1], [], []>} : vector<32x112xf32>, vector<112x16xf32>, vector<32x16xf32> -> vector<32x16xf32>
    %c0_69 = arith.constant 0 : index
    %c0_70 = arith.constant 0 : index
    %914 = vector.load %arg9[%c0_69, %c0_70] : memref<32x1xf32, #tpu.memory_space<vmem>>, vector<32x1xf32>
    %915 = vector.broadcast %914 : vector<32x1xf32> to vector<32x16xf32>
    %916 = arith.addf %913, %915 : vector<32x16xf32>
    %cst_71 = arith.constant 0.000000e+00 : f32
    %917 = vector.broadcast %cst_71 : f32 to vector<32x16xf32>
    %918 = arith.cmpf ogt, %916, %917 : vector<32x16xf32>
    %cst_72 = arith.constant 1.000000e-01 : f32
    %919 = vector.broadcast %cst_72 : f32 to vector<32x16xf32>
    %920 = arith.mulf %919, %916 : vector<32x16xf32>
    %921 = arith.select %918, %916, %920 : vector<32x16xi1>, vector<32x16xf32>
    %c0_73 = arith.constant 0 : index
    %c0_74 = arith.constant 0 : index
    %c0_75 = arith.constant 0 : index
    %922 = vector.load %arg10[%c0_73, %c0_74, %c0_75] : memref<1x32x16xf32, #tpu.memory_space<vmem>>, vector<1x32x16xf32>
    %923 = vector.shape_cast %922 : vector<1x32x16xf32> to vector<32x16xf32>
    %924 = vector.shape_cast %921 : vector<32x16xf32> to vector<1x32x16xf32>
    tpu.vector_store %arg10[%c0_73, %c0_74, %c0_75], %924 {strides = array<i32>} : memref<1x32x16xf32, #tpu.memory_space<vmem>>, vector<1x32x16xf32>,
    return
  }
  func.func @transform_0(%arg0: i32, %arg1: i32) -> (i32, i32, i32) {
    %c0_i32 = arith.constant 0 : i32
    %c0_i32_0 = arith.constant 0 : i32
    return %arg0, %c0_i32, %arg1 : i32, i32, i32
  }
  func.func @transform_1(%arg0: i32, %arg1: i32) -> (i32, i32, i32, i32) {
    %c0_i32 = arith.constant 0 : i32
    %c0_i32_0 = arith.constant 0 : i32
    %c0_i32_1 = arith.constant 0 : i32
    return %arg0, %c0_i32, %c0_i32_0, %arg1 : i32, i32, i32, i32
  }
  func.func @transform_2(%arg0: i32, %arg1: i32) -> (i32, i32) {
    %c0_i32 = arith.constant 0 : i32
    %c0_i32_0 = arith.constant 0 : i32
    %c0_i32_1 = arith.constant 0 : i32
    return %c0_i32, %c0_i32_0 : i32, i32
  }
  func.func @transform_3(%arg0: i32, %arg1: i32) -> (i32, i32) {
    %c0_i32 = arith.constant 0 : i32
    %c0_i32_0 = arith.constant 0 : i32
    %c0_i32_1 = arith.constant 0 : i32
    return %c0_i32, %c0_i32_0 : i32, i32
  }
  func.func @transform_4(%arg0: i32, %arg1: i32) -> (i32, i32) {
    %c0_i32 = arith.constant 0 : i32
    %c0_i32_0 = arith.constant 0 : i32
    %c0_i32_1 = arith.constant 0 : i32
    return %c0_i32, %c0_i32_0 : i32, i32
  }
  func.func @transform_5(%arg0: i32, %arg1: i32) -> (i32, i32) {
    %c0_i32 = arith.constant 0 : i32
    %c0_i32_0 = arith.constant 0 : i32
    %c0_i32_1 = arith.constant 0 : i32
    return %c0_i32, %c0_i32_0 : i32, i32
  }
  func.func @transform_6(%arg0: i32, %arg1: i32) -> (i32, i32) {
    %c0_i32 = arith.constant 0 : i32
    %c0_i32_0 = arith.constant 0 : i32
    %c0_i32_1 = arith.constant 0 : i32
    return %c0_i32, %c0_i32_0 : i32, i32
  }
  func.func @transform_7(%arg0: i32, %arg1: i32) -> (i32, i32) {
    %c0_i32 = arith.constant 0 : i32
    %c0_i32_0 = arith.constant 0 : i32
    %c0_i32_1 = arith.constant 0 : i32
    return %c0_i32, %c0_i32_0 : i32, i32
  }
  func.func @transform_8(%arg0: i32, %arg1: i32) -> (i32, i32, i32) {
    %c0_i32 = arith.constant 0 : i32
    %c0_i32_0 = arith.constant 0 : i32
    return %arg0, %c0_i32, %arg1 : i32, i32, i32
  }
}

</mosaic_0001>

<llo_original>
// kernel: tpu_custom_call.1
$region0: #{tpu_custom_call.1}
  #allocation0 [shape = 'u32[]', space=smem, size = 0x4, offset = 0x4, fixed_abs, tag = 'smem constant byte address 0x4 - core index']
  #allocation1 [shape = 'u32[144,128]{1,0:T(1,128)}', space=vmem, size = 0x12000, scoped, tag = 'internal scratch']
  %s0 = inlined_call_operand.vmem [shape: f32[2,3,16], index: 0, kind: input, shape index: {}]
  %s1 = inlined_call_operand.vmem [shape: f32[2,8,7,16], index: 1, kind: input, shape index: {}]
  %s2 = inlined_call_operand.vmem [shape: f32[8,3], index: 2, kind: input, shape index: {}]
  %s3 = inlined_call_operand.vmem [shape: f32[8,1], index: 3, kind: input, shape index: {}]
  %s4 = inlined_call_operand.vmem [shape: f32[16,8], index: 4, kind: input, shape index: {}]
  %s5 = inlined_call_operand.vmem [shape: f32[16,1], index: 5, kind: input, shape index: {}]
  %s6 = inlined_call_operand.vmem [shape: f32[32,112], index: 6, kind: input, shape index: {}]
  %s7 = inlined_call_operand.vmem [shape: f32[32,1], index: 7, kind: input, shape index: {}]
  %s8 = inlined_call_operand.vmem [shape: f32[2,32,16], index: 8, kind: output, shape index: {}]
  %s9 = sld [smem:[#allocation0]]
  $region65: #{tpu_custom_call.1} parent=0
    _
  %s11 = ssub.s32 1, %s9
  %s12 = scalar_select 0, %s11, %s9
  loop: start=0, step=1, limit=4
  $region2: #{tpu_custom_call.1} parent=0 // loop_pre_header
    _
  $region3: #{tpu_custom_call.1} parent=0 // loop_header
    %s14 = sphi 0, %s18
    %p15 = scmp.ge.s32.totalorder %s14, 4
    %s21 = sphi 0, %s33
    %s22 = sphi 0, %s29
    %s23 = sphi 0, %s21
    %s24 = sphi 0, %s22
    %s25 = sphi 0, %s23
    %s26 = sphi 0, %s24
    %s38 = sphi 0, %s40
    %s41 = sphi 0, %s38
    %s42 = sphi 0, %s41
    %s58 = sphi 0, %s42
    %s66 = sphi 0, %s68
    %s69 = sphi 0, %s66
    %s70 = sphi 0, %s69
    %s86 = sphi 0, %s70
    %s90 = sphi 0, %s90
    %s92 = sphi 0, %s90
    %s93 = sphi 0, %s92
    %s107 = sphi 0, %s93
    %s111 = sphi 0, %s111
    %s113 = sphi 0, %s111
    %s114 = sphi 0, %s113
    %s128 = sphi 0, %s114
    %s132 = sphi 0, %s132
    %s134 = sphi 0, %s132
    %s135 = sphi 0, %s134
    %s149 = sphi 0, %s135
    %s153 = sphi 0, %s153
    %s155 = sphi 0, %s153
    %s156 = sphi 0, %s155
    %s170 = sphi 0, %s156
    %s174 = sphi 0, %s174
    %s176 = sphi 0, %s174
    %s177 = sphi 0, %s176
    %s191 = sphi 0, %s177
    %s195 = sphi 0, %s195
    %s197 = sphi 0, %s195
    %s198 = sphi 0, %s197
    %s212 = sphi 0, %s198
    %s220 = sphi 0, %s222
    %s223 = sphi 0, %s220
    %s224 = sphi 0, %s223
    %s240 = sphi 0, %s224
  $region4: #{tpu_custom_call.1} parent=0 // loop_header_branch
    %17 = sbr.rel (%p15) target = $region8
  $region5: #{tpu_custom_call.1} parent=0 // loop_body
    %s19 = ssub.s32 %s14, 1
    %s20 = ssub.s32 %s14, 2
    %s27 = sadd.s32 1, %s22
    %p28 = scmp.ge.s32.totalorder %s27, 1
    %s29 = scalar_select %p28, 0, %s27
    %s30 = sadd.s32 1, %s21
    %s31 = scalar_select %p28, %s30, %s21
    %p32 = scmp.ge.s32.totalorder %s31, 2
    %s33 = scalar_select %p32, 0, %s31
    %s34 = ssub.s32 %s21, %s33
    %s35 = ssub.s32 %s22, %s29
    %s36 = sor.u32 %s34, %s35
    %p37 = scmp.eq.s32.totalorder %s36, 0
    %s39 = sadd.s32 %s38, 1
    %s40 = scalar_select %p37, %s38, %s39
    %p43 = pneg %p37
    %p44 = scmp.eq.s32.totalorder %s14, 1
    %p45 = por %p43, %p44
    %p46 = scmp.ne.s32.totalorder %s38, %s41
    %p47 = scmp.eq.s32.totalorder %s14, 0
    %p48 = por %p46, %p47
    %p49 = scmp.ne.s32.totalorder %s38, %s41
    %p50 = scmp.eq.s32.totalorder %s19, 1
    %p51 = por %p49, %p50
    %p52 = scmp.ne.s32.totalorder %s41, %s42
    %p53 = scmp.eq.s32.totalorder %s19, 0
    %p54 = por %p52, %p53
    %p55 = scmp.ne.s32.totalorder %s41, %s42
    %p56 = scmp.eq.s32.totalorder %s20, 1
    %p57 = por %p55, %p56
    %p59 = scmp.ne.s32.totalorder %s42, %s58
    %p60 = scmp.eq.s32.totalorder %s20, 0
    %p61 = por %p59, %p60
    %s62 = ssub.s32 %s21, %s33
    %s63 = ssub.s32 %s22, %s29
    %s64 = sor.u32 %s62, %s63
    %p65 = scmp.eq.s32.totalorder %s64, 0
    %s67 = sadd.s32 %s66, 1
    %s68 = scalar_select %p65, %s66, %s67
    %p71 = pneg %p65
    %p72 = scmp.eq.s32.totalorder %s14, 1
    %p73 = por %p71, %p72
    %p74 = scmp.ne.s32.totalorder %s66, %s69
    %p75 = scmp.eq.s32.totalorder %s14, 0
    %p76 = por %p74, %p75
    %p77 = scmp.ne.s32.totalorder %s66, %s69
    %p78 = scmp.eq.s32.totalorder %s19, 1
    %p79 = por %p77, %p78
    %p80 = scmp.ne.s32.totalorder %s69, %s70
    %p81 = scmp.eq.s32.totalorder %s19, 0
    %p82 = por %p80, %p81
    %p83 = scmp.ne.s32.totalorder %s69, %s70
    %p84 = scmp.eq.s32.totalorder %s20, 1
    %p85 = por %p83, %p84
    %p87 = scmp.ne.s32.totalorder %s70, %s86
    %p88 = scmp.eq.s32.totalorder %s20, 0
    %p89 = por %p87, %p88
    %s91 = sadd.s32 %s90, 1
    %p94 = scmp.eq.s32.totalorder %s14, 1
    %p95 = scmp.ne.s32.totalorder %s90, %s92
    %p96 = scmp.eq.s32.totalorder %s14, 0
    %p97 = por %p95, %p96
    %p98 = scmp.ne.s32.totalorder %s90, %s92
    %p99 = scmp.eq.s32.totalorder %s19, 1
    %p100 = por %p98, %p99
    %p101 = scmp.ne.s32.totalorder %s92, %s93
    %p102 = scmp.eq.s32.totalorder %s19, 0
    %p103 = por %p101, %p102
    %p104 = scmp.ne.s32.totalorder %s92, %s93
    %p105 = scmp.eq.s32.totalorder %s20, 1
    %p106 = por %p104, %p105
    %p108 = scmp.ne.s32.totalorder %s93, %s107
    %p109 = scmp.eq.s32.totalorder %s20, 0
    %p110 = por %p108, %p109
    %s112 = sadd.s32 %s111, 1
    %p115 = scmp.eq.s32.totalorder %s14, 1
    %p116 = scmp.ne.s32.totalorder %s111, %s113
    %p117 = scmp.eq.s32.totalorder %s14, 0
    %p118 = por %p116, %p117
    %p119 = scmp.ne.s32.totalorder %s111, %s113
    %p120 = scmp.eq.s32.totalorder %s19, 1
    %p121 = por %p119, %p120
    %p122 = scmp.ne.s32.totalorder %s113, %s114
    %p123 = scmp.eq.s32.totalorder %s19, 0
    %p124 = por %p122, %p123
    %p125 = scmp.ne.s32.totalorder %s113, %s114
    %p126 = scmp.eq.s32.totalorder %s20, 1
    %p127 = por %p125, %p126
    %p129 = scmp.ne.s32.totalorder %s114, %s128
    %p130 = scmp.eq.s32.totalorder %s20, 0
    %p131 = por %p129, %p130
    %s133 = sadd.s32 %s132, 1
    %p136 = scmp.eq.s32.totalorder %s14, 1
    %p137 = scmp.ne.s32.totalorder %s132, %s134
    %p138 = scmp.eq.s32.totalorder %s14, 0
    %p139 = por %p137, %p138
    %p140 = scmp.ne.s32.totalorder %s132, %s134
    %p141 = scmp.eq.s32.totalorder %s19, 1
    %p142 = por %p140, %p141
    %p143 = scmp.ne.s32.totalorder %s134, %s135
    %p144 = scmp.eq.s32.totalorder %s19, 0
    %p145 = por %p143, %p144
    %p146 = scmp.ne.s32.totalorder %s134, %s135
    %p147 = scmp.eq.s32.totalorder %s20, 1
    %p148 = por %p146, %p147
    %p150 = scmp.ne.s32.totalorder %s135, %s149
    %p151 = scmp.eq.s32.totalorder %s20, 0
    %p152 = por %p150, %p151
    %s154 = sadd.s32 %s153, 1
    %p157 = scmp.eq.s32.totalorder %s14, 1
    %p158 = scmp.ne.s32.totalorder %s153, %s155
    %p159 = scmp.eq.s32.totalorder %s14, 0
    %p160 = por %p158, %p159
    %p161 = scmp.ne.s32.totalorder %s153, %s155
    %p162 = scmp.eq.s32.totalorder %s19, 1
    %p163 = por %p161, %p162
    %p164 = scmp.ne.s32.totalorder %s155, %s156
    %p165 = scmp.eq.s32.totalorder %s19, 0
    %p166 = por %p164, %p165
    %p167 = scmp.ne.s32.totalorder %s155, %s156
    %p168 = scmp.eq.s32.totalorder %s20, 1
    %p169 = por %p167, %p168
    %p171 = scmp.ne.s32.totalorder %s156, %s170
    %p172 = scmp.eq.s32.totalorder %s20, 0
    %p173 = por %p171, %p172
    %s175 = sadd.s32 %s174, 1
    %p178 = scmp.eq.s32.totalorder %s14, 1
    %p179 = scmp.ne.s32.totalorder %s174, %s176
    %p180 = scmp.eq.s32.totalorder %s14, 0
    %p181 = por %p179, %p180
    %p182 = scmp.ne.s32.totalorder %s174, %s176
    %p183 = scmp.eq.s32.totalorder %s19, 1
    %p184 = por %p182, %p183
    %p185 = scmp.ne.s32.totalorder %s176, %s177
    %p186 = scmp.eq.s32.totalorder %s19, 0
    %p187 = por %p185, %p186
    %p188 = scmp.ne.s32.totalorder %s176, %s177
    %p189 = scmp.eq.s32.totalorder %s20, 1
    %p190 = por %p188, %p189
    %p192 = scmp.ne.s32.totalorder %s177, %s191
    %p193 = scmp.eq.s32.totalorder %s20, 0
    %p194 = por %p192, %p193
    %s196 = sadd.s32 %s195, 1
    %p199 = scmp.eq.s32.totalorder %s14, 1
    %p200 = scmp.ne.s32.totalorder %s195, %s197
    %p201 = scmp.eq.s32.totalorder %s14, 0
    %p202 = por %p200, %p201
    %p203 = scmp.ne.s32.totalorder %s195, %s197
    %p204 = scmp.eq.s32.totalorder %s19, 1
    %p205 = por %p203, %p204
    %p206 = scmp.ne.s32.totalorder %s197, %s198
    %p207 = scmp.eq.s32.totalorder %s19, 0
    %p208 = por %p206, %p207
    %p209 = scmp.ne.s32.totalorder %s197, %s198
    %p210 = scmp.eq.s32.totalorder %s20, 1
    %p211 = por %p209, %p210
    %p213 = scmp.ne.s32.totalorder %s198, %s212
    %p214 = scmp.eq.s32.totalorder %s20, 0
    %p215 = por %p213, %p214
    %s216 = ssub.s32 %s21, %s33
    %s217 = ssub.s32 %s22, %s29
    %s218 = sor.u32 %s216, %s217
    %p219 = scmp.eq.s32.totalorder %s218, 0
    %s221 = sadd.s32 %s220, 1
    %s222 = scalar_select %p219, %s220, %s221
    %p225 = pneg %p219
    %p226 = scmp.eq.s32.totalorder %s14, 1
    %p227 = por %p225, %p226
    %p228 = scmp.ne.s32.totalorder %s220, %s223
    %p229 = scmp.eq.s32.totalorder %s14, 0
    %p230 = por %p228, %p229
    %p231 = scmp.ne.s32.totalorder %s220, %s223
    %p232 = scmp.eq.s32.totalorder %s19, 1
    %p233 = por %p231, %p232
    %p234 = scmp.ne.s32.totalorder %s223, %s224
    %p235 = scmp.eq.s32.totalorder %s19, 0
    %p236 = por %p234, %p235
    %p237 = scmp.ne.s32.totalorder %s223, %s224
    %p238 = scmp.eq.s32.totalorder %s20, 1
    %p239 = por %p237, %p238
    %p241 = scmp.ne.s32.totalorder %s224, %s240
    %p242 = scmp.eq.s32.totalorder %s20, 0
    %p243 = por %p241, %p242
    %p244 = scmp.le.s32.totalorder 1, %s14
    %p245 = scmp.lt.s32.totalorder %s14, 3
    %p246 = pnand %p244, %p245
    %p247 = pneg %p246
    // Predicated region
    $region9: #{tpu_custom_call.1} parent=5 // pred_check
      _
    $region10: #{tpu_custom_call.1} parent=5 // pred_check_branch
      %249 = sbr.rel (%p246) target = $region12
    $region11: #{tpu_custom_call.1} parent=5 // pred_region
      %s250 = ssub.s32 %s14, 1
      // Predicated region
      $region13: #{tpu_custom_call.1} parent=11 // pred_check
        %p251 = pneg %p103
      $region14: #{tpu_custom_call.1} parent=11 // pred_check_branch
        %253 = sbr.rel (%p251) target = $region16
      $region15: #{tpu_custom_call.1} parent=11 // pred_region
        _
      $region16: #{tpu_custom_call.1} parent=11 // pred_fallthru
        _
      // Predicated region
      $region17: #{tpu_custom_call.1} parent=11 // pred_check
        %p254 = pneg %p124
      $region18: #{tpu_custom_call.1} parent=11 // pred_check_branch
        %256 = sbr.rel (%p254) target = $region20
      $region19: #{tpu_custom_call.1} parent=11 // pred_region
        _
      $region20: #{tpu_custom_call.1} parent=11 // pred_fallthru
        _
      // Predicated region
      $region21: #{tpu_custom_call.1} parent=11 // pred_check
        %p257 = pneg %p145
      $region22: #{tpu_custom_call.1} parent=11 // pred_check_branch
        %259 = sbr.rel (%p257) target = $region24
      $region23: #{tpu_custom_call.1} parent=11 // pred_region
        _
      $region24: #{tpu_custom_call.1} parent=11 // pred_fallthru
        _
      // Predicated region
      $region25: #{tpu_custom_call.1} parent=11 // pred_check
        %p260 = pneg %p166
      $region26: #{tpu_custom_call.1} parent=11 // pred_check_branch
        %262 = sbr.rel (%p260) target = $region28
      $region27: #{tpu_custom_call.1} parent=11 // pred_region
        _
      $region28: #{tpu_custom_call.1} parent=11 // pred_fallthru
        _
      // Predicated region
      $region29: #{tpu_custom_call.1} parent=11 // pred_check
        %p263 = pneg %p187
      $region30: #{tpu_custom_call.1} parent=11 // pred_check_branch
        %265 = sbr.rel (%p263) target = $region32
      $region31: #{tpu_custom_call.1} parent=11 // pred_region
        _
      $region32: #{tpu_custom_call.1} parent=11 // pred_fallthru
        _
      // Predicated region
      $region33: #{tpu_custom_call.1} parent=11 // pred_check
        %p266 = pneg %p208
      $region34: #{tpu_custom_call.1} parent=11 // pred_check_branch
        %268 = sbr.rel (%p266) target = $region36
      $region35: #{tpu_custom_call.1} parent=11 // pred_region
        _
      $region36: #{tpu_custom_call.1} parent=11 // pred_fallthru
        _
    $region12: #{tpu_custom_call.1} parent=5 // pred_fallthru
      _
    %p269 = scmp.lt.s32.totalorder %s14, 2
    // Predicated region
    $region37: #{tpu_custom_call.1} parent=5 // pred_check
      %p270 = pneg %p269
    $region38: #{tpu_custom_call.1} parent=5 // pred_check_branch
      %272 = sbr.rel (%p270) target = $region40
    $region39: #{tpu_custom_call.1} parent=5 // pred_region
      // Predicated region
      $region41: #{tpu_custom_call.1} parent=39 // pred_check
        %p273 = pneg %p48
      $region42: #{tpu_custom_call.1} parent=39 // pred_check_branch
        %275 = sbr.rel (%p273) target = $region44
      $region43: #{tpu_custom_call.1} parent=39 // pred_region
        %p276 = scmp.lt.s32.totalorder %s21, 1
        %s277 = scalar_select %p276, %s21, 1
        %p278 = scmp.lt.s32.totalorder %s22, 0
        %s279 = scalar_select %p278, %s22, 0
        %s280 = sadd.s32 %s279, %s277
        %s281 = smul.addr %s280, 4
        %s282 = scalar_lea.vmem %s0, %s281
      $region44: #{tpu_custom_call.1} parent=39 // pred_fallthru
        _
      // Predicated region
      $region45: #{tpu_custom_call.1} parent=39 // pred_check
        %p283 = pneg %p76
      $region46: #{tpu_custom_call.1} parent=39 // pred_check_branch
        %285 = sbr.rel (%p283) target = $region48
      $region47: #{tpu_custom_call.1} parent=39 // pred_region
        %p286 = scmp.lt.s32.totalorder %s21, 1
        %s287 = scalar_select %p286, %s21, 1
        %p288 = scmp.lt.s32.totalorder %s22, 0
        %s289 = scalar_select %p288, %s22, 0
        %s290 = smul.addr %s287, 8
        %s291 = sadd.s32 %s289, %s290
        %s292 = smul.addr %s291, 8
        %s293 = scalar_lea.vmem %s1, %s292
      $region48: #{tpu_custom_call.1} parent=39 // pred_fallthru
        _
    $region40: #{tpu_custom_call.1} parent=5 // pred_fallthru
      _
    %p294 = scmp.le.s32.totalorder 1, %s14
    %p295 = scmp.lt.s32.totalorder %s14, 3
    %p296 = pnand %p294, %p295
    %p297 = pneg %p296
    // Predicated region
    $region49: #{tpu_custom_call.1} parent=5 // pred_check
      _
    $region50: #{tpu_custom_call.1} parent=5 // pred_check_branch
      %299 = sbr.rel (%p296) target = $region52
    $region51: #{tpu_custom_call.1} parent=5 // pred_region
      %s300 = ssub.s32 %s14, 1
      %p301 = scmp.lt.s32.totalorder %s23, 1
      %s302 = scalar_select %p301, %s23, 1
      %p303 = scmp.lt.s32.totalorder %s24, 0
      %s304 = scalar_select %p303, %s24, 0
      %s305 = sadd.s32 %s304, %s302
      %s306 = smul.addr %s305, 4
      %s307 = scalar_lea.vmem %s0, %s306
      %p308 = pneg %p54
      %p309 = pneg %p51
      %p310 = scmp.lt.s32.totalorder %s23, 1
      %s311 = scalar_select %p310, %s23, 1
      %p312 = scmp.lt.s32.totalorder %s24, 0
      %s313 = scalar_select %p312, %s24, 0
      %s314 = smul.addr %s311, 8
      %s315 = sadd.s32 %s313, %s314
      %s316 = smul.addr %s315, 8
      %s317 = scalar_lea.vmem %s1, %s316
      %p318 = pneg %p82
      %p319 = pneg %p79
      %p320 = pneg %p103
      %p321 = pneg %p100
      %p322 = pneg %p124
      %p323 = pneg %p121
      %p324 = pneg %p145
      %p325 = pneg %p142
      %p326 = pneg %p166
      %p327 = pneg %p163
      %p328 = pneg %p187
      %p329 = pneg %p184
      %p330 = pneg %p208
      %p331 = pneg %p205
      %p332 = pneg %p236
      %p333 = pneg %p233
      %p334 = scmp.lt.s32.totalorder %s23, 1
      %s335 = scalar_select %p334, %s23, 1
      %p336 = scmp.lt.s32.totalorder %s24, 0
      %s337 = scalar_select %p336, %s24, 0
      %s338 = smul.addr %s335, 4
      %s339 = sadd.s32 %s337, %s338
      %s340 = smul.addr %s339, 8
      %s341 = scalar_lea.vmem %s8, %s340
      %p342 = scmp.lt.s32.totalorder %s23, 1
      %s343 = scalar_select %p342, %s23, 1
      %p344 = scmp.lt.s32.totalorder %s24, 0
      %s345 = scalar_select %p344, %s24, 0
      %s346 = sadd.s32 %s345, %s343
      %s347 = smul.addr %s346, 4
      %s348 = scalar_lea.vmem %s0, %s347
      %p349 = scmp.lt.s32.totalorder %s23, 1
      %s350 = scalar_select %p349, %s23, 1
      %p351 = scmp.lt.s32.totalorder %s24, 0
      %s352 = scalar_select %p351, %s24, 0
      %s353 = smul.addr %s350, 8
      %s354 = sadd.s32 %s352, %s353
      %s355 = smul.addr %s354, 8
      %s356 = scalar_lea.vmem %s1, %s355
      %p357 = scmp.lt.s32.totalorder %s23, 1
      %s358 = scalar_select %p357, %s23, 1
      %p359 = scmp.lt.s32.totalorder %s24, 0
      %s360 = scalar_select %p359, %s24, 0
      %s361 = smul.addr %s358, 4
      %s362 = sadd.s32 %s360, %s361
      %s363 = smul.addr %s362, 8
      %s364 = scalar_lea.vmem %s8, %s363
      %v365 = vld [vmem:[%s348] sm:$0x7]
      %v366 = vld [vmem:[%s2] sm:$0xff]
      %v367 = vld [vmem:[%s3] sm:$0xff]
      %v368 = vld [vmem:[%s4] sm:$0xff]
      %v369 = vld [vmem:[%s4 + $0x8] sm:$0xff]
      %v370 = vld [vmem:[%s5] sm:$0xff]
      %v371 = vld [vmem:[%s5 + $0x8] sm:$0xff]
      %v372 = vld [vmem:[%s356] sm:$0x7f]
      %v373 = vsub.f32 %v372, %v365
      %375 = vset.pattern.permute.xlu0 0
      %376 = vperm.xlu0 %375, %v366
      %v377 = vpop.permute.xlu0 %376
      %v379 = vlaneseq
      %v380 = vshrl.u32 %v379, 7
      %v381 = vsub.s32 0, %v380
      %v382 = vrot.slane %v373, %v381
      %v383 = vmul.f32 %v377, %v382
      %385 = vset.pattern.permute.xlu0 0
      %386 = vperm.xlu0 %385, %v367
      %v387 = vpop.permute.xlu0 %386
      %v389 = vadd.f32 %v387, %v383
      %390 = vset.pattern.permute.xlu0 1
      %391 = vperm.xlu0 %390, %v366
      %v392 = vpop.permute.xlu0 %391
      %v394 = vlaneseq
      %v395 = vshrl.u32 %v394, 7
      %v396 = vsub.s32 1, %v395
      %v397 = vrot.slane %v373, %v396
      %v398 = vmul.f32 %v392, %v397
      %v399 = vadd.f32 %v389, %v398
      %400 = vset.pattern.permute.xlu0 2
      %401 = vperm.xlu0 %400, %v366
      %v402 = vpop.permute.xlu0 %401
      %v404 = vlaneseq
      %v405 = vshrl.u32 %v404, 7
      %v406 = vsub.s32 2, %v405
      %v407 = vrot.slane %v373, %v406
      %v408 = vmul.f32 %v402, %v407
      %v409 = vadd.f32 %v399, %v408
      %vm410 = vcmp.gt.f32.partialorder %v409, 0.0
      %v411 = vmul.f32 %v409, 0.1
      %v412 = vsel %vm410, %v409, %v411
      %414 = vset.pattern.permute.xlu0 0
      %415 = vperm.xlu0 %414, %v368
      %v416 = vpop.permute.xlu0 %415
      %419 = vset.pattern.permute.xlu0 0
      %420 = vperm.xlu0 %419, %v369
      %v421 = vpop.permute.xlu0 %420
      %v423 = vlaneseq
      %v424 = vshrl.u32 %v423, 7
      %v425 = vsub.s32 0, %v424
      %v426 = vrot.slane %v412, %v425
      %v427 = vmul.f32 %v416, %v426
      %v428 = vmul.f32 %v421, %v426
      %430 = vset.pattern.permute.xlu0 0
      %431 = vperm.xlu0 %430, %v370
      %v432 = vpop.permute.xlu0 %431
      %435 = vset.pattern.permute.xlu0 0
      %436 = vperm.xlu0 %435, %v371
      %v437 = vpop.permute.xlu0 %436
      %v439 = vadd.f32 %v432, %v427
      %v440 = vadd.f32 %v437, %v428
      %441 = vset.pattern.permute.xlu0 1
      %442 = vperm.xlu0 %441, %v368
      %v443 = vpop.permute.xlu0 %442
      %445 = vset.pattern.permute.xlu0 1
      %446 = vperm.xlu0 %445, %v369
      %v447 = vpop.permute.xlu0 %446
      %v449 = vlaneseq
      %v450 = vshrl.u32 %v449, 7
      %v451 = vsub.s32 1, %v450
      %v452 = vrot.slane %v412, %v451
      %v453 = vmul.f32 %v443, %v452
      %v454 = vmul.f32 %v447, %v452
      %v455 = vadd.f32 %v439, %v453
      %v456 = vadd.f32 %v440, %v454
      %457 = vset.pattern.permute.xlu0 2
      %458 = vperm.xlu0 %457, %v368
      %v459 = vpop.permute.xlu0 %458
      %461 = vset.pattern.permute.xlu0 2
      %462 = vperm.xlu0 %461, %v369
      %v463 = vpop.permute.xlu0 %462
      %v465 = vlaneseq
      %v466 = vshrl.u32 %v465, 7
      %v467 = vsub.s32 2, %v466
      %v468 = vrot.slane %v412, %v467
      %v469 = vmul.f32 %v459, %v468
      %v470 = vmul.f32 %v463, %v468
      %v471 = vadd.f32 %v455, %v469
      %v472 = vadd.f32 %v456, %v470
      %473 = vset.pattern.permute.xlu0 3
      %474 = vperm.xlu0 %473, %v368
      %v475 = vpop.permute.xlu0 %474
      %477 = vset.pattern.permute.xlu0 3
      %478 = vperm.xlu0 %477, %v369
      %v479 = vpop.permute.xlu0 %478
      %v481 = vlaneseq
      %v482 = vshrl.u32 %v481, 7
      %v483 = vsub.s32 3, %v482
      %v484 = vrot.slane %v412, %v483
      %v485 = vmul.f32 %v475, %v484
      %v486 = vmul.f32 %v479, %v484
      %v487 = vadd.f32 %v471, %v485
      %v488 = vadd.f32 %v472, %v486
      %489 = vset.pattern.permute.xlu0 4
      %490 = vperm.xlu0 %489, %v368
      %v491 = vpop.permute.xlu0 %490
      %493 = vset.pattern.permute.xlu0 4
      %494 = vperm.xlu0 %493, %v369
      %v495 = vpop.permute.xlu0 %494
      %v497 = vlaneseq
      %v498 = vshrl.u32 %v497, 7
      %v499 = vsub.s32 4, %v498
      %v500 = vrot.slane %v412, %v499
      %v501 = vmul.f32 %v491, %v500
      %v502 = vmul.f32 %v495, %v500
      %v503 = vadd.f32 %v487, %v501
      %v504 = vadd.f32 %v488, %v502
      %505 = vset.pattern.permute.xlu0 5
      %506 = vperm.xlu0 %505, %v368
      %v507 = vpop.permute.xlu0 %506
      %509 = vset.pattern.permute.xlu0 5
      %510 = vperm.xlu0 %509, %v369
      %v511 = vpop.permute.xlu0 %510
      %v513 = vlaneseq
      %v514 = vshrl.u32 %v513, 7
      %v515 = vsub.s32 5, %v514
      %v516 = vrot.slane %v412, %v515
      %v517 = vmul.f32 %v507, %v516
      %v518 = vmul.f32 %v511, %v516
      %v519 = vadd.f32 %v503, %v517
      %v520 = vadd.f32 %v504, %v518
      %521 = vset.pattern.permute.xlu0 6
      %522 = vperm.xlu0 %521, %v368
      %v523 = vpop.permute.xlu0 %522
      %525 = vset.pattern.permute.xlu0 6
      %526 = vperm.xlu0 %525, %v369
      %v527 = vpop.permute.xlu0 %526
      %v529 = vlaneseq
      %v530 = vshrl.u32 %v529, 7
      %v531 = vsub.s32 6, %v530
      %v532 = vrot.slane %v412, %v531
      %v533 = vmul.f32 %v523, %v532
      %v534 = vmul.f32 %v527, %v532
      %v535 = vadd.f32 %v519, %v533
      %v536 = vadd.f32 %v520, %v534
      %537 = vset.pattern.permute.xlu0 7
      %538 = vperm.xlu0 %537, %v368
      %v539 = vpop.permute.xlu0 %538
      %541 = vset.pattern.permute.xlu0 7
      %542 = vperm.xlu0 %541, %v369
      %v543 = vpop.permute.xlu0 %542
      %v545 = vlaneseq
      %v546 = vshrl.u32 %v545, 7
      %v547 = vsub.s32 7, %v546
      %v548 = vrot.slane %v412, %v547
      %v549 = vmul.f32 %v539, %v548
      %v550 = vmul.f32 %v543, %v548
      %v551 = vadd.f32 %v535, %v549
      %v552 = vadd.f32 %v536, %v550
      %vm553 = vcmp.gt.f32.partialorder %v551, 0.0
      %vm554 = vcmp.gt.f32.partialorder %v552, 0.0
      %v555 = vmul.f32 %v551, 0.1
      %v556 = vmul.f32 %v552, 0.1
      %v557 = vsel %vm553, %v551, %v555
      %v558 = vsel %vm554, %v552, %v556
      %v559 = vlaneseq
      %v560 = vshrl.u32 %v559, 7
      %v561 = vsub.s32 0, %v560
      %v562 = vrot.slane %v372, %v561
      %v563 = vmul.f32 %v562, %v557
      %v564 = vmul.f32 %v562, %v558
      %v565 = vlaneseq
      %v566 = vshrl.u32 %v565, 7
      %v567 = vsub.s32 1, %v566
      %v568 = vrot.slane %v372, %v567
      %v569 = vmul.f32 %v568, %v557
      %v570 = vmul.f32 %v568, %v558
      %v571 = vlaneseq
      %v572 = vshrl.u32 %v571, 7
      %v573 = vsub.s32 2, %v572
      %v574 = vrot.slane %v372, %v573
      %v575 = vmul.f32 %v574, %v557
      %v576 = vmul.f32 %v574, %v558
      %v577 = vlaneseq
      %v578 = vshrl.u32 %v577, 7
      %v579 = vsub.s32 3, %v578
      %v580 = vrot.slane %v372, %v579
      %v581 = vmul.f32 %v580, %v557
      %v582 = vmul.f32 %v580, %v558
      %v583 = vlaneseq
      %v584 = vshrl.u32 %v583, 7
      %v585 = vsub.s32 4, %v584
      %v586 = vrot.slane %v372, %v585
      %v587 = vmul.f32 %v586, %v557
      %v588 = vmul.f32 %v586, %v558
      %v589 = vlaneseq
      %v590 = vshrl.u32 %v589, 7
      %v591 = vsub.s32 5, %v590
      %v592 = vrot.slane %v372, %v591
      %v593 = vmul.f32 %v592, %v557
      %v594 = vmul.f32 %v592, %v558
      %v595 = vlaneseq
      %v596 = vshrl.u32 %v595, 7
      %v597 = vsub.s32 6, %v596
      %v598 = vrot.slane %v372, %v597
      %v599 = vmul.f32 %v598, %v557
      %v600 = vmul.f32 %v598, %v558
      %s601 = scalar_lea.vmem %s356, 8
      %v602 = vld [vmem:[%s601] sm:$0x7f]
      %v603 = vsub.f32 %v602, %v365
      %v604 = vlaneseq
      %v605 = vshrl.u32 %v604, 7
      %v606 = vsub.s32 0, %v605
      %v607 = vrot.slane %v603, %v606
      %v608 = vmul.f32 %v377, %v607
      %v609 = vadd.f32 %v387, %v608
      %v610 = vlaneseq
      %v611 = vshrl.u32 %v610, 7
      %v612 = vsub.s32 1, %v611
      %v613 = vrot.slane %v603, %v612
      %v614 = vmul.f32 %v392, %v613
      %v615 = vadd.f32 %v609, %v614
      %v616 = vlaneseq
      %v617 = vshrl.u32 %v616, 7
      %v618 = vsub.s32 2, %v617
      %v619 = vrot.slane %v603, %v618
      %v620 = vmul.f32 %v402, %v619
      %v621 = vadd.f32 %v615, %v620
      %vm622 = vcmp.gt.f32.partialorder %v621, 0.0
      %v623 = vmul.f32 %v621, 0.1
      %v624 = vsel %vm622, %v621, %v623
      %v625 = vlaneseq
      %v626 = vshrl.u32 %v625, 7
      %v627 = vsub.s32 0, %v626
      %v628 = vrot.slane %v624, %v627
      %v629 = vmul.f32 %v416, %v628
      %v630 = vmul.f32 %v421, %v628
      %v631 = vadd.f32 %v432, %v629
      %v632 = vadd.f32 %v437, %v630
      %v633 = vlaneseq
      %v634 = vshrl.u32 %v633, 7
      %v635 = vsub.s32 1, %v634
      %v636 = vrot.slane %v624, %v635
      %v637 = vmul.f32 %v443, %v636
      %v638 = vmul.f32 %v447, %v636
      %v639 = vadd.f32 %v631, %v637
      %v640 = vadd.f32 %v632, %v638
      %v641 = vlaneseq
      %v642 = vshrl.u32 %v641, 7
      %v643 = vsub.s32 2, %v642
      %v644 = vrot.slane %v624, %v643
      %v645 = vmul.f32 %v459, %v644
      %v646 = vmul.f32 %v463, %v644
      %v647 = vadd.f32 %v639, %v645
      %v648 = vadd.f32 %v640, %v646
      %v649 = vlaneseq
      %v650 = vshrl.u32 %v649, 7
      %v651 = vsub.s32 3, %v650
      %v652 = vrot.slane %v624, %v651
      %v653 = vmul.f32 %v475, %v652
      %v654 = vmul.f32 %v479, %v652
      %v655 = vadd.f32 %v647, %v653
      %v656 = vadd.f32 %v648, %v654
      %v657 = vlaneseq
      %v658 = vshrl.u32 %v657, 7
      %v659 = vsub.s32 4, %v658
      %v660 = vrot.slane %v624, %v659
      %v661 = vmul.f32 %v491, %v660
      %v662 = vmul.f32 %v495, %v660
      %v663 = vadd.f32 %v655, %v661
      %v664 = vadd.f32 %v656, %v662
      %v665 = vlaneseq
      %v666 = vshrl.u32 %v665, 7
      %v667 = vsub.s32 5, %v666
      %v668 = vrot.slane %v624, %v667
      %v669 = vmul.f32 %v507, %v668
      %v670 = vmul.f32 %v511, %v668
      %v671 = vadd.f32 %v663, %v669
      %v672 = vadd.f32 %v664, %v670
      %v673 = vlaneseq
      %v674 = vshrl.u32 %v673, 7
      %v675 = vsub.s32 6, %v674
      %v676 = vrot.slane %v624, %v675
      %v677 = vmul.f32 %v523, %v676
      %v678 = vmul.f32 %v527, %v676
      %v679 = vadd.f32 %v671, %v677
      %v680 = vadd.f32 %v672, %v678
      %v681 = vlaneseq
      %v682 = vshrl.u32 %v681, 7
      %v683 = vsub.s32 7, %v682
      %v684 = vrot.slane %v624, %v683
      %v685 = vmul.f32 %v539, %v684
      %v686 = vmul.f32 %v543, %v684
      %v687 = vadd.f32 %v679, %v685
      %v688 = vadd.f32 %v680, %v686
      %vm689 = vcmp.gt.f32.partialorder %v687, 0.0
      %vm690 = vcmp.gt.f32.partialorder %v688, 0.0
      %v691 = vmul.f32 %v687, 0.1
      %v692 = vmul.f32 %v688, 0.1
      %v693 = vsel %vm689, %v687, %v691
      %v694 = vsel %vm690, %v688, %v692
      %v695 = vlaneseq
      %v696 = vshrl.u32 %v695, 7
      %v697 = vsub.s32 0, %v696
      %v698 = vrot.slane %v602, %v697
      %v699 = vmul.f32 %v698, %v693
      %v700 = vmul.f32 %v698, %v694
      %v701 = vadd.f32 %v563, %v699
      %v702 = vadd.f32 %v564, %v700
      %v703 = vlaneseq
      %v704 = vshrl.u32 %v703, 7
      %v705 = vsub.s32 1, %v704
      %v706 = vrot.slane %v602, %v705
      %v707 = vmul.f32 %v706, %v693
      %v708 = vmul.f32 %v706, %v694
      %v709 = vadd.f32 %v569, %v707
      %v710 = vadd.f32 %v570, %v708
      %v711 = vlaneseq
      %v712 = vshrl.u32 %v711, 7
      %v713 = vsub.s32 2, %v712
      %v714 = vrot.slane %v602, %v713
      %v715 = vmul.f32 %v714, %v693
      %v716 = vmul.f32 %v714, %v694
      %v717 = vadd.f32 %v575, %v715
      %v718 = vadd.f32 %v576, %v716
      %v719 = vlaneseq
      %v720 = vshrl.u32 %v719, 7
      %v721 = vsub.s32 3, %v720
      %v722 = vrot.slane %v602, %v721
      %v723 = vmul.f32 %v722, %v693
      %v724 = vmul.f32 %v722, %v694
      %v725 = vadd.f32 %v581, %v723
      %v726 = vadd.f32 %v582, %v724
      %v727 = vlaneseq
      %v728 = vshrl.u32 %v727, 7
      %v729 = vsub.s32 4, %v728
      %v730 = vrot.slane %v602, %v729
      %v731 = vmul.f32 %v730, %v693
      %v732 = vmul.f32 %v730, %v694
      %v733 = vadd.f32 %v587, %v731
      %v734 = vadd.f32 %v588, %v732
      %v735 = vlaneseq
      %v736 = vshrl.u32 %v735, 7
      %v737 = vsub.s32 5, %v736
      %v738 = vrot.slane %v602, %v737
      %v739 = vmul.f32 %v738, %v693
      %v740 = vmul.f32 %v738, %v694
      %v741 = vadd.f32 %v593, %v739
      %v742 = vadd.f32 %v594, %v740
      %v743 = vlaneseq
      %v744 = vshrl.u32 %v743, 7
      %v745 = vsub.s32 6, %v744
      %v746 = vrot.slane %v602, %v745
      %v747 = vmul.f32 %v746, %v693
      %v748 = vmul.f32 %v746, %v694
      %v749 = vadd.f32 %v599, %v747
      %v750 = vadd.f32 %v600, %v748
      %s751 = scalar_lea.vmem %s356, 16
      %v752 = vld [vmem:[%s751] sm:$0x7f]
      %v753 = vsub.f32 %v752, %v365
      %v754 = vlaneseq
      %v755 = vshrl.u32 %v754, 7
      %v756 = vsub.s32 0, %v755
      %v757 = vrot.slane %v753, %v756
      %v758 = vmul.f32 %v377, %v757
      %v759 = vadd.f32 %v387, %v758
      %v760 = vlaneseq
      %v761 = vshrl.u32 %v760, 7
      %v762 = vsub.s32 1, %v761
      %v763 = vrot.slane %v753, %v762
      %v764 = vmul.f32 %v392, %v763
      %v765 = vadd.f32 %v759, %v764
      %v766 = vlaneseq
      %v767 = vshrl.u32 %v766, 7
      %v768 = vsub.s32 2, %v767
      %v769 = vrot.slane %v753, %v768
      %v770 = vmul.f32 %v402, %v769
      %v771 = vadd.f32 %v765, %v770
      %vm772 = vcmp.gt.f32.partialorder %v771, 0.0
      %v773 = vmul.f32 %v771, 0.1
      %v774 = vsel %vm772, %v771, %v773
      %v775 = vlaneseq
      %v776 = vshrl.u32 %v775, 7
      %v777 = vsub.s32 0, %v776
      %v778 = vrot.slane %v774, %v777
      %v779 = vmul.f32 %v416, %v778
      %v780 = vmul.f32 %v421, %v778
      %v781 = vadd.f32 %v432, %v779
      %v782 = vadd.f32 %v437, %v780
      %v783 = vlaneseq
      %v784 = vshrl.u32 %v783, 7
      %v785 = vsub.s32 1, %v784
      %v786 = vrot.slane %v774, %v785
      %v787 = vmul.f32 %v443, %v786
      %v788 = vmul.f32 %v447, %v786
      %v789 = vadd.f32 %v781, %v787
      %v790 = vadd.f32 %v782, %v788
      %v791 = vlaneseq
      %v792 = vshrl.u32 %v791, 7
      %v793 = vsub.s32 2, %v792
      %v794 = vrot.slane %v774, %v793
      %v795 = vmul.f32 %v459, %v794
      %v796 = vmul.f32 %v463, %v794
      %v797 = vadd.f32 %v789, %v795
      %v798 = vadd.f32 %v790, %v796
      %v799 = vlaneseq
      %v800 = vshrl.u32 %v799, 7
      %v801 = vsub.s32 3, %v800
      %v802 = vrot.slane %v774, %v801
      %v803 = vmul.f32 %v475, %v802
      %v804 = vmul.f32 %v479, %v802
      %v805 = vadd.f32 %v797, %v803
      %v806 = vadd.f32 %v798, %v804
      %v807 = vlaneseq
      %v808 = vshrl.u32 %v807, 7
      %v809 = vsub.s32 4, %v808
      %v810 = vrot.slane %v774, %v809
      %v811 = vmul.f32 %v491, %v810
      %v812 = vmul.f32 %v495, %v810
      %v813 = vadd.f32 %v805, %v811
      %v814 = vadd.f32 %v806, %v812
      %v815 = vlaneseq
      %v816 = vshrl.u32 %v815, 7
      %v817 = vsub.s32 5, %v816
      %v818 = vrot.slane %v774, %v817
      %v819 = vmul.f32 %v507, %v818
      %v820 = vmul.f32 %v511, %v818
      %v821 = vadd.f32 %v813, %v819
      %v822 = vadd.f32 %v814, %v820
      %v823 = vlaneseq
      %v824 = vshrl.u32 %v823, 7
      %v825 = vsub.s32 6, %v824
      %v826 = vrot.slane %v774, %v825
      %v827 = vmul.f32 %v523, %v826
      %v828 = vmul.f32 %v527, %v826
      %v829 = vadd.f32 %v821, %v827
      %v830 = vadd.f32 %v822, %v828
      %v831 = vlaneseq
      %v832 = vshrl.u32 %v831, 7
      %v833 = vsub.s32 7, %v832
      %v834 = vrot.slane %v774, %v833
      %v835 = vmul.f32 %v539, %v834
      %v836 = vmul.f32 %v543, %v834
      %v837 = vadd.f32 %v829, %v835
      %v838 = vadd.f32 %v830, %v836
      %vm839 = vcmp.gt.f32.partialorder %v837, 0.0
      %vm840 = vcmp.gt.f32.partialorder %v838, 0.0
      %v841 = vmul.f32 %v837, 0.1
      %v842 = vmul.f32 %v838, 0.1
      %v843 = vsel %vm839, %v837, %v841
      %v844 = vsel %vm840, %v838, %v842
      %v845 = vlaneseq
      %v846 = vshrl.u32 %v845, 7
      %v847 = vsub.s32 0, %v846
      %v848 = vrot.slane %v752, %v847
      %v849 = vmul.f32 %v848, %v843
      %v850 = vmul.f32 %v848, %v844
      %v851 = vadd.f32 %v701, %v849
      %v852 = vadd.f32 %v702, %v850
      %v853 = vlaneseq
      %v854 = vshrl.u32 %v853, 7
      %v855 = vsub.s32 1, %v854
      %v856 = vrot.slane %v752, %v855
      %v857 = vmul.f32 %v856, %v843
      %v858 = vmul.f32 %v856, %v844
      %v859 = vadd.f32 %v709, %v857
      %v860 = vadd.f32 %v710, %v858
      %v861 = vlaneseq
      %v862 = vshrl.u32 %v861, 7
      %v863 = vsub.s32 2, %v862
      %v864 = vrot.slane %v752, %v863
      %v865 = vmul.f32 %v864, %v843
      %v866 = vmul.f32 %v864, %v844
      %v867 = vadd.f32 %v717, %v865
      %v868 = vadd.f32 %v718, %v866
      %v869 = vlaneseq
      %v870 = vshrl.u32 %v869, 7
      %v871 = vsub.s32 3, %v870
      %v872 = vrot.slane %v752, %v871
      %v873 = vmul.f32 %v872, %v843
      %v874 = vmul.f32 %v872, %v844
      %v875 = vadd.f32 %v725, %v873
      %v876 = vadd.f32 %v726, %v874
      %v877 = vlaneseq
      %v878 = vshrl.u32 %v877, 7
      %v879 = vsub.s32 4, %v878
      %v880 = vrot.slane %v752, %v879
      %v881 = vmul.f32 %v880, %v843
      %v882 = vmul.f32 %v880, %v844
      %v883 = vadd.f32 %v733, %v881
      %v884 = vadd.f32 %v734, %v882
      %v885 = vlaneseq
      %v886 = vshrl.u32 %v885, 7
      %v887 = vsub.s32 5, %v886
      %v888 = vrot.slane %v752, %v887
      %v889 = vmul.f32 %v888, %v843
      %v890 = vmul.f32 %v888, %v844
      %v891 = vadd.f32 %v741, %v889
      %v892 = vadd.f32 %v742, %v890
      %v893 = vlaneseq
      %v894 = vshrl.u32 %v893, 7
      %v895 = vsub.s32 6, %v894
      %v896 = vrot.slane %v752, %v895
      %v897 = vmul.f32 %v896, %v843
      %v898 = vmul.f32 %v896, %v844
      %v899 = vadd.f32 %v749, %v897
      %v900 = vadd.f32 %v750, %v898
      %s901 = scalar_lea.vmem %s356, 24
      %v902 = vld [vmem:[%s901] sm:$0x7f]
      %v903 = vsub.f32 %v902, %v365
      %v904 = vlaneseq
      %v905 = vshrl.u32 %v904, 7
      %v906 = vsub.s32 0, %v905
      %v907 = vrot.slane %v903, %v906
      %v908 = vmul.f32 %v377, %v907
      %v909 = vadd.f32 %v387, %v908
      %v910 = vlaneseq
      %v911 = vshrl.u32 %v910, 7
      %v912 = vsub.s32 1, %v911
      %v913 = vrot.slane %v903, %v912
      %v914 = vmul.f32 %v392, %v913
      %v915 = vadd.f32 %v909, %v914
      %v916 = vlaneseq
      %v917 = vshrl.u32 %v916, 7
      %v918 = vsub.s32 2, %v917
      %v919 = vrot.slane %v903, %v918
      %v920 = vmul.f32 %v402, %v919
      %v921 = vadd.f32 %v915, %v920
      %vm922 = vcmp.gt.f32.partialorder %v921, 0.0
      %v923 = vmul.f32 %v921, 0.1
      %v924 = vsel %vm922, %v921, %v923
      %v925 = vlaneseq
      %v926 = vshrl.u32 %v925, 7
      %v927 = vsub.s32 0, %v926
      %v928 = vrot.slane %v924, %v927
      %v929 = vmul.f32 %v416, %v928
      %v930 = vmul.f32 %v421, %v928
      %v931 = vadd.f32 %v432, %v929
      %v932 = vadd.f32 %v437, %v930
      %v933 = vlaneseq
      %v934 = vshrl.u32 %v933, 7
      %v935 = vsub.s32 1, %v934
      %v936 = vrot.slane %v924, %v935
      %v937 = vmul.f32 %v443, %v936
      %v938 = vmul.f32 %v447, %v936
      %v939 = vadd.f32 %v931, %v937
      %v940 = vadd.f32 %v932, %v938
      %v941 = vlaneseq
      %v942 = vshrl.u32 %v941, 7
      %v943 = vsub.s32 2, %v942
      %v944 = vrot.slane %v924, %v943
      %v945 = vmul.f32 %v459, %v944
      %v946 = vmul.f32 %v463, %v944
      %v947 = vadd.f32 %v939, %v945
      %v948 = vadd.f32 %v940, %v946
      %v949 = vlaneseq
      %v950 = vshrl.u32 %v949, 7
      %v951 = vsub.s32 3, %v950
      %v952 = vrot.slane %v924, %v951
      %v953 = vmul.f32 %v475, %v952
      %v954 = vmul.f32 %v479, %v952
      %v955 = vadd.f32 %v947, %v953
      %v956 = vadd.f32 %v948, %v954
      %v957 = vlaneseq
      %v958 = vshrl.u32 %v957, 7
      %v959 = vsub.s32 4, %v958
      %v960 = vrot.slane %v924, %v959
      %v961 = vmul.f32 %v491, %v960
      %v962 = vmul.f32 %v495, %v960
      %v963 = vadd.f32 %v955, %v961
      %v964 = vadd.f32 %v956, %v962
      %v965 = vlaneseq
      %v966 = vshrl.u32 %v965, 7
      %v967 = vsub.s32 5, %v966
      %v968 = vrot.slane %v924, %v967
      %v969 = vmul.f32 %v507, %v968
      %v970 = vmul.f32 %v511, %v968
      %v971 = vadd.f32 %v963, %v969
      %v972 = vadd.f32 %v964, %v970
      %v973 = vlaneseq
      %v974 = vshrl.u32 %v973, 7
      %v975 = vsub.s32 6, %v974
      %v976 = vrot.slane %v924, %v975
      %v977 = vmul.f32 %v523, %v976
      %v978 = vmul.f32 %v527, %v976
      %v979 = vadd.f32 %v971, %v977
      %v980 = vadd.f32 %v972, %v978
      %v981 = vlaneseq
      %v982 = vshrl.u32 %v981, 7
      %v983 = vsub.s32 7, %v982
      %v984 = vrot.slane %v924, %v983
      %v985 = vmul.f32 %v539, %v984
      %v986 = vmul.f32 %v543, %v984
      %v987 = vadd.f32 %v979, %v985
      %v988 = vadd.f32 %v980, %v986
      %vm989 = vcmp.gt.f32.partialorder %v987, 0.0
      %vm990 = vcmp.gt.f32.partialorder %v988, 0.0
      %v991 = vmul.f32 %v987, 0.1
      %v992 = vmul.f32 %v988, 0.1
      %v993 = vsel %vm989, %v987, %v991
      %v994 = vsel %vm990, %v988, %v992
      %v995 = vlaneseq
      %v996 = vshrl.u32 %v995, 7
      %v997 = vsub.s32 0, %v996
      %v998 = vrot.slane %v902, %v997
      %v999 = vmul.f32 %v998, %v993
      %v1000 = vmul.f32 %v998, %v994
      %v1001 = vadd.f32 %v851, %v999
      %v1002 = vadd.f32 %v852, %v1000
      %v1003 = vlaneseq
      %v1004 = vshrl.u32 %v1003, 7
      %v1005 = vsub.s32 1, %v1004
      %v1006 = vrot.slane %v902, %v1005
      %v1007 = vmul.f32 %v1006, %v993
      %v1008 = vmul.f32 %v1006, %v994
      %v1009 = vadd.f32 %v859, %v1007
      %v1010 = vadd.f32 %v860, %v1008
      %v1011 = vlaneseq
      %v1012 = vshrl.u32 %v1011, 7
      %v1013 = vsub.s32 2, %v1012
      %v1014 = vrot.slane %v902, %v1013
      %v1015 = vmul.f32 %v1014, %v993
      %v1016 = vmul.f32 %v1014, %v994
      %v1017 = vadd.f32 %v867, %v1015
      %v1018 = vadd.f32 %v868, %v1016
      %v1019 = vlaneseq
      %v1020 = vshrl.u32 %v1019, 7
      %v1021 = vsub.s32 3, %v1020
      %v1022 = vrot.slane %v902, %v1021
      %v1023 = vmul.f32 %v1022, %v993
      %v1024 = vmul.f32 %v1022, %v994
      %v1025 = vadd.f32 %v875, %v1023
      %v1026 = vadd.f32 %v876, %v1024
      %v1027 = vlaneseq
      %v1028 = vshrl.u32 %v1027, 7
      %v1029 = vsub.s32 4, %v1028
      %v1030 = vrot.slane %v902, %v1029
      %v1031 = vmul.f32 %v1030, %v993
      %v1032 = vmul.f32 %v1030, %v994
      %v1033 = vadd.f32 %v883, %v1031
      %v1034 = vadd.f32 %v884, %v1032
      %v1035 = vlaneseq
      %v1036 = vshrl.u32 %v1035, 7
      %v1037 = vsub.s32 5, %v1036
      %v1038 = vrot.slane %v902, %v1037
      %v1039 = vmul.f32 %v1038, %v993
      %v1040 = vmul.f32 %v1038, %v994
      %v1041 = vadd.f32 %v891, %v1039
      %v1042 = vadd.f32 %v892, %v1040
      %v1043 = vlaneseq
      %v1044 = vshrl.u32 %v1043, 7
      %v1045 = vsub.s32 6, %v1044
      %v1046 = vrot.slane %v902, %v1045
      %v1047 = vmul.f32 %v1046, %v993
      %v1048 = vmul.f32 %v1046, %v994
      %v1049 = vadd.f32 %v899, %v1047
      %v1050 = vadd.f32 %v900, %v1048
      %s1051 = scalar_lea.vmem %s356, 32
      %v1052 = vld [vmem:[%s1051] sm:$0x7f]
      %v1053 = vsub.f32 %v1052, %v365
      %v1054 = vlaneseq
      %v1055 = vshrl.u32 %v1054, 7
      %v1056 = vsub.s32 0, %v1055
      %v1057 = vrot.slane %v1053, %v1056
      %v1058 = vmul.f32 %v377, %v1057
      %v1059 = vadd.f32 %v387, %v1058
      %v1060 = vlaneseq
      %v1061 = vshrl.u32 %v1060, 7
      %v1062 = vsub.s32 1, %v1061
      %v1063 = vrot.slane %v1053, %v1062
      %v1064 = vmul.f32 %v392, %v1063
      %v1065 = vadd.f32 %v1059, %v1064
      %v1066 = vlaneseq
      %v1067 = vshrl.u32 %v1066, 7
      %v1068 = vsub.s32 2, %v1067
      %v1069 = vrot.slane %v1053, %v1068
      %v1070 = vmul.f32 %v402, %v1069
      %v1071 = vadd.f32 %v1065, %v1070
      %vm1072 = vcmp.gt.f32.partialorder %v1071, 0.0
      %v1073 = vmul.f32 %v1071, 0.1
      %v1074 = vsel %vm1072, %v1071, %v1073
      %v1075 = vlaneseq
      %v1076 = vshrl.u32 %v1075, 7
      %v1077 = vsub.s32 0, %v1076
      %v1078 = vrot.slane %v1074, %v1077
      %v1079 = vmul.f32 %v416, %v1078
      %v1080 = vmul.f32 %v421, %v1078
      %v1081 = vadd.f32 %v432, %v1079
      %v1082 = vadd.f32 %v437, %v1080
      %v1083 = vlaneseq
      %v1084 = vshrl.u32 %v1083, 7
      %v1085 = vsub.s32 1, %v1084
      %v1086 = vrot.slane %v1074, %v1085
      %v1087 = vmul.f32 %v443, %v1086
      %v1088 = vmul.f32 %v447, %v1086
      %v1089 = vadd.f32 %v1081, %v1087
      %v1090 = vadd.f32 %v1082, %v1088
      %v1091 = vlaneseq
      %v1092 = vshrl.u32 %v1091, 7
      %v1093 = vsub.s32 2, %v1092
      %v1094 = vrot.slane %v1074, %v1093
      %v1095 = vmul.f32 %v459, %v1094
      %v1096 = vmul.f32 %v463, %v1094
      %v1097 = vadd.f32 %v1089, %v1095
      %v1098 = vadd.f32 %v1090, %v1096
      %v1099 = vlaneseq
      %v1100 = vshrl.u32 %v1099, 7
      %v1101 = vsub.s32 3, %v1100
      %v1102 = vrot.slane %v1074, %v1101
      %v1103 = vmul.f32 %v475, %v1102
      %v1104 = vmul.f32 %v479, %v1102
      %v1105 = vadd.f32 %v1097, %v1103
      %v1106 = vadd.f32 %v1098, %v1104
      %v1107 = vlaneseq
      %v1108 = vshrl.u32 %v1107, 7
      %v1109 = vsub.s32 4, %v1108
      %v1110 = vrot.slane %v1074, %v1109
      %v1111 = vmul.f32 %v491, %v1110
      %v1112 = vmul.f32 %v495, %v1110
      %v1113 = vadd.f32 %v1105, %v1111
      %v1114 = vadd.f32 %v1106, %v1112
      %v1115 = vlaneseq
      %v1116 = vshrl.u32 %v1115, 7
      %v1117 = vsub.s32 5, %v1116
      %v1118 = vrot.slane %v1074, %v1117
      %v1119 = vmul.f32 %v507, %v1118
      %v1120 = vmul.f32 %v511, %v1118
      %v1121 = vadd.f32 %v1113, %v1119
      %v1122 = vadd.f32 %v1114, %v1120
      %v1123 = vlaneseq
      %v1124 = vshrl.u32 %v1123, 7
      %v1125 = vsub.s32 6, %v1124
      %v1126 = vrot.slane %v1074, %v1125
      %v1127 = vmul.f32 %v523, %v1126
      %v1128 = vmul.f32 %v527, %v1126
      %v1129 = vadd.f32 %v1121, %v1127
      %v1130 = vadd.f32 %v1122, %v1128
      %v1131 = vlaneseq
      %v1132 = vshrl.u32 %v1131, 7
      %v1133 = vsub.s32 7, %v1132
      %v1134 = vrot.slane %v1074, %v1133
      %v1135 = vmul.f32 %v539, %v1134
      %v1136 = vmul.f32 %v543, %v1134
      %v1137 = vadd.f32 %v1129, %v1135
      %v1138 = vadd.f32 %v1130, %v1136
      %vm1139 = vcmp.gt.f32.partialorder %v1137, 0.0
      %vm1140 = vcmp.gt.f32.partialorder %v1138, 0.0
      %v1141 = vmul.f32 %v1137, 0.1
      %v1142 = vmul.f32 %v1138, 0.1
      %v1143 = vsel %vm1139, %v1137, %v1141
      %v1144 = vsel %vm1140, %v1138, %v1142
      %v1145 = vlaneseq
      %v1146 = vshrl.u32 %v1145, 7
      %v1147 = vsub.s32 0, %v1146
      %v1148 = vrot.slane %v1052, %v1147
      %v1149 = vmul.f32 %v1148, %v1143
      %v1150 = vmul.f32 %v1148, %v1144
      %v1151 = vadd.f32 %v1001, %v1149
      %v1152 = vadd.f32 %v1002, %v1150
      %v1153 = vlaneseq
      %v1154 = vshrl.u32 %v1153, 7
      %v1155 = vsub.s32 1, %v1154
      %v1156 = vrot.slane %v1052, %v1155
      %v1157 = vmul.f32 %v1156, %v1143
      %v1158 = vmul.f32 %v1156, %v1144
      %v1159 = vadd.f32 %v1009, %v1157
      %v1160 = vadd.f32 %v1010, %v1158
      %v1161 = vlaneseq
      %v1162 = vshrl.u32 %v1161, 7
      %v1163 = vsub.s32 2, %v1162
      %v1164 = vrot.slane %v1052, %v1163
      %v1165 = vmul.f32 %v1164, %v1143
      %v1166 = vmul.f32 %v1164, %v1144
      %v1167 = vadd.f32 %v1017, %v1165
      %v1168 = vadd.f32 %v1018, %v1166
      %v1169 = vlaneseq
      %v1170 = vshrl.u32 %v1169, 7
      %v1171 = vsub.s32 3, %v1170
      %v1172 = vrot.slane %v1052, %v1171
      %v1173 = vmul.f32 %v1172, %v1143
      %v1174 = vmul.f32 %v1172, %v1144
      %v1175 = vadd.f32 %v1025, %v1173
      %v1176 = vadd.f32 %v1026, %v1174
      %v1177 = vlaneseq
      %v1178 = vshrl.u32 %v1177, 7
      %v1179 = vsub.s32 4, %v1178
      %v1180 = vrot.slane %v1052, %v1179
      %v1181 = vmul.f32 %v1180, %v1143
      %v1182 = vmul.f32 %v1180, %v1144
      %v1183 = vadd.f32 %v1033, %v1181
      %v1184 = vadd.f32 %v1034, %v1182
      %v1185 = vlaneseq
      %v1186 = vshrl.u32 %v1185, 7
      %v1187 = vsub.s32 5, %v1186
      %v1188 = vrot.slane %v1052, %v1187
      %v1189 = vmul.f32 %v1188, %v1143
      %v1190 = vmul.f32 %v1188, %v1144
      %v1191 = vadd.f32 %v1041, %v1189
      %v1192 = vadd.f32 %v1042, %v1190
      %v1193 = vlaneseq
      %v1194 = vshrl.u32 %v1193, 7
      %v1195 = vsub.s32 6, %v1194
      %v1196 = vrot.slane %v1052, %v1195
      %v1197 = vmul.f32 %v1196, %v1143
      %v1198 = vmul.f32 %v1196, %v1144
      %v1199 = vadd.f32 %v1049, %v1197
      %v1200 = vadd.f32 %v1050, %v1198
      %s1201 = scalar_lea.vmem %s356, 40
      %v1202 = vld [vmem:[%s1201] sm:$0x7f]
      %v1203 = vsub.f32 %v1202, %v365
      %v1204 = vlaneseq
      %v1205 = vshrl.u32 %v1204, 7
      %v1206 = vsub.s32 0, %v1205
      %v1207 = vrot.slane %v1203, %v1206
      %v1208 = vmul.f32 %v377, %v1207
      %v1209 = vadd.f32 %v387, %v1208
      %v1210 = vlaneseq
      %v1211 = vshrl.u32 %v1210, 7
      %v1212 = vsub.s32 1, %v1211
      %v1213 = vrot.slane %v1203, %v1212
      %v1214 = vmul.f32 %v392, %v1213
      %v1215 = vadd.f32 %v1209, %v1214
      %v1216 = vlaneseq
      %v1217 = vshrl.u32 %v1216, 7
      %v1218 = vsub.s32 2, %v1217
      %v1219 = vrot.slane %v1203, %v1218
      %v1220 = vmul.f32 %v402, %v1219
      %v1221 = vadd.f32 %v1215, %v1220
      %vm1222 = vcmp.gt.f32.partialorder %v1221, 0.0
      %v1223 = vmul.f32 %v1221, 0.1
      %v1224 = vsel %vm1222, %v1221, %v1223
      %v1225 = vlaneseq
      %v1226 = vshrl.u32 %v1225, 7
      %v1227 = vsub.s32 0, %v1226
      %v1228 = vrot.slane %v1224, %v1227
      %v1229 = vmul.f32 %v416, %v1228
      %v1230 = vmul.f32 %v421, %v1228
      %v1231 = vadd.f32 %v432, %v1229
      %v1232 = vadd.f32 %v437, %v1230
      %v1233 = vlaneseq
      %v1234 = vshrl.u32 %v1233, 7
      %v1235 = vsub.s32 1, %v1234
      %v1236 = vrot.slane %v1224, %v1235
      %v1237 = vmul.f32 %v443, %v1236
      %v1238 = vmul.f32 %v447, %v1236
      %v1239 = vadd.f32 %v1231, %v1237
      %v1240 = vadd.f32 %v1232, %v1238
      %v1241 = vlaneseq
      %v1242 = vshrl.u32 %v1241, 7
      %v1243 = vsub.s32 2, %v1242
      %v1244 = vrot.slane %v1224, %v1243
      %v1245 = vmul.f32 %v459, %v1244
      %v1246 = vmul.f32 %v463, %v1244
      %v1247 = vadd.f32 %v1239, %v1245
      %v1248 = vadd.f32 %v1240, %v1246
      %v1249 = vlaneseq
      %v1250 = vshrl.u32 %v1249, 7
      %v1251 = vsub.s32 3, %v1250
      %v1252 = vrot.slane %v1224, %v1251
      %v1253 = vmul.f32 %v475, %v1252
      %v1254 = vmul.f32 %v479, %v1252
      %v1255 = vadd.f32 %v1247, %v1253
      %v1256 = vadd.f32 %v1248, %v1254
      %v1257 = vlaneseq
      %v1258 = vshrl.u32 %v1257, 7
      %v1259 = vsub.s32 4, %v1258
      %v1260 = vrot.slane %v1224, %v1259
      %v1261 = vmul.f32 %v491, %v1260
      %v1262 = vmul.f32 %v495, %v1260
      %v1263 = vadd.f32 %v1255, %v1261
      %v1264 = vadd.f32 %v1256, %v1262
      %v1265 = vlaneseq
      %v1266 = vshrl.u32 %v1265, 7
      %v1267 = vsub.s32 5, %v1266
      %v1268 = vrot.slane %v1224, %v1267
      %v1269 = vmul.f32 %v507, %v1268
      %v1270 = vmul.f32 %v511, %v1268
      %v1271 = vadd.f32 %v1263, %v1269
      %v1272 = vadd.f32 %v1264, %v1270
      %v1273 = vlaneseq
      %v1274 = vshrl.u32 %v1273, 7
      %v1275 = vsub.s32 6, %v1274
      %v1276 = vrot.slane %v1224, %v1275
      %v1277 = vmul.f32 %v523, %v1276
      %v1278 = vmul.f32 %v527, %v1276
      %v1279 = vadd.f32 %v1271, %v1277
      %v1280 = vadd.f32 %v1272, %v1278
      %v1281 = vlaneseq
      %v1282 = vshrl.u32 %v1281, 7
      %v1283 = vsub.s32 7, %v1282
      %v1284 = vrot.slane %v1224, %v1283
      %v1285 = vmul.f32 %v539, %v1284
      %v1286 = vmul.f32 %v543, %v1284
      %v1287 = vadd.f32 %v1279, %v1285
      %v1288 = vadd.f32 %v1280, %v1286
      %vm1289 = vcmp.gt.f32.partialorder %v1287, 0.0
      %vm1290 = vcmp.gt.f32.partialorder %v1288, 0.0
      %v1291 = vmul.f32 %v1287, 0.1
      %v1292 = vmul.f32 %v1288, 0.1
      %v1293 = vsel %vm1289, %v1287, %v1291
      %v1294 = vsel %vm1290, %v1288, %v1292
      %v1295 = vlaneseq
      %v1296 = vshrl.u32 %v1295, 7
      %v1297 = vsub.s32 0, %v1296
      %v1298 = vrot.slane %v1202, %v1297
      %v1299 = vmul.f32 %v1298, %v1293
      %v1300 = vmul.f32 %v1298, %v1294
      %v1301 = vadd.f32 %v1151, %v1299
      %v1302 = vadd.f32 %v1152, %v1300
      %v1303 = vlaneseq
      %v1304 = vshrl.u32 %v1303, 7
      %v1305 = vsub.s32 1, %v1304
      %v1306 = vrot.slane %v1202, %v1305
      %v1307 = vmul.f32 %v1306, %v1293
      %v1308 = vmul.f32 %v1306, %v1294
      %v1309 = vadd.f32 %v1159, %v1307
      %v1310 = vadd.f32 %v1160, %v1308
      %v1311 = vlaneseq
      %v1312 = vshrl.u32 %v1311, 7
      %v1313 = vsub.s32 2, %v1312
      %v1314 = vrot.slane %v1202, %v1313
      %v1315 = vmul.f32 %v1314, %v1293
      %v1316 = vmul.f32 %v1314, %v1294
      %v1317 = vadd.f32 %v1167, %v1315
      %v1318 = vadd.f32 %v1168, %v1316
      %v1319 = vlaneseq
      %v1320 = vshrl.u32 %v1319, 7
      %v1321 = vsub.s32 3, %v1320
      %v1322 = vrot.slane %v1202, %v1321
      %v1323 = vmul.f32 %v1322, %v1293
      %v1324 = vmul.f32 %v1322, %v1294
      %v1325 = vadd.f32 %v1175, %v1323
      %v1326 = vadd.f32 %v1176, %v1324
      %v1327 = vlaneseq
      %v1328 = vshrl.u32 %v1327, 7
      %v1329 = vsub.s32 4, %v1328
      %v1330 = vrot.slane %v1202, %v1329
      %v1331 = vmul.f32 %v1330, %v1293
      %v1332 = vmul.f32 %v1330, %v1294
      %v1333 = vadd.f32 %v1183, %v1331
      %v1334 = vadd.f32 %v1184, %v1332
      %v1335 = vlaneseq
      %v1336 = vshrl.u32 %v1335, 7
      %v1337 = vsub.s32 5, %v1336
      %v1338 = vrot.slane %v1202, %v1337
      %v1339 = vmul.f32 %v1338, %v1293
      %v1340 = vmul.f32 %v1338, %v1294
      %v1341 = vadd.f32 %v1191, %v1339
      %v1342 = vadd.f32 %v1192, %v1340
      %v1343 = vlaneseq
      %v1344 = vshrl.u32 %v1343, 7
      %v1345 = vsub.s32 6, %v1344
      %v1346 = vrot.slane %v1202, %v1345
      %v1347 = vmul.f32 %v1346, %v1293
      %v1348 = vmul.f32 %v1346, %v1294
      %v1349 = vadd.f32 %v1199, %v1347
      %v1350 = vadd.f32 %v1200, %v1348
      %s1351 = scalar_lea.vmem %s356, 48
      %v1352 = vld [vmem:[%s1351] sm:$0x7f]
      %v1353 = vsub.f32 %v1352, %v365
      %v1354 = vlaneseq
      %v1355 = vshrl.u32 %v1354, 7
      %v1356 = vsub.s32 0, %v1355
      %v1357 = vrot.slane %v1353, %v1356
      %v1358 = vmul.f32 %v377, %v1357
      %v1359 = vadd.f32 %v387, %v1358
      %v1360 = vlaneseq
      %v1361 = vshrl.u32 %v1360, 7
      %v1362 = vsub.s32 1, %v1361
      %v1363 = vrot.slane %v1353, %v1362
      %v1364 = vmul.f32 %v392, %v1363
      %v1365 = vadd.f32 %v1359, %v1364
      %v1366 = vlaneseq
      %v1367 = vshrl.u32 %v1366, 7
      %v1368 = vsub.s32 2, %v1367
      %v1369 = vrot.slane %v1353, %v1368
      %v1370 = vmul.f32 %v402, %v1369
      %v1371 = vadd.f32 %v1365, %v1370
      %vm1372 = vcmp.gt.f32.partialorder %v1371, 0.0
      %v1373 = vmul.f32 %v1371, 0.1
      %v1374 = vsel %vm1372, %v1371, %v1373
      %v1375 = vlaneseq
      %v1376 = vshrl.u32 %v1375, 7
      %v1377 = vsub.s32 0, %v1376
      %v1378 = vrot.slane %v1374, %v1377
      %v1379 = vmul.f32 %v416, %v1378
      %v1380 = vmul.f32 %v421, %v1378
      %v1381 = vadd.f32 %v432, %v1379
      %v1382 = vadd.f32 %v437, %v1380
      %v1383 = vlaneseq
      %v1384 = vshrl.u32 %v1383, 7
      %v1385 = vsub.s32 1, %v1384
      %v1386 = vrot.slane %v1374, %v1385
      %v1387 = vmul.f32 %v443, %v1386
      %v1388 = vmul.f32 %v447, %v1386
      %v1389 = vadd.f32 %v1381, %v1387
      %v1390 = vadd.f32 %v1382, %v1388
      %v1391 = vlaneseq
      %v1392 = vshrl.u32 %v1391, 7
      %v1393 = vsub.s32 2, %v1392
      %v1394 = vrot.slane %v1374, %v1393
      %v1395 = vmul.f32 %v459, %v1394
      %v1396 = vmul.f32 %v463, %v1394
      %v1397 = vadd.f32 %v1389, %v1395
      %v1398 = vadd.f32 %v1390, %v1396
      %v1399 = vlaneseq
      %v1400 = vshrl.u32 %v1399, 7
      %v1401 = vsub.s32 3, %v1400
      %v1402 = vrot.slane %v1374, %v1401
      %v1403 = vmul.f32 %v475, %v1402
      %v1404 = vmul.f32 %v479, %v1402
      %v1405 = vadd.f32 %v1397, %v1403
      %v1406 = vadd.f32 %v1398, %v1404
      %v1407 = vlaneseq
      %v1408 = vshrl.u32 %v1407, 7
      %v1409 = vsub.s32 4, %v1408
      %v1410 = vrot.slane %v1374, %v1409
      %v1411 = vmul.f32 %v491, %v1410
      %v1412 = vmul.f32 %v495, %v1410
      %v1413 = vadd.f32 %v1405, %v1411
      %v1414 = vadd.f32 %v1406, %v1412
      %v1415 = vlaneseq
      %v1416 = vshrl.u32 %v1415, 7
      %v1417 = vsub.s32 5, %v1416
      %v1418 = vrot.slane %v1374, %v1417
      %v1419 = vmul.f32 %v507, %v1418
      %v1420 = vmul.f32 %v511, %v1418
      %v1421 = vadd.f32 %v1413, %v1419
      %v1422 = vadd.f32 %v1414, %v1420
      %v1423 = vlaneseq
      %v1424 = vshrl.u32 %v1423, 7
      %v1425 = vsub.s32 6, %v1424
      %v1426 = vrot.slane %v1374, %v1425
      %v1427 = vmul.f32 %v523, %v1426
      %v1428 = vmul.f32 %v527, %v1426
      %v1429 = vadd.f32 %v1421, %v1427
      %v1430 = vadd.f32 %v1422, %v1428
      %v1431 = vlaneseq
      %v1432 = vshrl.u32 %v1431, 7
      %v1433 = vsub.s32 7, %v1432
      %v1434 = vrot.slane %v1374, %v1433
      %v1435 = vmul.f32 %v539, %v1434
      %v1436 = vmul.f32 %v543, %v1434
      %v1437 = vadd.f32 %v1429, %v1435
      %v1438 = vadd.f32 %v1430, %v1436
      %vm1439 = vcmp.gt.f32.partialorder %v1437, 0.0
      %vm1440 = vcmp.gt.f32.partialorder %v1438, 0.0
      %v1441 = vmul.f32 %v1437, 0.1
      %v1442 = vmul.f32 %v1438, 0.1
      %v1443 = vsel %vm1439, %v1437, %v1441
      %v1444 = vsel %vm1440, %v1438, %v1442
      %v1445 = vlaneseq
      %v1446 = vshrl.u32 %v1445, 7
      %v1447 = vsub.s32 0, %v1446
      %v1448 = vrot.slane %v1352, %v1447
      %v1449 = vmul.f32 %v1448, %v1443
      %v1450 = vmul.f32 %v1448, %v1444
      %v1451 = vadd.f32 %v1301, %v1449
      %v1452 = vadd.f32 %v1302, %v1450
      %v1453 = vlaneseq
      %v1454 = vshrl.u32 %v1453, 7
      %v1455 = vsub.s32 1, %v1454
      %v1456 = vrot.slane %v1352, %v1455
      %v1457 = vmul.f32 %v1456, %v1443
      %v1458 = vmul.f32 %v1456, %v1444
      %v1459 = vadd.f32 %v1309, %v1457
      %v1460 = vadd.f32 %v1310, %v1458
      %v1461 = vlaneseq
      %v1462 = vshrl.u32 %v1461, 7
      %v1463 = vsub.s32 2, %v1462
      %v1464 = vrot.slane %v1352, %v1463
      %v1465 = vmul.f32 %v1464, %v1443
      %v1466 = vmul.f32 %v1464, %v1444
      %v1467 = vadd.f32 %v1317, %v1465
      %v1468 = vadd.f32 %v1318, %v1466
      %v1469 = vlaneseq
      %v1470 = vshrl.u32 %v1469, 7
      %v1471 = vsub.s32 3, %v1470
      %v1472 = vrot.slane %v1352, %v1471
      %v1473 = vmul.f32 %v1472, %v1443
      %v1474 = vmul.f32 %v1472, %v1444
      %v1475 = vadd.f32 %v1325, %v1473
      %v1476 = vadd.f32 %v1326, %v1474
      %v1477 = vlaneseq
      %v1478 = vshrl.u32 %v1477, 7
      %v1479 = vsub.s32 4, %v1478
      %v1480 = vrot.slane %v1352, %v1479
      %v1481 = vmul.f32 %v1480, %v1443
      %v1482 = vmul.f32 %v1480, %v1444
      %v1483 = vadd.f32 %v1333, %v1481
      %v1484 = vadd.f32 %v1334, %v1482
      %v1485 = vlaneseq
      %v1486 = vshrl.u32 %v1485, 7
      %v1487 = vsub.s32 5, %v1486
      %v1488 = vrot.slane %v1352, %v1487
      %v1489 = vmul.f32 %v1488, %v1443
      %v1490 = vmul.f32 %v1488, %v1444
      %v1491 = vadd.f32 %v1341, %v1489
      %v1492 = vadd.f32 %v1342, %v1490
      %v1493 = vlaneseq
      %v1494 = vshrl.u32 %v1493, 7
      %v1495 = vsub.s32 6, %v1494
      %v1496 = vrot.slane %v1352, %v1495
      %v1497 = vmul.f32 %v1496, %v1443
      %v1498 = vmul.f32 %v1496, %v1444
      %v1499 = vadd.f32 %v1349, %v1497
      %v1500 = vadd.f32 %v1350, %v1498
      %s1501 = scalar_lea.vmem %s356, 56
      %v1502 = vld [vmem:[%s1501] sm:$0x7f]
      %v1503 = vsub.f32 %v1502, %v365
      %v1504 = vlaneseq
      %v1505 = vshrl.u32 %v1504, 7
      %v1506 = vsub.s32 0, %v1505
      %v1507 = vrot.slane %v1503, %v1506
      %v1508 = vmul.f32 %v377, %v1507
      %v1509 = vadd.f32 %v387, %v1508
      %v1510 = vlaneseq
      %v1511 = vshrl.u32 %v1510, 7
      %v1512 = vsub.s32 1, %v1511
      %v1513 = vrot.slane %v1503, %v1512
      %v1514 = vmul.f32 %v392, %v1513
      %v1515 = vadd.f32 %v1509, %v1514
      %v1516 = vlaneseq
      %v1517 = vshrl.u32 %v1516, 7
      %v1518 = vsub.s32 2, %v1517
      %v1519 = vrot.slane %v1503, %v1518
      %v1520 = vmul.f32 %v402, %v1519
      %v1521 = vadd.f32 %v1515, %v1520
      %vm1522 = vcmp.gt.f32.partialorder %v1521, 0.0
      %v1523 = vmul.f32 %v1521, 0.1
      %v1524 = vsel %vm1522, %v1521, %v1523
      %v1525 = vlaneseq
      %v1526 = vshrl.u32 %v1525, 7
      %v1527 = vsub.s32 0, %v1526
      %v1528 = vrot.slane %v1524, %v1527
      %v1529 = vmul.f32 %v416, %v1528
      %v1530 = vmul.f32 %v421, %v1528
      %v1531 = vadd.f32 %v432, %v1529
      %v1532 = vadd.f32 %v437, %v1530
      %v1533 = vlaneseq
      %v1534 = vshrl.u32 %v1533, 7
      %v1535 = vsub.s32 1, %v1534
      %v1536 = vrot.slane %v1524, %v1535
      %v1537 = vmul.f32 %v443, %v1536
      %v1538 = vmul.f32 %v447, %v1536
      %v1539 = vadd.f32 %v1531, %v1537
      %v1540 = vadd.f32 %v1532, %v1538
      %v1541 = vlaneseq
      %v1542 = vshrl.u32 %v1541, 7
      %v1543 = vsub.s32 2, %v1542
      %v1544 = vrot.slane %v1524, %v1543
      %v1545 = vmul.f32 %v459, %v1544
      %v1546 = vmul.f32 %v463, %v1544
      %v1547 = vadd.f32 %v1539, %v1545
      %v1548 = vadd.f32 %v1540, %v1546
      %v1549 = vlaneseq
      %v1550 = vshrl.u32 %v1549, 7
      %v1551 = vsub.s32 3, %v1550
      %v1552 = vrot.slane %v1524, %v1551
      %v1553 = vmul.f32 %v475, %v1552
      %v1554 = vmul.f32 %v479, %v1552
      %v1555 = vadd.f32 %v1547, %v1553
      %v1556 = vadd.f32 %v1548, %v1554
      %v1557 = vlaneseq
      %v1558 = vshrl.u32 %v1557, 7
      %v1559 = vsub.s32 4, %v1558
      %v1560 = vrot.slane %v1524, %v1559
      %v1561 = vmul.f32 %v491, %v1560
      %v1562 = vmul.f32 %v495, %v1560
      %v1563 = vadd.f32 %v1555, %v1561
      %v1564 = vadd.f32 %v1556, %v1562
      %v1565 = vlaneseq
      %v1566 = vshrl.u32 %v1565, 7
      %v1567 = vsub.s32 5, %v1566
      %v1568 = vrot.slane %v1524, %v1567
      %v1569 = vmul.f32 %v507, %v1568
      %v1570 = vmul.f32 %v511, %v1568
      %v1571 = vadd.f32 %v1563, %v1569
      %v1572 = vadd.f32 %v1564, %v1570
      %v1573 = vlaneseq
      %v1574 = vshrl.u32 %v1573, 7
      %v1575 = vsub.s32 6, %v1574
      %v1576 = vrot.slane %v1524, %v1575
      %v1577 = vmul.f32 %v523, %v1576
      %v1578 = vmul.f32 %v527, %v1576
      %v1579 = vadd.f32 %v1571, %v1577
      %v1580 = vadd.f32 %v1572, %v1578
      %v1581 = vlaneseq
      %v1582 = vshrl.u32 %v1581, 7
      %v1583 = vsub.s32 7, %v1582
      %v1584 = vrot.slane %v1524, %v1583
      %v1585 = vmul.f32 %v539, %v1584
      %v1586 = vmul.f32 %v543, %v1584
      %v1587 = vadd.f32 %v1579, %v1585
      %v1588 = vadd.f32 %v1580, %v1586
      %vm1589 = vcmp.gt.f32.partialorder %v1587, 0.0
      %vm1590 = vcmp.gt.f32.partialorder %v1588, 0.0
      %v1591 = vmul.f32 %v1587, 0.1
      %v1592 = vmul.f32 %v1588, 0.1
      %v1593 = vsel %vm1589, %v1587, %v1591
      %v1594 = vsel %vm1590, %v1588, %v1592
      %v1595 = vlaneseq
      %v1596 = vshrl.u32 %v1595, 7
      %v1597 = vsub.s32 0, %v1596
      %v1598 = vrot.slane %v1502, %v1597
      %v1599 = vmul.f32 %v1598, %v1593
      %v1600 = vmul.f32 %v1598, %v1594
      %v1601 = vadd.f32 %v1451, %v1599
      %v1602 = vadd.f32 %v1452, %v1600
      %v1603 = vlaneseq
      %v1604 = vshrl.u32 %v1603, 7
      %v1605 = vsub.s32 1, %v1604
      %v1606 = vrot.slane %v1502, %v1605
      %v1607 = vmul.f32 %v1606, %v1593
      %v1608 = vmul.f32 %v1606, %v1594
      %v1609 = vadd.f32 %v1459, %v1607
      %v1610 = vadd.f32 %v1460, %v1608
      %v1611 = vlaneseq
      %v1612 = vshrl.u32 %v1611, 7
      %v1613 = vsub.s32 2, %v1612
      %v1614 = vrot.slane %v1502, %v1613
      %v1615 = vmul.f32 %v1614, %v1593
      %v1616 = vmul.f32 %v1614, %v1594
      %v1617 = vadd.f32 %v1467, %v1615
      %v1618 = vadd.f32 %v1468, %v1616
      %v1619 = vlaneseq
      %v1620 = vshrl.u32 %v1619, 7
      %v1621 = vsub.s32 3, %v1620
      %v1622 = vrot.slane %v1502, %v1621
      %v1623 = vmul.f32 %v1622, %v1593
      %v1624 = vmul.f32 %v1622, %v1594
      %v1625 = vadd.f32 %v1475, %v1623
      %v1626 = vadd.f32 %v1476, %v1624
      %v1627 = vlaneseq
      %v1628 = vshrl.u32 %v1627, 7
      %v1629 = vsub.s32 4, %v1628
      %v1630 = vrot.slane %v1502, %v1629
      %v1631 = vmul.f32 %v1630, %v1593
      %v1632 = vmul.f32 %v1630, %v1594
      %v1633 = vadd.f32 %v1483, %v1631
      %v1634 = vadd.f32 %v1484, %v1632
      %v1635 = vlaneseq
      %v1636 = vshrl.u32 %v1635, 7
      %v1637 = vsub.s32 5, %v1636
      %v1638 = vrot.slane %v1502, %v1637
      %v1639 = vmul.f32 %v1638, %v1593
      %v1640 = vmul.f32 %v1638, %v1594
      %v1641 = vadd.f32 %v1491, %v1639
      %v1642 = vadd.f32 %v1492, %v1640
      %v1643 = vlaneseq
      %v1644 = vshrl.u32 %v1643, 7
      %v1645 = vsub.s32 6, %v1644
      %v1646 = vrot.slane %v1502, %v1645
      %v1647 = vmul.f32 %v1646, %v1593
      %v1648 = vmul.f32 %v1646, %v1594
      %v1649 = vadd.f32 %v1499, %v1647
      %v1650 = vadd.f32 %v1500, %v1648
      %v1651 = vld [vmem:[%s6] sm:$0xff]
      %v1652 = vld [vmem:[%s6 + $0x8] sm:$0xff]
      %v1653 = vld [vmem:[%s6 + $0x10] sm:$0xff]
      %v1654 = vld [vmem:[%s6 + $0x18] sm:$0xff]
      %v1655 = vld [vmem:[%s7] sm:$0xff]
      %v1656 = vld [vmem:[%s7 + $0x8] sm:$0xff]
      %v1657 = vld [vmem:[%s7 + $0x10] sm:$0xff]
      %v1658 = vld [vmem:[%s7 + $0x18] sm:$0xff]
      %1660 = vset.pattern.permute.xlu0 0
      %1661 = vperm.xlu0 %1660, %v1655
      %v1662 = vpop.permute.xlu0 %1661
      %1665 = vset.pattern.permute.xlu0 0
      %1666 = vperm.xlu0 %1665, %v1656
      %v1667 = vpop.permute.xlu0 %1666
      %1670 = vset.pattern.permute.xlu0 0
      %1671 = vperm.xlu0 %1670, %v1657
      %v1672 = vpop.permute.xlu0 %1671
      %1675 = vset.pattern.permute.xlu0 0
      %1676 = vperm.xlu0 %1675, %v1658
      %v1677 = vpop.permute.xlu0 %1676
      %vm1679 = vcmask 916480
      %v1681 = vsel %vm1679, %v1651, 0
      %v1684 = vsel %vm1679, %v1652, 0
      %v1687 = vsel %vm1679, %v1653, 0
      %v1690 = vsel %vm1679, %v1654, 0
      %1692 = vmatprep.subr.mxu0 0.0
      %1693 = vmatpush1.msra.mxu0 %v1601
      %1694 = vmatprep.subr.mxu0 0.0
      %1695 = vmatpush1.msra.mxu0 %v1602
      %1696 = vmatprep.subr.mxu0 0.0
      %1697 = vmatpush1.msra.mxu0 %v1609
      %1698 = vmatprep.subr.mxu0 0.0
      %1699 = vmatpush1.msra.mxu0 %v1610
      %1700 = vmatprep.subr.mxu0 0.0
      %1701 = vmatpush1.msra.mxu0 %v1617
      %1702 = vmatprep.subr.mxu0 0.0
      %1703 = vmatpush1.msra.mxu0 %v1618
      %1704 = vmatprep.subr.mxu0 0.0
      %1705 = vmatpush1.msra.mxu0 %v1625
      %1706 = vmatprep.subr.mxu0 0.0
      %1707 = vmatpush1.msra.mxu0 %v1626
      %1708 = vmatprep.subr.mxu0 0.0
      %1709 = vmatpush1.msra.mxu0 %v1633
      %1710 = vmatprep.subr.mxu0 0.0
      %1711 = vmatpush1.msra.mxu0 %v1634
      %1712 = vmatprep.subr.mxu0 0.0
      %1713 = vmatpush1.msra.mxu0 %v1641
      %1714 = vmatprep.subr.mxu0 0.0
      %1715 = vmatpush1.msra.mxu0 %v1642
      %1716 = vmatprep.subr.mxu0 0.0
      %1717 = vmatpush1.msra.mxu0 %v1649
      %1718 = vmatprep.subr.mxu0 0.0
      %1719 = vmatpush1.msra.mxu0 %v1650
      %1720 = vmatprep.subr.mxu0 0.0
      %1721 = vmatpush1.msra.mxu0 0.0
      %1722 = vmatprep.subr.mxu0 0.0
      %1723 = vmatpush1.msra.mxu0 0.0
      %1724 = vmatprep.subr.mxu0 0.0
      %1725 = vmatpush1.msra.mxu0 0.0
      %1726 = vmatprep.subr.mxu0 0.0
      %1727 = vmatpush1.msra.mxu0 0.0
      %1728 = vmatprep.subr.mxu0 0.0
      %1729 = vmatpush1.msra.mxu0 0.0
      %1730 = vmatprep.subr.mxu0 0.0
      %1731 = vmatpush1.msra.mxu0 0.0
      %1732 = vmatprep.subr.mxu0 0.0
      %1733 = vmatpush1.msra.mxu0 0.0
      %1734 = vmatprep.subr.mxu0 0.0
      %1735 = vmatpush1.msra.mxu0 0.0
      %1736 = vmatprep.subr.mxu0 0.0
      %1737 = vmatpush1.msra.mxu0 0.0
      %1738 = vmatprep.subr.mxu0 0.0
      %1739 = vmatpush1.msra.mxu0 0.0
      %1740 = vmatprep.subr.mxu0 0.0
      %1741 = vmatpush1.msra.mxu0 0.0
      %1742 = vmatprep.subr.mxu0 0.0
      %1743 = vmatpush1.msra.mxu0 0.0
      %1744 = vmatprep.subr.mxu0 0.0
      %1745 = vmatpush1.msra.mxu0 0.0
      %1746 = vmatprep.subr.mxu0 0.0
      %1747 = vmatpush1.msra.mxu0 0.0
      %1748 = vmatprep.subr.mxu0 0.0
      %1749 = vmatpush1.msra.mxu0 0.0
      %1750 = vmatprep.subr.mxu0 0.0
      %1751 = vmatpush1.msra.mxu0 0.0
      %1752 = vmatprep.subr.mxu0 0.0
      %1753 = vmatpush1.msra.mxu0 0.0
      %1754 = vmatprep.subr.mxu0 0.0
      %1755 = vmatpush1.msra.mxu0 0.0
      %1756 = vmatprep.mubr.f32.mxu0 0.0
      %1757 = vmatmul.mubr.f32.gmra.mrb[0].mxu0 %v1681
      %v1758 = vpop.f32.mrb[0].mxu0
      %v1759 = vadd.f32 %v1662, %v1758
      %v1760 = vpop.f32.mrb[0].mxu0
      %1761 = vmatprep.mubr.f32.mxu0 0.0
      %1762 = vmatmul.mubr.f32.gmra.mrb[0].mxu0 %v1684
      %v1763 = vpop.f32.mrb[0].mxu0
      %v1764 = vadd.f32 %v1667, %v1763
      %v1765 = vpop.f32.mrb[0].mxu0
      %1766 = vmatprep.mubr.f32.mxu0 0.0
      %1767 = vmatmul.mubr.f32.gmra.mrb[0].mxu0 %v1687
      %v1768 = vpop.f32.mrb[0].mxu0
      %v1769 = vadd.f32 %v1672, %v1768
      %v1770 = vpop.f32.mrb[0].mxu0
      %1771 = vmatprep.mubr.f32.mxu0 0.0
      %1772 = vmatmul.mubr.f32.gmra.mrb[0].mxu0 %v1690
      %v1773 = vpop.f32.mrb[0].mxu0
      %v1774 = vadd.f32 %v1677, %v1773
      %v1775 = vpop.f32.mrb[0].mxu0
      %1776 = vdwg.mxu0
      %vm1777 = vcmp.gt.f32.partialorder %v1759, 0.0
      %vm1778 = vcmp.gt.f32.partialorder %v1764, 0.0
      %vm1779 = vcmp.gt.f32.partialorder %v1769, 0.0
      %vm1780 = vcmp.gt.f32.partialorder %v1774, 0.0
      %v1781 = vmul.f32 %v1759, 0.1
      %v1782 = vmul.f32 %v1764, 0.1
      %v1783 = vmul.f32 %v1769, 0.1
      %v1784 = vmul.f32 %v1774, 0.1
      %v1785 = vsel %vm1777, %v1759, %v1781
      %v1786 = vsel %vm1778, %v1764, %v1782
      %v1787 = vsel %vm1779, %v1769, %v1783
      %v1788 = vsel %vm1780, %v1774, %v1784
      %vm1789 = vcmask 130048
      %1790 = vst.msk [vmem:[%s364] sm:$0xff] %vm1789, %v1785
      %1791 = vst.msk [vmem:[%s364 + $0x8] sm:$0xff] %vm1789, %v1786
      %1792 = vst.msk [vmem:[%s364 + $0x10] sm:$0xff] %vm1789, %v1787
      %1793 = vst.msk [vmem:[%s364 + $0x18] sm:$0xff] %vm1789, %v1788
      %p1794 = scmp.lt.s32.totalorder %s23, 1
      %s1795 = scalar_select %p1794, %s23, 1
      %p1796 = scmp.lt.s32.totalorder %s24, 0
      %s1797 = scalar_select %p1796, %s24, 0
      %s1798 = smul.addr %s1795, 4
      %s1799 = sadd.s32 %s1797, %s1798
      %s1800 = smul.addr %s1799, 8
      %s1801 = scalar_lea.vmem %s8, %s1800
      // Predicated region
      $region53: #{tpu_custom_call.1} parent=51 // pred_check
        %p1802 = pneg %p233
      $region54: #{tpu_custom_call.1} parent=51 // pred_check_branch
        %1804 = sbr.rel (%p1802) target = $region56
      $region55: #{tpu_custom_call.1} parent=51 // pred_region
        _
      $region56: #{tpu_custom_call.1} parent=51 // pred_fallthru
        _
    $region52: #{tpu_custom_call.1} parent=5 // pred_fallthru
      _
    %p1805 = scmp.le.s32.totalorder 2, %s14
    // Predicated region
    $region57: #{tpu_custom_call.1} parent=5 // pred_check
      %p1806 = pneg %p1805
    $region58: #{tpu_custom_call.1} parent=5 // pred_check_branch
      %1808 = sbr.rel (%p1806) target = $region60
    $region59: #{tpu_custom_call.1} parent=5 // pred_region
      %s1809 = ssub.s32 %s14, 2
      // Predicated region
      $region61: #{tpu_custom_call.1} parent=59 // pred_check
        %p1810 = pneg %p239
      $region62: #{tpu_custom_call.1} parent=59 // pred_check_branch
        %1812 = sbr.rel (%p1810) target = $region64
      $region63: #{tpu_custom_call.1} parent=59 // pred_region
        %p1813 = scmp.lt.s32.totalorder %s25, 1
        %s1814 = scalar_select %p1813, %s25, 1
        %p1815 = scmp.lt.s32.totalorder %s26, 0
        %s1816 = scalar_select %p1815, %s26, 0
        %s1817 = smul.addr %s1814, 4
        %s1818 = sadd.s32 %s1816, %s1817
        %s1819 = smul.addr %s1818, 8
        %s1820 = scalar_lea.vmem %s8, %s1819
      $region64: #{tpu_custom_call.1} parent=59 // pred_fallthru
        _
    $region60: #{tpu_custom_call.1} parent=5 // pred_fallthru
      _
  $region6: #{tpu_custom_call.1} parent=0 // loop_footer
    %s18 = sadd.s32 1, %s14
  $region7: #{tpu_custom_call.1} parent=0 // loop_footer_branch
    %13 = sbr.rel target = $region3
  $region8: #{tpu_custom_call.1} parent=0 // loop_exit
    _

</llo_original>
